<compile_context>
chip_gen: v6e
topology: v6e:2x2x1
jax: 0.10.0
libtpu: 0.0.40
codegen_flags: <defaults>
</compile_context>

<pallas_src>
import functools
import math

import jax
import jax.numpy as jnp
from jax import lax
from jax.experimental import pallas as pl
from jax.experimental.pallas import tpu as pltpu


# ---------------------------------------------------------------------------
# helpers
# ---------------------------------------------------------------------------

def _pick_tile(dim, target):
    """Largest tile <= target that divides dim (falls back to full dim)."""
    if dim <= target:
        return dim
    t = target
    while t > 8:
        if dim % t == 0:
            return t
        t //= 2
    return dim


def _default_tm():
    # v5e / v6e have 128 MiB VMEM -> 512-wide M tiles; v7x has 64 MiB -> keep 256.
    try:
        kind = jax.devices()[0].device_kind.lower()
    except Exception:
        return 256
    return 256 if "v7" in kind else 512


# ---------------------------------------------------------------------------
# fused (LayerNorm?) + Linear (+relu?) (+residual?) kernel
#   grid = (M tiles, N tiles); LN result cached in VMEM scratch across the N axis.
#   When the bf16 weight fits VMEM the N axis collapses to a single block so the
#   weight is DMA'd once per call and LN is computed exactly once per M tile.
# ---------------------------------------------------------------------------

def _fused_linear_kernel(*refs, ln, relu, residual, eps):
    idx = 0
    x_ref = refs[idx]; idx += 1
    if ln:
        g_ref = refs[idx]; bln_ref = refs[idx + 1]; idx += 2
    w_ref = refs[idx]; b_ref = refs[idx + 1]; idx += 2
    if residual:
        res_ref = refs[idx]; idx += 1
    o_ref = refs[idx]; idx += 1
    xn_scr = refs[idx]                      # (tm, K) bf16 scratch: LN(x) (or x) cache

    @pl.when(pl.program_id(1) == 0)
    def _():
        if ln:
            x = x_ref[...].astype(jnp.float32)
            mean = jnp.mean(x, axis=-1, keepdims=True)
            var = jnp.mean(jnp.square(x - mean), axis=-1, keepdims=True)
            x = (x - mean) * lax.rsqrt(var + eps)
            xn_scr[...] = (x * g_ref[...] + bln_ref[...]).astype(jnp.bfloat16)
        else:
            xn_scr[...] = x_ref[...].astype(jnp.bfloat16)

    # bf16 MXU operands, fp32 accumulation.
    y = jnp.dot(xn_scr[...], w_ref[...], preferred_element_type=jnp.float32)
    y = y + b_ref[...]
    if relu:
        y = jnp.maximum(y, 0.0)
    if residual:
        y = y + res_ref[...]
    o_ref[...] = y.astype(o_ref.dtype)


def fused_linear(x, w, b, *, gamma=None, beta=None, residual=None, relu=False,
                 eps=1e-6, out_dtype=jnp.float32, tm=None, tn=256,
                 weight_resident_bytes=8 * 1024 * 1024):
    """y = [relu]( LN?(x) @ w + b ) [+ residual].  x:(M,K)  w:(K,N) bf16  b:(1,N)."""
    M, K = x.shape
    N = w.shape[1]
    ln = gamma is not None
    use_res = residual is not None
    tm = _pick_tile(M, tm if tm is not None else _default_tm())
    # Keep the whole weight resident in VMEM when it fits -> DMA'd once per call.
    if K * N * w.dtype.itemsize <= weight_resident_bytes:
        tn = N
    else:
        tn = _pick_tile(N, tn)
    grid = (M // tm, N // tn)

    in_specs = [pl.BlockSpec((tm, K), lambda i, j: (i, 0))]
    inputs = [x]
    if ln:
        in_specs += [pl.BlockSpec((1, K), lambda i, j: (0, 0)),
                     pl.BlockSpec((1, K), lambda i, j: (0, 0))]
        inputs += [gamma, beta]
    in_specs += [pl.BlockSpec((K, tn), lambda i, j: (0, j)),
                 pl.BlockSpec((1, tn), lambda i, j: (0, j))]
    inputs += [w, b]
    if use_res:
        in_specs.append(pl.BlockSpec((tm, tn), lambda i, j: (i, j)))
        inputs.append(residual)

    return pl.pallas_call(
        functools.partial(_fused_linear_kernel, ln=ln, relu=relu,
                          residual=use_res, eps=eps),
        out_shape=jax.ShapeDtypeStruct((M, N), out_dtype),
        grid=grid,
        in_specs=in_specs,
        out_specs=pl.BlockSpec((tm, tn), lambda i, j: (i, j)),
        scratch_shapes=[pltpu.VMEM((tm, K), jnp.bfloat16)],
        compiler_params=pltpu.CompilerParams(
            dimension_semantics=("parallel", "arbitrary")),
    )(*inputs)


# ---------------------------------------------------------------------------
# attention kernel: all heads per step, lane-dense (tq, D) output.
#   q/k/v are read directly from the fused qkv / kv projection outputs via
#   column-block BlockSpecs; the (causal) mask is generated in-kernel with iota.
# TODO(synk): for very long contexts on v7x (64 MiB VMEM) the full-Sk K/V blocks
#   should be flash-tiled over an "arbitrary" Sk grid axis with m/l/acc scratch.
# ---------------------------------------------------------------------------

def _attn_kernel(*refs, heads, dk, scale, mask_mode):
    if mask_mode == "bias":
        q_ref, k_ref, v_ref, bias_ref, o_ref = refs
    else:
        q_ref, k_ref, v_ref, o_ref = refs

    q = q_ref[0]            # (tq, D) bf16
    k = k_ref[0]            # (Sk, D) bf16
    v = v_ref[0]            # (Sk, D) bf16
    tq = q.shape[0]
    Sk = k.shape[0]

    if mask_mode == "causal":
        row = lax.broadcasted_iota(jnp.int32, (tq, Sk), 0) + pl.program_id(1) * tq
        col = lax.broadcasted_iota(jnp.int32, (tq, Sk), 1)
        bias = jnp.where(col <= row, 0.0, -1e9)       # cheap VPU work, no HBM stream
    elif mask_mode == "bias":
        bias = bias_ref[...]
    else:
        bias = None

    # Static per-head unroll; heads packed along the lane axis of the (tq, D) output.
    # TODO(synk): for dk < 128 the per-head slice stores are lane-masked; a batched
    #   dot_general over heads would further improve MXU pipelining at large dk.
    for h in range(heads):
        lo = h * dk
        qh = q[:, lo:lo + dk].astype(jnp.bfloat16)
        kh = k[:, lo:lo + dk].astype(jnp.bfloat16)
        vh = v[:, lo:lo + dk].astype(jnp.bfloat16)
        # contract last dims directly (no explicit transpose); fp32 accumulation
        s = lax.dot_general(qh, kh, (((1,), (1,)), ((), ())),
                            preferred_element_type=jnp.float32) * scale
        if bias is not None:
            s = s + bias
        s = s - jnp.max(s, axis=-1, keepdims=True)
        p = jnp.exp(s)
        denom = jnp.sum(p, axis=-1, keepdims=True)
        p = p * pl.reciprocal(denom, approx=True)      # divide goes to the EUP slot
        oh = lax.dot_general(p.astype(jnp.bfloat16), vh, (((1,), (0,)), ((), ())),
                             preferred_element_type=jnp.float32)
        o_ref[0, :, lo:lo + dk] = oh.astype(o_ref.dtype)   # direct store, no concat


def attention(q_arr, kv_arr, *, heads, d_model, q_col, k_col, v_col,
              mask_mode="none", bias=None, tq=128):
    """q_arr:(B,Sq,nq*D)  kv_arr:(B,Sk,nkv*D); q/k/v selected by column-block index.
    Returns (B,Sq,D) bf16."""
    B, Sq, _ = q_arr.shape
    Sk = kv_arr.shape[1]
    dk = d_model // heads
    scale = 1.0 / math.sqrt(dk)
    tq = _pick_tile(Sq, tq)
    grid = (B, Sq // tq)

    in_specs = [
        pl.BlockSpec((1, tq, d_model), lambda b, i: (b, i, q_col)),
        pl.BlockSpec((1, Sk, d_model), lambda b, i: (b, 0, k_col)),
        pl.BlockSpec((1, Sk, d_model), lambda b, i: (b, 0, v_col)),
    ]
    inputs = [q_arr, kv_arr, kv_arr]
    if mask_mode == "bias":
        in_specs.append(pl.BlockSpec((tq, Sk), lambda b, i: (i, 0)))
        inputs.append(bias)

    return pl.pallas_call(
        functools.partial(_attn_kernel, heads=heads, dk=dk, scale=scale,
                          mask_mode=mask_mode),
        out_shape=jax.ShapeDtypeStruct((B, Sq, d_model), jnp.bfloat16),
        grid=grid,
        in_specs=in_specs,
        out_specs=pl.BlockSpec((1, tq, d_model), lambda b, i: (b, i, 0)),
        compiler_params=pltpu.CompilerParams(
            dimension_semantics=("parallel", "parallel")),
    )(*inputs)


# ---------------------------------------------------------------------------
# fused FFN kernel: LN -> W1 -> relu -> W2 (+b2 folded into acc init) -> +residual,
# pipelined over the d_ff axis with an fp32 VMEM accumulator. Residual is the
# already-resident x block (no separate residual input stream).
# ---------------------------------------------------------------------------

def _ffn_kernel(x_ref, g_ref, bln_ref, w1_ref, b1_ref, w2_ref, b2_ref,
                o_ref, n_scr, acc_scr, *, eps):
    f = pl.program_id(1)

    @pl.when(f == 0)
    def _():
        x = x_ref[...].astype(jnp.float32)
        mean = jnp.mean(x, axis=-1, keepdims=True)
        var = jnp.mean(jnp.square(x - mean), axis=-1, keepdims=True)
        n = (x - mean) * lax.rsqrt(var + eps)
        n_scr[...] = (n * g_ref[...] + bln_ref[...]).astype(jnp.bfloat16)
        acc_scr[...] = jnp.broadcast_to(b2_ref[...], acc_scr.shape)   # fold b2 into init

    h = jnp.dot(n_scr[...], w1_ref[...], preferred_element_type=jnp.float32)
    h = jnp.maximum(h + b1_ref[...], 0.0)
    acc_scr[...] += jnp.dot(h.astype(jnp.bfloat16), w2_ref[...],
                            preferred_element_type=jnp.float32)

    @pl.when(f == pl.num_programs(1) - 1)
    def _():
        o_ref[...] = (acc_scr[...] + x_ref[...].astype(jnp.float32)).astype(o_ref.dtype)


def feed_forward_block(x2d, p, gamma, beta, *, eps=1e-6, tm=None, tf=512):
    M, D = x2d.shape
    d_ff = p["w1"].shape[1]
    tm = _pick_tile(M, tm if tm is not None else _default_tm())
    tf = _pick_tile(d_ff, tf)
    grid = (M // tm, d_ff // tf)

    return pl.pallas_call(
        functools.partial(_ffn_kernel, eps=eps),
        out_shape=jax.ShapeDtypeStruct((M, D), jnp.float32),
        grid=grid,
        in_specs=[
            pl.BlockSpec((tm, D), lambda i, f: (i, 0)),
            pl.BlockSpec((1, D), lambda i, f: (0, 0)),
            pl.BlockSpec((1, D), lambda i, f: (0, 0)),
            pl.BlockSpec((D, tf), lambda i, f: (0, f)),
            pl.BlockSpec((1, tf), lambda i, f: (0, f)),
            pl.BlockSpec((tf, D), lambda i, f: (f, 0)),
            pl.BlockSpec((1, D), lambda i, f: (0, 0)),
        ],
        out_specs=pl.BlockSpec((tm, D), lambda i, f: (i, 0)),
        scratch_shapes=[pltpu.VMEM((tm, D), jnp.bfloat16),
                        pltpu.VMEM((tm, D), jnp.float32)],
        compiler_params=pltpu.CompilerParams(
            dimension_semantics=("parallel", "arbitrary")),
    )(x2d, gamma, beta, p["w1"], p["b1"], p["w2"], p["b2"])


# ---------------------------------------------------------------------------
# decoder layer (glue in plain JAX: free reshapes only)
# ---------------------------------------------------------------------------

def decoder_layer(x, memory, src_mask, tgt_mask, params, heads, *,
                  tgt_is_causal=False, src_is_full=False):
    B, S, D = x.shape
    Sk = memory.shape[1]
    x2d = x.reshape(B * S, D)

    # --- sublayer 0: self attention (pre-norm, fused LN + (D,3D) QKV projection) ---
    p = params["self_attn"]
    qkv = fused_linear(x2d, p["w_qkv"], p["b_qkv"],
                       gamma=params["ln0_g"], beta=params["ln0_b"],
                       out_dtype=jnp.bfloat16).reshape(B, S, 3 * D)
    if tgt_is_causal:
        attn = attention(qkv, qkv, heads=heads, d_model=D,
                         q_col=0, k_col=1, v_col=2, mask_mode="causal")
    else:
        attn = attention(qkv, qkv, heads=heads, d_model=D,
                         q_col=0, k_col=1, v_col=2, mask_mode="bias",
                         bias=(tgt_mask - 1.0) * 1e9)
    x2d = fused_linear(attn.reshape(B * S, D), p["wo"], p["bo"],
                       residual=x2d, out_dtype=jnp.float32)

    # --- sublayer 1: cross attention (Q from LN(x); fused (D,2D) K/V from memory) ---
    p = params["src_attn"]
    q = fused_linear(x2d, p["wq"], p["bq"],
                     gamma=params["ln1_g"], beta=params["ln1_b"],
                     out_dtype=jnp.bfloat16).reshape(B, S, D)
    kv = fused_linear(memory.reshape(B * Sk, D), p["w_kv"], p["b_kv"],
                      out_dtype=jnp.bfloat16).reshape(B, Sk, 2 * D)
    if src_is_full:
        attn = attention(q, kv, heads=heads, d_model=D,
                         q_col=0, k_col=0, v_col=1, mask_mode="none")
    else:
        attn = attention(q, kv, heads=heads, d_model=D,
                         q_col=0, k_col=0, v_col=1, mask_mode="bias",
                         bias=(src_mask - 1.0) * 1e9)
    x2d = fused_linear(attn.reshape(B * S, D), p["wo"], p["bo"],
                       residual=x2d, out_dtype=jnp.float32)

    # --- sublayer 2: feed-forward ---
    out = feed_forward_block(x2d, params["ff"], params["ln2_g"], params["ln2_b"])
    return out.reshape(B, S, D)


# ---------------------------------------------------------------------------
# Deterministic parameter construction (weights pre-fused + pre-cast to bf16 ONCE)
# ---------------------------------------------------------------------------

def _lin_params(key, d_in, d_out):
    k1, k2 = jax.random.split(key)
    w = jax.random.normal(k1, (d_in, d_out), jnp.float32) * (1.0 / math.sqrt(d_in))
    b = jax.random.normal(k2, (1, d_out), jnp.float32) * 0.01
    return w, b


def make_params(key, d_model, d_ff):
    keys = jax.random.split(key, 10)

    def self_attn_params(ks):
        wq, bq = _lin_params(ks[0], d_model, d_model)
        wk, bk = _lin_params(ks[1], d_model, d_model)
        wv, bv = _lin_params(ks[2], d_model, d_model)
        wo, bo = _lin_params(ks[3], d_model, d_model)
        return dict(
            w_qkv=jnp.concatenate([wq, wk, wv], axis=1).astype(jnp.bfloat16),
            b_qkv=jnp.concatenate([bq, bk, bv], axis=1),
            wo=wo.astype(jnp.bfloat16), bo=bo)

    def cross_attn_params(ks):
        wq, bq = _lin_params(ks[0], d_model, d_model)
        wk, bk = _lin_params(ks[1], d_model, d_model)
        wv, bv = _lin_params(ks[2], d_model, d_model)
        wo, bo = _lin_params(ks[3], d_model, d_model)
        return dict(
            wq=wq.astype(jnp.bfloat16), bq=bq,
            w_kv=jnp.concatenate([wk, wv], axis=1).astype(jnp.bfloat16),
            b_kv=jnp.concatenate([bk, bv], axis=1),
            wo=wo.astype(jnp.bfloat16), bo=bo)

    self_attn = self_attn_params(keys[0:4])
    src_attn = cross_attn_params(keys[4:8])
    w1, b1 = _lin_params(keys[8], d_model, d_ff)
    w2, b2 = _lin_params(keys[9], d_ff, d_model)
    ones = jnp.ones((1, d_model), jnp.float32)
    zeros = jnp.zeros((1, d_model), jnp.float32)
    return dict(
        self_attn=self_attn,
        src_attn=src_attn,
        ff=dict(w1=w1.astype(jnp.bfloat16), b1=b1,
                w2=w2.astype(jnp.bfloat16), b2=b2),
        ln0_g=ones, ln0_b=zeros,
        ln1_g=ones, ln1_b=zeros,
        ln2_g=ones, ln2_b=zeros,
    )


# ---------------------------------------------------------------------------

if __name__ == "__main__":
    # Small but lane-aligned shapes (d_model a multiple of 128 so the fused qkv/kv
    # column-block BlockSpecs stay (8,128)-tile friendly).
    B, S_tgt, S_src = 2, 8, 8
    d_model, d_ff, heads = 128, 256, 4

    key = jax.random.PRNGKey(0)
    kx, km, kp = jax.random.split(key, 3)
    x = jax.random.normal(kx, (B, S_tgt, d_model), jnp.float32)
    memory = jax.random.normal(km, (B, S_src, d_model), jnp.float32)
    params = make_params(kp, d_model, d_ff)

    # tgt_mask: causal (lower-triangular); src_mask: all visible. 1 = keep, 0 = masked.
    # TODO(synk): optional key-padding masks of the PyTorch forward are not modeled (default None).
    tgt_mask = jnp.tril(jnp.ones((S_tgt, S_tgt), jnp.float32))
    src_mask = jnp.ones((S_tgt, S_src), jnp.float32)

    fwd = jax.jit(functools.partial(decoder_layer, heads=heads,
                                    tgt_is_causal=True, src_is_full=True))
    out = fwd(x, memory, src_mask, tgt_mask, params)
    out = jax.block_until_ready(out)
    assert out.shape == (B, S_tgt, d_model)
    assert bool(jnp.all(jnp.isfinite(out)))
    print("KERNEL_OK")
</pallas_src>

<mosaic_0001>
module attributes {stable_mosaic.version = 11 : i64} {
  func.func @_attn_kernel(%arg0: i32, %arg1: i32, %arg2: memref<1x8x128xbf16, #tpu.memory_space<vmem>>, %arg3: memref<1x8x128xbf16, #tpu.memory_space<vmem>>, %arg4: memref<1x8x128xbf16, #tpu.memory_space<vmem>>, %arg5: memref<1x8x128xbf16, #tpu.memory_space<vmem>>) attributes {dimension_semantics = [#tpu.dimension_semantics<parallel>, #tpu.dimension_semantics<parallel>], iteration_bounds = array<i64: 2, 1>, scalar_prefetch = 0 : i64, scratch_operands = 0 : i64, tpu.core_type = #tpu.core_type<tc>, window_params = [{transform_indices = @transform_0, window_bounds = array<i64: 1, 8, 128>}, {transform_indices = @transform_1, window_bounds = array<i64: 1, 8, 128>}, {transform_indices = @transform_2, window_bounds = array<i64: 1, 8, 128>}, {transform_indices = @transform_3, window_bounds = array<i64: 1, 8, 128>}]} {
    %c0 = arith.constant 0 : index
    %c0_0 = arith.constant 0 : index
    %c0_1 = arith.constant 0 : index
    %0 = vector.load %arg2[%c0, %c0_0, %c0_1] : memref<1x8x128xbf16, #tpu.memory_space<vmem>>, vector<1x8x128xbf16>
    %1 = vector.shape_cast %0 : vector<1x8x128xbf16> to vector<8x128xbf16>
    %c0_2 = arith.constant 0 : index
    %c0_3 = arith.constant 0 : index
    %c0_4 = arith.constant 0 : index
    %2 = vector.load %arg3[%c0_2, %c0_3, %c0_4] : memref<1x8x128xbf16, #tpu.memory_space<vmem>>, vector<1x8x128xbf16>
    %3 = vector.shape_cast %2 : vector<1x8x128xbf16> to vector<8x128xbf16>
    %c0_5 = arith.constant 0 : index
    %c0_6 = arith.constant 0 : index
    %c0_7 = arith.constant 0 : index
    %4 = vector.load %arg4[%c0_5, %c0_6, %c0_7] : memref<1x8x128xbf16, #tpu.memory_space<vmem>>, vector<1x8x128xbf16>
    %5 = vector.shape_cast %4 : vector<1x8x128xbf16> to vector<8x128xbf16>
    %6 = tpu.iota {dimensions = array<i32: 0>} : vector<8x8xi32>
    %c8_i32 = arith.constant 8 : i32
    %7 = arith.muli %arg1, %c8_i32 : i32
    %8 = vector.broadcast %7 : i32 to vector<8x8xi32>
    %9 = arith.addi %6, %8 : vector<8x8xi32>
    %10 = tpu.iota {dimensions = array<i32: 1>} : vector<8x8xi32>
    %11 = arith.cmpi sle, %10, %9 : vector<8x8xi32>
    %cst = arith.constant 0.000000e+00 : f32
    %cst_8 = arith.constant -1.000000e+09 : f32
    %12 = vector.broadcast %cst : f32 to vector<8x8xf32>
    %13 = vector.broadcast %cst_8 : f32 to vector<8x8xf32>
    %14 = arith.select %11, %12, %13 : vector<8x8xi1>, vector<8x8xf32>
    %15 = vector.extract_strided_slice %1 {offsets = [0, 0], sizes = [8, 32], strides = [1, 1]} : vector<8x128xbf16> to vector<8x32xbf16>
    %16 = vector.extract_strided_slice %3 {offsets = [0, 0], sizes = [8, 32], strides = [1, 1]} : vector<8x128xbf16> to vector<8x32xbf16>
    %17 = vector.extract_strided_slice %5 {offsets = [0, 0], sizes = [8, 32], strides = [1, 1]} : vector<8x128xbf16> to vector<8x32xbf16>
    %cst_9 = arith.constant dense<0.000000e+00> : vector<8x8xf32>
    %18 = tpu.matmul %15, %16, %cst_9 {dimension_numbers = #tpu.dot_dimension_numbers<[1], [1], [0], [0], [0, 0, 1, 0], [], []>} : vector<8x32xbf16>, vector<8x32xbf16>, vector<8x8xf32> -> vector<8x8xf32>
    %cst_10 = arith.constant 0.176776692 : f32
    %19 = vector.broadcast %cst_10 : f32 to vector<8x8xf32>
    %20 = arith.mulf %18, %19 : vector<8x8xf32>
    %21 = arith.addf %20, %14 : vector<8x8xf32>
    %cst_11 = arith.constant dense<0xFF800000> : vector<8xf32>
    %22 = vector.multi_reduction <maximumf>, %21, %cst_11 [1] : vector<8x8xf32> to vector<8xf32>
    %23 = vector.shape_cast %22 : vector<8xf32> to vector<8x1xf32>
    %24 = vector.broadcast %23 : vector<8x1xf32> to vector<8x8xf32>
    %25 = arith.subf %21, %24 : vector<8x8xf32>
    %26 = math.exp %25 : vector<8x8xf32>
    %cst_12 = arith.constant dense<0.000000e+00> : vector<8xf32>
    %27 = vector.multi_reduction <add>, %26, %cst_12 [1] : vector<8x8xf32> to vector<8xf32>
    %28 = vector.shape_cast %27 : vector<8xf32> to vector<8x1xf32>
    %29 = tpu.reciprocal %28 {approx = true} : vector<8x1xf32> -> vector<8x1xf32>
    %30 = vector.broadcast %29 : vector<8x1xf32> to vector<8x8xf32>
    %31 = arith.mulf %26, %30 : vector<8x8xf32>
    %32 = arith.truncf %31 : vector<8x8xf32> to vector<8x8xbf16>
    %cst_13 = arith.constant dense<0.000000e+00> : vector<8x32xf32>
    %33 = tpu.matmul %32, %17, %cst_13 {dimension_numbers = #tpu.dot_dimension_numbers<[1], [0], [0], [1], [0, 0, 1, 1], [], []>} : vector<8x8xbf16>, vector<8x32xbf16>, vector<8x32xf32> -> vector<8x32xf32>
    %34 = arith.truncf %33 : vector<8x32xf32> to vector<8x32xbf16>
    %c0_14 = arith.constant 0 : index
    %c0_15 = arith.constant 0 : index
    %c0_16 = arith.constant 0 : index
    %35 = vector.load %arg5[%c0_14, %c0_15, %c0_16] : memref<1x8x128xbf16, #tpu.memory_space<vmem>>, vector<1x8x32xbf16>
    %36 = vector.shape_cast %35 : vector<1x8x32xbf16> to vector<8x32xbf16>
    %37 = vector.shape_cast %34 : vector<8x32xbf16> to vector<1x8x32xbf16>
    tpu.vector_store %arg5[%c0_14, %c0_15, %c0_16], %37 {strides = array<i32>} : memref<1x8x128xbf16, #tpu.memory_space<vmem>>, vector<1x8x32xbf16>,
    %38 = vector.extract_strided_slice %1 {offsets = [0, 32], sizes = [8, 32], strides = [1, 1]} : vector<8x128xbf16> to vector<8x32xbf16>
    %39 = vector.extract_strided_slice %3 {offsets = [0, 32], sizes = [8, 32], strides = [1, 1]} : vector<8x128xbf16> to vector<8x32xbf16>
    %40 = vector.extract_strided_slice %5 {offsets = [0, 32], sizes = [8, 32], strides = [1, 1]} : vector<8x128xbf16> to vector<8x32xbf16>
    %cst_17 = arith.constant dense<0.000000e+00> : vector<8x8xf32>
    %41 = tpu.matmul %38, %39, %cst_17 {dimension_numbers = #tpu.dot_dimension_numbers<[1], [1], [0], [0], [0, 0, 1, 0], [], []>} : vector<8x32xbf16>, vector<8x32xbf16>, vector<8x8xf32> -> vector<8x8xf32>
    %cst_18 = arith.constant 0.176776692 : f32
    %42 = vector.broadcast %cst_18 : f32 to vector<8x8xf32>
    %43 = arith.mulf %41, %42 : vector<8x8xf32>
    %44 = arith.addf %43, %14 : vector<8x8xf32>
    %cst_19 = arith.constant dense<0xFF800000> : vector<8xf32>
    %45 = vector.multi_reduction <maximumf>, %44, %cst_19 [1] : vector<8x8xf32> to vector<8xf32>
    %46 = vector.shape_cast %45 : vector<8xf32> to vector<8x1xf32>
    %47 = vector.broadcast %46 : vector<8x1xf32> to vector<8x8xf32>
    %48 = arith.subf %44, %47 : vector<8x8xf32>
    %49 = math.exp %48 : vector<8x8xf32>
    %cst_20 = arith.constant dense<0.000000e+00> : vector<8xf32>
    %50 = vector.multi_reduction <add>, %49, %cst_20 [1] : vector<8x8xf32> to vector<8xf32>
    %51 = vector.shape_cast %50 : vector<8xf32> to vector<8x1xf32>
    %52 = tpu.reciprocal %51 {approx = true} : vector<8x1xf32> -> vector<8x1xf32>
    %53 = vector.broadcast %52 : vector<8x1xf32> to vector<8x8xf32>
    %54 = arith.mulf %49, %53 : vector<8x8xf32>
    %55 = arith.truncf %54 : vector<8x8xf32> to vector<8x8xbf16>
    %cst_21 = arith.constant dense<0.000000e+00> : vector<8x32xf32>
    %56 = tpu.matmul %55, %40, %cst_21 {dimension_numbers = #tpu.dot_dimension_numbers<[1], [0], [0], [1], [0, 0, 1, 1], [], []>} : vector<8x8xbf16>, vector<8x32xbf16>, vector<8x32xf32> -> vector<8x32xf32>
    %57 = arith.truncf %56 : vector<8x32xf32> to vector<8x32xbf16>
    %c0_22 = arith.constant 0 : index
    %c0_23 = arith.constant 0 : index
    %c32 = arith.constant 32 : index
    %58 = vector.load %arg5[%c0_22, %c0_23, %c32] : memref<1x8x128xbf16, #tpu.memory_space<vmem>>, vector<1x8x32xbf16>
    %59 = vector.shape_cast %58 : vector<1x8x32xbf16> to vector<8x32xbf16>
    %60 = vector.shape_cast %57 : vector<8x32xbf16> to vector<1x8x32xbf16>
    tpu.vector_store %arg5[%c0_22, %c0_23, %c32], %60 {strides = array<i32>} : memref<1x8x128xbf16, #tpu.memory_space<vmem>>, vector<1x8x32xbf16>,
    %61 = vector.extract_strided_slice %1 {offsets = [0, 64], sizes = [8, 32], strides = [1, 1]} : vector<8x128xbf16> to vector<8x32xbf16>
    %62 = vector.extract_strided_slice %3 {offsets = [0, 64], sizes = [8, 32], strides = [1, 1]} : vector<8x128xbf16> to vector<8x32xbf16>
    %63 = vector.extract_strided_slice %5 {offsets = [0, 64], sizes = [8, 32], strides = [1, 1]} : vector<8x128xbf16> to vector<8x32xbf16>
    %cst_24 = arith.constant dense<0.000000e+00> : vector<8x8xf32>
    %64 = tpu.matmul %61, %62, %cst_24 {dimension_numbers = #tpu.dot_dimension_numbers<[1], [1], [0], [0], [0, 0, 1, 0], [], []>} : vector<8x32xbf16>, vector<8x32xbf16>, vector<8x8xf32> -> vector<8x8xf32>
    %cst_25 = arith.constant 0.176776692 : f32
    %65 = vector.broadcast %cst_25 : f32 to vector<8x8xf32>
    %66 = arith.mulf %64, %65 : vector<8x8xf32>
    %67 = arith.addf %66, %14 : vector<8x8xf32>
    %cst_26 = arith.constant dense<0xFF800000> : vector<8xf32>
    %68 = vector.multi_reduction <maximumf>, %67, %cst_26 [1] : vector<8x8xf32> to vector<8xf32>
    %69 = vector.shape_cast %68 : vector<8xf32> to vector<8x1xf32>
    %70 = vector.broadcast %69 : vector<8x1xf32> to vector<8x8xf32>
    %71 = arith.subf %67, %70 : vector<8x8xf32>
    %72 = math.exp %71 : vector<8x8xf32>
    %cst_27 = arith.constant dense<0.000000e+00> : vector<8xf32>
    %73 = vector.multi_reduction <add>, %72, %cst_27 [1] : vector<8x8xf32> to vector<8xf32>
    %74 = vector.shape_cast %73 : vector<8xf32> to vector<8x1xf32>
    %75 = tpu.reciprocal %74 {approx = true} : vector<8x1xf32> -> vector<8x1xf32>
    %76 = vector.broadcast %75 : vector<8x1xf32> to vector<8x8xf32>
    %77 = arith.mulf %72, %76 : vector<8x8xf32>
    %78 = arith.truncf %77 : vector<8x8xf32> to vector<8x8xbf16>
    %cst_28 = arith.constant dense<0.000000e+00> : vector<8x32xf32>
    %79 = tpu.matmul %78, %63, %cst_28 {dimension_numbers = #tpu.dot_dimension_numbers<[1], [0], [0], [1], [0, 0, 1, 1], [], []>} : vector<8x8xbf16>, vector<8x32xbf16>, vector<8x32xf32> -> vector<8x32xf32>
    %80 = arith.truncf %79 : vector<8x32xf32> to vector<8x32xbf16>
    %c0_29 = arith.constant 0 : index
    %c0_30 = arith.constant 0 : index
    %c64 = arith.constant 64 : index
    %81 = vector.load %arg5[%c0_29, %c0_30, %c64] : memref<1x8x128xbf16, #tpu.memory_space<vmem>>, vector<1x8x32xbf16>
    %82 = vector.shape_cast %81 : vector<1x8x32xbf16> to vector<8x32xbf16>
    %83 = vector.shape_cast %80 : vector<8x32xbf16> to vector<1x8x32xbf16>
    tpu.vector_store %arg5[%c0_29, %c0_30, %c64], %83 {strides = array<i32>} : memref<1x8x128xbf16, #tpu.memory_space<vmem>>, vector<1x8x32xbf16>,
    %84 = vector.extract_strided_slice %1 {offsets = [0, 96], sizes = [8, 32], strides = [1, 1]} : vector<8x128xbf16> to vector<8x32xbf16>
    %85 = vector.extract_strided_slice %3 {offsets = [0, 96], sizes = [8, 32], strides = [1, 1]} : vector<8x128xbf16> to vector<8x32xbf16>
    %86 = vector.extract_strided_slice %5 {offsets = [0, 96], sizes = [8, 32], strides = [1, 1]} : vector<8x128xbf16> to vector<8x32xbf16>
    %cst_31 = arith.constant dense<0.000000e+00> : vector<8x8xf32>
    %87 = tpu.matmul %84, %85, %cst_31 {dimension_numbers = #tpu.dot_dimension_numbers<[1], [1], [0], [0], [0, 0, 1, 0], [], []>} : vector<8x32xbf16>, vector<8x32xbf16>, vector<8x8xf32> -> vector<8x8xf32>
    %cst_32 = arith.constant 0.176776692 : f32
    %88 = vector.broadcast %cst_32 : f32 to vector<8x8xf32>
    %89 = arith.mulf %87, %88 : vector<8x8xf32>
    %90 = arith.addf %89, %14 : vector<8x8xf32>
    %cst_33 = arith.constant dense<0xFF800000> : vector<8xf32>
    %91 = vector.multi_reduction <maximumf>, %90, %cst_33 [1] : vector<8x8xf32> to vector<8xf32>
    %92 = vector.shape_cast %91 : vector<8xf32> to vector<8x1xf32>
    %93 = vector.broadcast %92 : vector<8x1xf32> to vector<8x8xf32>
    %94 = arith.subf %90, %93 : vector<8x8xf32>
    %95 = math.exp %94 : vector<8x8xf32>
    %cst_34 = arith.constant dense<0.000000e+00> : vector<8xf32>
    %96 = vector.multi_reduction <add>, %95, %cst_34 [1] : vector<8x8xf32> to vector<8xf32>
    %97 = vector.shape_cast %96 : vector<8xf32> to vector<8x1xf32>
    %98 = tpu.reciprocal %97 {approx = true} : vector<8x1xf32> -> vector<8x1xf32>
    %99 = vector.broadcast %98 : vector<8x1xf32> to vector<8x8xf32>
    %100 = arith.mulf %95, %99 : vector<8x8xf32>
    %101 = arith.truncf %100 : vector<8x8xf32> to vector<8x8xbf16>
    %cst_35 = arith.constant dense<0.000000e+00> : vector<8x32xf32>
    %102 = tpu.matmul %101, %86, %cst_35 {dimension_numbers = #tpu.dot_dimension_numbers<[1], [0], [0], [1], [0, 0, 1, 1], [], []>} : vector<8x8xbf16>, vector<8x32xbf16>, vector<8x32xf32> -> vector<8x32xf32>
    %103 = arith.truncf %102 : vector<8x32xf32> to vector<8x32xbf16>
    %c0_36 = arith.constant 0 : index
    %c0_37 = arith.constant 0 : index
    %c96 = arith.constant 96 : index
    %104 = vector.load %arg5[%c0_36, %c0_37, %c96] : memref<1x8x128xbf16, #tpu.memory_space<vmem>>, vector<1x8x32xbf16>
    %105 = vector.shape_cast %104 : vector<1x8x32xbf16> to vector<8x32xbf16>
    %106 = vector.shape_cast %103 : vector<8x32xbf16> to vector<1x8x32xbf16>
    tpu.vector_store %arg5[%c0_36, %c0_37, %c96], %106 {strides = array<i32>} : memref<1x8x128xbf16, #tpu.memory_space<vmem>>, vector<1x8x32xbf16>,
    return
  }
  func.func @transform_0(%arg0: i32, %arg1: i32) -> (i32, i32, i32) {
    %c0_i32 = arith.constant 0 : i32
    %c0_i32_0 = arith.constant 0 : i32
    return %arg0, %arg1, %c0_i32 : i32, i32, i32
  }
  func.func @transform_1(%arg0: i32, %arg1: i32) -> (i32, i32, i32) {
    %c0_i32 = arith.constant 0 : i32
    %c1_i32 = arith.constant 1 : i32
    %c0_i32_0 = arith.constant 0 : i32
    return %arg0, %c0_i32, %c1_i32 : i32, i32, i32
  }
  func.func @transform_2(%arg0: i32, %arg1: i32) -> (i32, i32, i32) {
    %c0_i32 = arith.constant 0 : i32
    %c2_i32 = arith.constant 2 : i32
    %c0_i32_0 = arith.constant 0 : i32
    return %arg0, %c0_i32, %c2_i32 : i32, i32, i32
  }
  func.func @transform_3(%arg0: i32, %arg1: i32) -> (i32, i32, i32) {
    %c0_i32 = arith.constant 0 : i32
    %c0_i32_0 = arith.constant 0 : i32
    return %arg0, %arg1, %c0_i32 : i32, i32, i32
  }
}

module attributes {stable_mosaic.version = 11 : i64} {
  func.func @_fused_linear_kernel(%arg0: i32, %arg1: i32, %arg2: memref<16x128xf32, #tpu.memory_space<vmem>>, %arg3: memref<128x256xbf16, #tpu.memory_space<vmem>>, %arg4: memref<1x256xf32, #tpu.memory_space<vmem>>, %arg5: memref<16x256xbf16, #tpu.memory_space<vmem>>, %arg6: memref<16x128xbf16, #tpu.memory_space<vmem>>) attributes {dimension_semantics = [#tpu.dimension_semantics<parallel>, #tpu.dimension_semantics<arbitrary>], iteration_bounds = array<i64: 1, 1>, scalar_prefetch = 0 : i64, scratch_operands = 1 : i64, tpu.core_type = #tpu.core_type<tc>, window_params = [{transform_indices = @transform_0, window_bounds = array<i64: 16, 128>}, {transform_indices = @transform_1, window_bounds = array<i64: 128, 256>}, {transform_indices = @transform_2, window_bounds = array<i64: 1, 256>}, {transform_indices = @transform_3, window_bounds = array<i64: 16, 256>}]} {
    %c0_i32 = arith.constant 0 : i32
    %0 = arith.cmpi eq, %arg1, %c0_i32 : i32
    %1 = arith.extui %0 : i1 to i32
    %c0_i32_0 = arith.constant 0 : i32
    %2 = arith.cmpi ne, %1, %c0_i32_0 : i32
    scf.if %2 {
      %c0_8 = arith.constant 0 : index
      %c0_9 = arith.constant 0 : index
      %11 = vector.load %arg2[%c0_8, %c0_9] : memref<16x128xf32, #tpu.memory_space<vmem>>, vector<16x128xf32>
      %12 = arith.truncf %11 : vector<16x128xf32> to vector<16x128xbf16>
      %c0_10 = arith.constant 0 : index
      %c0_11 = arith.constant 0 : index
      %13 = vector.load %arg6[%c0_10, %c0_11] : memref<16x128xbf16, #tpu.memory_space<vmem>>, vector<16x128xbf16>
      tpu.vector_store %arg6[%c0_10, %c0_11], %12 {strides = array<i32>} : memref<16x128xbf16, #tpu.memory_space<vmem>>, vector<16x128xbf16>,
    } else {
    }
    %c0 = arith.constant 0 : index
    %c0_1 = arith.constant 0 : index
    %3 = vector.load %arg6[%c0, %c0_1] : memref<16x128xbf16, #tpu.memory_space<vmem>>, vector<16x128xbf16>
    %c0_2 = arith.constant 0 : index
    %c0_3 = arith.constant 0 : index
    %4 = vector.load %arg3[%c0_2, %c0_3] : memref<128x256xbf16, #tpu.memory_space<vmem>>, vector<128x256xbf16>
    %cst = arith.constant dense<0.000000e+00> : vector<16x256xf32>
    %5 = tpu.matmul %3, %4, %cst {dimension_numbers = #tpu.dot_dimension_numbers<[1], [0], [0], [1], [0, 0, 1, 1], [], []>} : vector<16x128xbf16>, vector<128x256xbf16>, vector<16x256xf32> -> vector<16x256xf32>
    %c0_4 = arith.constant 0 : index
    %c0_5 = arith.constant 0 : index
    %6 = vector.load %arg4[%c0_4, %c0_5] : memref<1x256xf32, #tpu.memory_space<vmem>>, vector<1x256xf32>
    %7 = vector.broadcast %6 : vector<1x256xf32> to vector<16x256xf32>
    %8 = arith.addf %5, %7 : vector<16x256xf32>
    %9 = arith.truncf %8 : vector<16x256xf32> to vector<16x256xbf16>
    %c0_6 = arith.constant 0 : index
    %c0_7 = arith.constant 0 : index
    %10 = vector.load %arg5[%c0_6, %c0_7] : memref<16x256xbf16, #tpu.memory_space<vmem>>, vector<16x256xbf16>
    tpu.vector_store %arg5[%c0_6, %c0_7], %9 {strides = array<i32>} : memref<16x256xbf16, #tpu.memory_space<vmem>>, vector<16x256xbf16>,
    return
  }
  func.func @transform_0(%arg0: i32, %arg1: i32) -> (i32, i32) {
    %c0_i32 = arith.constant 0 : i32
    %c0_i32_0 = arith.constant 0 : i32
    return %arg0, %c0_i32 : i32, i32
  }
  func.func @transform_1(%arg0: i32, %arg1: i32) -> (i32, i32) {
    %c0_i32 = arith.constant 0 : i32
    %c0_i32_0 = arith.constant 0 : i32
    return %c0_i32, %arg1 : i32, i32
  }
  func.func @transform_2(%arg0: i32, %arg1: i32) -> (i32, i32) {
    %c0_i32 = arith.constant 0 : i32
    %c0_i32_0 = arith.constant 0 : i32
    return %c0_i32, %arg1 : i32, i32
  }
  func.func @transform_3(%arg0: i32, %arg1: i32) -> (i32, i32) {
    %c0_i32 = arith.constant 0 : i32
    return %arg0, %arg1 : i32, i32
  }
}

module attributes {stable_mosaic.version = 11 : i64} {
  func.func @_fused_linear_kernel(%arg0: i32, %arg1: i32, %arg2: memref<16x128xf32, #tpu.memory_space<vmem>>, %arg3: memref<1x128xf32, #tpu.memory_space<vmem>>, %arg4: memref<1x128xf32, #tpu.memory_space<vmem>>, %arg5: memref<128x384xbf16, #tpu.memory_space<vmem>>, %arg6: memref<1x384xf32, #tpu.memory_space<vmem>>, %arg7: memref<16x384xbf16, #tpu.memory_space<vmem>>, %arg8: memref<16x128xbf16, #tpu.memory_space<vmem>>) attributes {dimension_semantics = [#tpu.dimension_semantics<parallel>, #tpu.dimension_semantics<arbitrary>], iteration_bounds = array<i64: 1, 1>, scalar_prefetch = 0 : i64, scratch_operands = 1 : i64, tpu.core_type = #tpu.core_type<tc>, window_params = [{transform_indices = @transform_0, window_bounds = array<i64: 16, 128>}, {pipeline_mode = #tpu.pipeline_mode<synchronous>, transform_indices = @transform_1, window_bounds = array<i64: 1, 128>}, {pipeline_mode = #tpu.pipeline_mode<synchronous>, transform_indices = @transform_2, window_bounds = array<i64: 1, 128>}, {transform_indices = @transform_3, window_bounds = array<i64: 128, 384>}, {transform_indices = @transform_4, window_bounds = array<i64: 1, 384>}, {transform_indices = @transform_5, window_bounds = array<i64: 16, 384>}]} {
    %c0_i32 = arith.constant 0 : i32
    %0 = arith.cmpi eq, %arg1, %c0_i32 : i32
    %1 = arith.extui %0 : i1 to i32
    %c0_i32_0 = arith.constant 0 : i32
    %2 = arith.cmpi ne, %1, %c0_i32_0 : i32
    scf.if %2 {
      %c0_8 = arith.constant 0 : index
      %c0_9 = arith.constant 0 : index
      %11 = vector.load %arg2[%c0_8, %c0_9] : memref<16x128xf32, #tpu.memory_space<vmem>>, vector<16x128xf32>
      %cst_10 = arith.constant dense<0.000000e+00> : vector<16xf32>
      %12 = vector.multi_reduction <add>, %11, %cst_10 [1] : vector<16x128xf32> to vector<16xf32>
      %13 = vector.shape_cast %12 : vector<16xf32> to vector<16x1xf32>
      %cst_11 = arith.constant 1.280000e+02 : f32
      %14 = vector.broadcast %cst_11 : f32 to vector<16x1xf32>
      %15 = arith.divf %13, %14 : vector<16x1xf32>
      %16 = vector.broadcast %15 : vector<16x1xf32> to vector<16x128xf32>
      %17 = arith.subf %11, %16 : vector<16x128xf32>
      %18 = arith.mulf %17, %17 : vector<16x128xf32>
      %cst_12 = arith.constant dense<0.000000e+00> : vector<16xf32>
      %19 = vector.multi_reduction <add>, %18, %cst_12 [1] : vector<16x128xf32> to vector<16xf32>
      %20 = vector.shape_cast %19 : vector<16xf32> to vector<16x1xf32>
      %cst_13 = arith.constant 1.280000e+02 : f32
      %21 = vector.broadcast %cst_13 : f32 to vector<16x1xf32>
      %22 = arith.divf %20, %21 : vector<16x1xf32>
      %23 = vector.broadcast %15 : vector<16x1xf32> to vector<16x128xf32>
      %24 = arith.subf %11, %23 : vector<16x128xf32>
      %cst_14 = arith.constant 9.99999997E-7 : f32
      %25 = vector.broadcast %cst_14 : f32 to vector<16x1xf32>
      %26 = arith.addf %22, %25 : vector<16x1xf32>
      %27 = math.rsqrt %26 : vector<16x1xf32>
      %28 = vector.broadcast %27 : vector<16x1xf32> to vector<16x128xf32>
      %29 = arith.mulf %24, %28 : vector<16x128xf32>
      %c0_15 = arith.constant 0 : index
      %c0_16 = arith.constant 0 : index
      %30 = vector.load %arg3[%c0_15, %c0_16] : memref<1x128xf32, #tpu.memory_space<vmem>>, vector<1x128xf32>
      %31 = vector.broadcast %30 : vector<1x128xf32> to vector<16x128xf32>
      %32 = arith.mulf %29, %31 : vector<16x128xf32>
      %c0_17 = arith.constant 0 : index
      %c0_18 = arith.constant 0 : index
      %33 = vector.load %arg4[%c0_17, %c0_18] : memref<1x128xf32, #tpu.memory_space<vmem>>, vector<1x128xf32>
      %34 = vector.broadcast %33 : vector<1x128xf32> to vector<16x128xf32>
      %35 = arith.addf %32, %34 : vector<16x128xf32>
      %36 = arith.truncf %35 : vector<16x128xf32> to vector<16x128xbf16>
      %c0_19 = arith.constant 0 : index
      %c0_20 = arith.constant 0 : index
      %37 = vector.load %arg8[%c0_19, %c0_20] : memref<16x128xbf16, #tpu.memory_space<vmem>>, vector<16x128xbf16>
      tpu.vector_store %arg8[%c0_19, %c0_20], %36 {strides = array<i32>} : memref<16x128xbf16, #tpu.memory_space<vmem>>, vector<16x128xbf16>,
    } else {
    }
    %c0 = arith.constant 0 : index
    %c0_1 = arith.constant 0 : index
    %3 = vector.load %arg8[%c0, %c0_1] : memref<16x128xbf16, #tpu.memory_space<vmem>>, vector<16x128xbf16>
    %c0_2 = arith.constant 0 : index
    %c0_3 = arith.constant 0 : index
    %4 = vector.load %arg5[%c0_2, %c0_3] : memref<128x384xbf16, #tpu.memory_space<vmem>>, vector<128x384xbf16>
    %cst = arith.constant dense<0.000000e+00> : vector<16x384xf32>
    %5 = tpu.matmul %3, %4, %cst {dimension_numbers = #tpu.dot_dimension_numbers<[1], [0], [0], [1], [0, 0, 1, 1], [], []>} : vector<16x128xbf16>, vector<128x384xbf16>, vector<16x384xf32> -> vector<16x384xf32>
    %c0_4 = arith.constant 0 : index
    %c0_5 = arith.constant 0 : index
    %6 = vector.load %arg6[%c0_4, %c0_5] : memref<1x384xf32, #tpu.memory_space<vmem>>, vector<1x384xf32>
    %7 = vector.broadcast %6 : vector<1x384xf32> to vector<16x384xf32>
    %8 = arith.addf %5, %7 : vector<16x384xf32>
    %9 = arith.truncf %8 : vector<16x384xf32> to vector<16x384xbf16>
    %c0_6 = arith.constant 0 : index
    %c0_7 = arith.constant 0 : index
    %10 = vector.load %arg7[%c0_6, %c0_7] : memref<16x384xbf16, #tpu.memory_space<vmem>>, vector<16x384xbf16>
    tpu.vector_store %arg7[%c0_6, %c0_7], %9 {strides = array<i32>} : memref<16x384xbf16, #tpu.memory_space<vmem>>, vector<16x384xbf16>,
    return
  }
  func.func @transform_0(%arg0: i32, %arg1: i32) -> (i32, i32) {
    %c0_i32 = arith.constant 0 : i32
    %c0_i32_0 = arith.constant 0 : i32
    return %arg0, %c0_i32 : i32, i32
  }
  func.func @transform_1(%arg0: i32, %arg1: i32) -> (i32, i32) {
    %c0_i32 = arith.constant 0 : i32
    %c0_i32_0 = arith.constant 0 : i32
    %c0_i32_1 = arith.constant 0 : i32
    return %c0_i32, %c0_i32_0 : i32, i32
  }
  func.func @transform_2(%arg0: i32, %arg1: i32) -> (i32, i32) {
    %c0_i32 = arith.constant 0 : i32
    %c0_i32_0 = arith.constant 0 : i32
    %c0_i32_1 = arith.constant 0 : i32
    return %c0_i32, %c0_i32_0 : i32, i32
  }
  func.func @transform_3(%arg0: i32, %arg1: i32) -> (i32, i32) {
    %c0_i32 = arith.constant 0 : i32
    %c0_i32_0 = arith.constant 0 : i32
    return %c0_i32, %arg1 : i32, i32
  }
  func.func @transform_4(%arg0: i32, %arg1: i32) -> (i32, i32) {
    %c0_i32 = arith.constant 0 : i32
    %c0_i32_0 = arith.constant 0 : i32
    return %c0_i32, %arg1 : i32, i32
  }
  func.func @transform_5(%arg0: i32, %arg1: i32) -> (i32, i32) {
    %c0_i32 = arith.constant 0 : i32
    return %arg0, %arg1 : i32, i32
  }
}

module attributes {stable_mosaic.version = 11 : i64} {
  func.func @_fused_linear_kernel(%arg0: i32, %arg1: i32, %arg2: memref<16x128xbf16, #tpu.memory_space<vmem>>, %arg3: memref<128x128xbf16, #tpu.memory_space<vmem>>, %arg4: memref<1x128xf32, #tpu.memory_space<vmem>>, %arg5: memref<16x128xf32, #tpu.memory_space<vmem>>, %arg6: memref<16x128xf32, #tpu.memory_space<vmem>>, %arg7: memref<16x128xbf16, #tpu.memory_space<vmem>>) attributes {dimension_semantics = [#tpu.dimension_semantics<parallel>, #tpu.dimension_semantics<arbitrary>], iteration_bounds = array<i64: 1, 1>, scalar_prefetch = 0 : i64, scratch_operands = 1 : i64, tpu.core_type = #tpu.core_type<tc>, window_params = [{transform_indices = @transform_0, window_bounds = array<i64: 16, 128>}, {transform_indices = @transform_1, window_bounds = array<i64: 128, 128>}, {transform_indices = @transform_2, window_bounds = array<i64: 1, 128>}, {transform_indices = @transform_3, window_bounds = array<i64: 16, 128>}, {transform_indices = @transform_4, window_bounds = array<i64: 16, 128>}]} {
    %c0_i32 = arith.constant 0 : i32
    %0 = arith.cmpi eq, %arg1, %c0_i32 : i32
    %1 = arith.extui %0 : i1 to i32
    %c0_i32_0 = arith.constant 0 : i32
    %2 = arith.cmpi ne, %1, %c0_i32_0 : i32
    scf.if %2 {
      %c0_10 = arith.constant 0 : index
      %c0_11 = arith.constant 0 : index
      %12 = vector.load %arg2[%c0_10, %c0_11] : memref<16x128xbf16, #tpu.memory_space<vmem>>, vector<16x128xbf16>
      %c0_12 = arith.constant 0 : index
      %c0_13 = arith.constant 0 : index
      %13 = vector.load %arg7[%c0_12, %c0_13] : memref<16x128xbf16, #tpu.memory_space<vmem>>, vector<16x128xbf16>
      tpu.vector_store %arg7[%c0_12, %c0_13], %12 {strides = array<i32>} : memref<16x128xbf16, #tpu.memory_space<vmem>>, vector<16x128xbf16>,
    } else {
    }
    %c0 = arith.constant 0 : index
    %c0_1 = arith.constant 0 : index
    %3 = vector.load %arg7[%c0, %c0_1] : memref<16x128xbf16, #tpu.memory_space<vmem>>, vector<16x128xbf16>
    %c0_2 = arith.constant 0 : index
    %c0_3 = arith.constant 0 : index
    %4 = vector.load %arg3[%c0_2, %c0_3] : memref<128x128xbf16, #tpu.memory_space<vmem>>, vector<128x128xbf16>
    %cst = arith.constant dense<0.000000e+00> : vector<16x128xf32>
    %5 = tpu.matmul %3, %4, %cst {dimension_numbers = #tpu.dot_dimension_numbers<[1], [0], [0], [1], [0, 0, 1, 1], [], []>} : vector<16x128xbf16>, vector<128x128xbf16>, vector<16x128xf32> -> vector<16x128xf32>
    %c0_4 = arith.constant 0 : index
    %c0_5 = arith.constant 0 : index
    %6 = vector.load %arg4[%c0_4, %c0_5] : memref<1x128xf32, #tpu.memory_space<vmem>>, vector<1x128xf32>
    %7 = vector.broadcast %6 : vector<1x128xf32> to vector<16x128xf32>
    %8 = arith.addf %5, %7 : vector<16x128xf32>
    %c0_6 = arith.constant 0 : index
    %c0_7 = arith.constant 0 : index
    %9 = vector.load %arg5[%c0_6, %c0_7] : memref<16x128xf32, #tpu.memory_space<vmem>>, vector<16x128xf32>
    %10 = arith.addf %8, %9 : vector<16x128xf32>
    %c0_8 = arith.constant 0 : index
    %c0_9 = arith.constant 0 : index
    %11 = vector.load %arg6[%c0_8, %c0_9] : memref<16x128xf32, #tpu.memory_space<vmem>>, vector<16x128xf32>
    tpu.vector_store %arg6[%c0_8, %c0_9], %10 {strides = array<i32>} : memref<16x128xf32, #tpu.memory_space<vmem>>, vector<16x128xf32>,
    return
  }
  func.func @transform_0(%arg0: i32, %arg1: i32) -> (i32, i32) {
    %c0_i32 = arith.constant 0 : i32
    %c0_i32_0 = arith.constant 0 : i32
    return %arg0, %c0_i32 : i32, i32
  }
  func.func @transform_1(%arg0: i32, %arg1: i32) -> (i32, i32) {
    %c0_i32 = arith.constant 0 : i32
    %c0_i32_0 = arith.constant 0 : i32
    return %c0_i32, %arg1 : i32, i32
  }
  func.func @transform_2(%arg0: i32, %arg1: i32) -> (i32, i32) {
    %c0_i32 = arith.constant 0 : i32
    %c0_i32_0 = arith.constant 0 : i32
    return %c0_i32, %arg1 : i32, i32
  }
  func.func @transform_3(%arg0: i32, %arg1: i32) -> (i32, i32) {
    %c0_i32 = arith.constant 0 : i32
    return %arg0, %arg1 : i32, i32
  }
  func.func @transform_4(%arg0: i32, %arg1: i32) -> (i32, i32) {
    %c0_i32 = arith.constant 0 : i32
    return %arg0, %arg1 : i32, i32
  }
}

module attributes {stable_mosaic.version = 11 : i64} {
  func.func @_ffn_kernel(%arg0: i32, %arg1: i32, %arg2: memref<16x128xf32, #tpu.memory_space<vmem>>, %arg3: memref<1x128xf32, #tpu.memory_space<vmem>>, %arg4: memref<1x128xf32, #tpu.memory_space<vmem>>, %arg5: memref<128x256xbf16, #tpu.memory_space<vmem>>, %arg6: memref<1x256xf32, #tpu.memory_space<vmem>>, %arg7: memref<256x128xbf16, #tpu.memory_space<vmem>>, %arg8: memref<1x128xf32, #tpu.memory_space<vmem>>, %arg9: memref<16x128xf32, #tpu.memory_space<vmem>>, %arg10: memref<16x128xbf16, #tpu.memory_space<vmem>>, %arg11: memref<16x128xf32, #tpu.memory_space<vmem>>) attributes {dimension_semantics = [#tpu.dimension_semantics<parallel>, #tpu.dimension_semantics<arbitrary>], iteration_bounds = array<i64: 1, 1>, scalar_prefetch = 0 : i64, scratch_operands = 2 : i64, tpu.core_type = #tpu.core_type<tc>, window_params = [{transform_indices = @transform_0, window_bounds = array<i64: 16, 128>}, {pipeline_mode = #tpu.pipeline_mode<synchronous>, transform_indices = @transform_1, window_bounds = array<i64: 1, 128>}, {pipeline_mode = #tpu.pipeline_mode<synchronous>, transform_indices = @transform_2, window_bounds = array<i64: 1, 128>}, {transform_indices = @transform_3, window_bounds = array<i64: 128, 256>}, {transform_indices = @transform_4, window_bounds = array<i64: 1, 256>}, {transform_indices = @transform_5, window_bounds = array<i64: 256, 128>}, {pipeline_mode = #tpu.pipeline_mode<synchronous>, transform_indices = @transform_6, window_bounds = array<i64: 1, 128>}, {transform_indices = @transform_7, window_bounds = array<i64: 16, 128>}]} {
    %c0_i32 = arith.constant 0 : i32
    %0 = arith.cmpi eq, %arg1, %c0_i32 : i32
    %1 = arith.extui %0 : i1 to i32
    %c0_i32_0 = arith.constant 0 : i32
    %2 = arith.cmpi ne, %1, %c0_i32_0 : i32
    scf.if %2 {
      %c0_16 = arith.constant 0 : index
      %c0_17 = arith.constant 0 : index
      %20 = vector.load %arg2[%c0_16, %c0_17] : memref<16x128xf32, #tpu.memory_space<vmem>>, vector<16x128xf32>
      %cst_18 = arith.constant dense<0.000000e+00> : vector<16xf32>
      %21 = vector.multi_reduction <add>, %20, %cst_18 [1] : vector<16x128xf32> to vector<16xf32>
      %22 = vector.shape_cast %21 : vector<16xf32> to vector<16x1xf32>
      %cst_19 = arith.constant 1.280000e+02 : f32
      %23 = vector.broadcast %cst_19 : f32 to vector<16x1xf32>
      %24 = arith.divf %22, %23 : vector<16x1xf32>
      %25 = vector.broadcast %24 : vector<16x1xf32> to vector<16x128xf32>
      %26 = arith.subf %20, %25 : vector<16x128xf32>
      %27 = arith.mulf %26, %26 : vector<16x128xf32>
      %cst_20 = arith.constant dense<0.000000e+00> : vector<16xf32>
      %28 = vector.multi_reduction <add>, %27, %cst_20 [1] : vector<16x128xf32> to vector<16xf32>
      %29 = vector.shape_cast %28 : vector<16xf32> to vector<16x1xf32>
      %cst_21 = arith.constant 1.280000e+02 : f32
      %30 = vector.broadcast %cst_21 : f32 to vector<16x1xf32>
      %31 = arith.divf %29, %30 : vector<16x1xf32>
      %32 = vector.broadcast %24 : vector<16x1xf32> to vector<16x128xf32>
      %33 = arith.subf %20, %32 : vector<16x128xf32>
      %cst_22 = arith.constant 9.99999997E-7 : f32
      %34 = vector.broadcast %cst_22 : f32 to vector<16x1xf32>
      %35 = arith.addf %31, %34 : vector<16x1xf32>
      %36 = math.rsqrt %35 : vector<16x1xf32>
      %37 = vector.broadcast %36 : vector<16x1xf32> to vector<16x128xf32>
      %38 = arith.mulf %33, %37 : vector<16x128xf32>
      %c0_23 = arith.constant 0 : index
      %c0_24 = arith.constant 0 : index
      %39 = vector.load %arg3[%c0_23, %c0_24] : memref<1x128xf32, #tpu.memory_space<vmem>>, vector<1x128xf32>
      %40 = vector.broadcast %39 : vector<1x128xf32> to vector<16x128xf32>
      %41 = arith.mulf %38, %40 : vector<16x128xf32>
      %c0_25 = arith.constant 0 : index
      %c0_26 = arith.constant 0 : index
      %42 = vector.load %arg4[%c0_25, %c0_26] : memref<1x128xf32, #tpu.memory_space<vmem>>, vector<1x128xf32>
      %43 = vector.broadcast %42 : vector<1x128xf32> to vector<16x128xf32>
      %44 = arith.addf %41, %43 : vector<16x128xf32>
      %45 = arith.truncf %44 : vector<16x128xf32> to vector<16x128xbf16>
      %c0_27 = arith.constant 0 : index
      %c0_28 = arith.constant 0 : index
      %46 = vector.load %arg10[%c0_27, %c0_28] : memref<16x128xbf16, #tpu.memory_space<vmem>>, vector<16x128xbf16>
      tpu.vector_store %arg10[%c0_27, %c0_28], %45 {strides = array<i32>} : memref<16x128xbf16, #tpu.memory_space<vmem>>, vector<16x128xbf16>,
      %c0_29 = arith.constant 0 : index
      %c0_30 = arith.constant 0 : index
      %47 = vector.load %arg8[%c0_29, %c0_30] : memref<1x128xf32, #tpu.memory_space<vmem>>, vector<1x128xf32>
      %48 = vector.shape_cast %47 : vector<1x128xf32> to vector<1x128xf32>
      %49 = vector.broadcast %48 : vector<1x128xf32> to vector<16x128xf32>
      %c0_31 = arith.constant 0 : index
      %c0_32 = arith.constant 0 : index
      %50 = vector.load %arg11[%c0_31, %c0_32] : memref<16x128xf32, #tpu.memory_space<vmem>>, vector<16x128xf32>
      tpu.vector_store %arg11[%c0_31, %c0_32], %49 {strides = array<i32>} : memref<16x128xf32, #tpu.memory_space<vmem>>, vector<16x128xf32>,
    } else {
    }
    %c0 = arith.constant 0 : index
    %c0_1 = arith.constant 0 : index
    %3 = vector.load %arg10[%c0, %c0_1] : memref<16x128xbf16, #tpu.memory_space<vmem>>, vector<16x128xbf16>
    %c0_2 = arith.constant 0 : index
    %c0_3 = arith.constant 0 : index
    %4 = vector.load %arg5[%c0_2, %c0_3] : memref<128x256xbf16, #tpu.memory_space<vmem>>, vector<128x256xbf16>
    %cst = arith.constant dense<0.000000e+00> : vector<16x256xf32>
    %5 = tpu.matmul %3, %4, %cst {dimension_numbers = #tpu.dot_dimension_numbers<[1], [0], [0], [1], [0, 0, 1, 1], [], []>} : vector<16x128xbf16>, vector<128x256xbf16>, vector<16x256xf32> -> vector<16x256xf32>
    %c0_4 = arith.constant 0 : index
    %c0_5 = arith.constant 0 : index
    %6 = vector.load %arg6[%c0_4, %c0_5] : memref<1x256xf32, #tpu.memory_space<vmem>>, vector<1x256xf32>
    %7 = vector.broadcast %6 : vector<1x256xf32> to vector<16x256xf32>
    %8 = arith.addf %5, %7 : vector<16x256xf32>
    %cst_6 = arith.constant 0.000000e+00 : f32
    %9 = vector.broadcast %cst_6 : f32 to vector<16x256xf32>
    %10 = arith.maximumf %8, %9 : vector<16x256xf32>
    %c0_7 = arith.constant 0 : index
    %c0_8 = arith.constant 0 : index
    %11 = vector.load %arg11[%c0_7, %c0_8] : memref<16x128xf32, #tpu.memory_space<vmem>>, vector<16x128xf32>
    %12 = arith.truncf %10 : vector<16x256xf32> to vector<16x256xbf16>
    %c0_9 = arith.constant 0 : index
    %c0_10 = arith.constant 0 : index
    %13 = vector.load %arg7[%c0_9, %c0_10] : memref<256x128xbf16, #tpu.memory_space<vmem>>, vector<256x128xbf16>
    %cst_11 = arith.constant dense<0.000000e+00> : vector<16x128xf32>
    %14 = tpu.matmul %12, %13, %cst_11 {dimension_numbers = #tpu.dot_dimension_numbers<[1], [0], [0], [1], [0, 0, 1, 1], [], []>} : vector<16x256xbf16>, vector<256x128xbf16>, vector<16x128xf32> -> vector<16x128xf32>
    %15 = arith.addf %11, %14 : vector<16x128xf32>
    %c0_12 = arith.constant 0 : index
    %c0_13 = arith.constant 0 : index
    %16 = vector.load %arg11[%c0_12, %c0_13] : memref<16x128xf32, #tpu.memory_space<vmem>>, vector<16x128xf32>
    tpu.vector_store %arg11[%c0_12, %c0_13], %15 {strides = array<i32>} : memref<16x128xf32, #tpu.memory_space<vmem>>, vector<16x128xf32>,
    %c0_i32_14 = arith.constant 0 : i32
    %17 = arith.cmpi eq, %arg1, %c0_i32_14 : i32
    %18 = arith.extui %17 : i1 to i32
    %c0_i32_15 = arith.constant 0 : i32
    %19 = arith.cmpi ne, %18, %c0_i32_15 : i32
    scf.if %19 {
      %c0_16 = arith.constant 0 : index
      %c0_17 = arith.constant 0 : index
      %20 = vector.load %arg11[%c0_16, %c0_17] : memref<16x128xf32, #tpu.memory_space<vmem>>, vector<16x128xf32>
      %c0_18 = arith.constant 0 : index
      %c0_19 = arith.constant 0 : index
      %21 = vector.load %arg2[%c0_18, %c0_19] : memref<16x128xf32, #tpu.memory_space<vmem>>, vector<16x128xf32>
      %22 = arith.addf %20, %21 : vector<16x128xf32>
      %c0_20 = arith.constant 0 : index
      %c0_21 = arith.constant 0 : index
      %23 = vector.load %arg9[%c0_20, %c0_21] : memref<16x128xf32, #tpu.memory_space<vmem>>, vector<16x128xf32>
      tpu.vector_store %arg9[%c0_20, %c0_21], %22 {strides = array<i32>} : memref<16x128xf32, #tpu.memory_space<vmem>>, vector<16x128xf32>,
    } else {
    }
    return
  }
  func.func @transform_0(%arg0: i32, %arg1: i32) -> (i32, i32) {
    %c0_i32 = arith.constant 0 : i32
    %c0_i32_0 = arith.constant 0 : i32
    return %arg0, %c0_i32 : i32, i32
  }
  func.func @transform_1(%arg0: i32, %arg1: i32) -> (i32, i32) {
    %c0_i32 = arith.constant 0 : i32
    %c0_i32_0 = arith.constant 0 : i32
    %c0_i32_1 = arith.constant 0 : i32
    return %c0_i32, %c0_i32_0 : i32, i32
  }
  func.func @transform_2(%arg0: i32, %arg1: i32) -> (i32, i32) {
    %c0_i32 = arith.constant 0 : i32
    %c0_i32_0 = arith.constant 0 : i32
    %c0_i32_1 = arith.constant 0 : i32
    return %c0_i32, %c0_i32_0 : i32, i32
  }
  func.func @transform_3(%arg0: i32, %arg1: i32) -> (i32, i32) {
    %c0_i32 = arith.constant 0 : i32
    %c0_i32_0 = arith.constant 0 : i32
    return %c0_i32, %arg1 : i32, i32
  }
  func.func @transform_4(%arg0: i32, %arg1: i32) -> (i32, i32) {
    %c0_i32 = arith.constant 0 : i32
    %c0_i32_0 = arith.constant 0 : i32
    return %c0_i32, %arg1 : i32, i32
  }
  func.func @transform_5(%arg0: i32, %arg1: i32) -> (i32, i32) {
    %c0_i32 = arith.constant 0 : i32
    %c0_i32_0 = arith.constant 0 : i32
    return %arg1, %c0_i32 : i32, i32
  }
  func.func @transform_6(%arg0: i32, %arg1: i32) -> (i32, i32) {
    %c0_i32 = arith.constant 0 : i32
    %c0_i32_0 = arith.constant 0 : i32
    %c0_i32_1 = arith.constant 0 : i32
    return %c0_i32, %c0_i32_0 : i32, i32
  }
  func.func @transform_7(%arg0: i32, %arg1: i32) -> (i32, i32) {
    %c0_i32 = arith.constant 0 : i32
    %c0_i32_0 = arith.constant 0 : i32
    return %arg0, %c0_i32 : i32, i32
  }
}

module attributes {stable_mosaic.version = 11 : i64} {
  func.func @_fused_linear_kernel(%arg0: i32, %arg1: i32, %arg2: memref<16x128xf32, #tpu.memory_space<vmem>>, %arg3: memref<1x128xf32, #tpu.memory_space<vmem>>, %arg4: memref<1x128xf32, #tpu.memory_space<vmem>>, %arg5: memref<128x128xbf16, #tpu.memory_space<vmem>>, %arg6: memref<1x128xf32, #tpu.memory_space<vmem>>, %arg7: memref<16x128xbf16, #tpu.memory_space<vmem>>, %arg8: memref<16x128xbf16, #tpu.memory_space<vmem>>) attributes {dimension_semantics = [#tpu.dimension_semantics<parallel>, #tpu.dimension_semantics<arbitrary>], iteration_bounds = array<i64: 1, 1>, scalar_prefetch = 0 : i64, scratch_operands = 1 : i64, tpu.core_type = #tpu.core_type<tc>, window_params = [{transform_indices = @transform_0, window_bounds = array<i64: 16, 128>}, {pipeline_mode = #tpu.pipeline_mode<synchronous>, transform_indices = @transform_1, window_bounds = array<i64: 1, 128>}, {pipeline_mode = #tpu.pipeline_mode<synchronous>, transform_indices = @transform_2, window_bounds = array<i64: 1, 128>}, {transform_indices = @transform_3, window_bounds = array<i64: 128, 128>}, {transform_indices = @transform_4, window_bounds = array<i64: 1, 128>}, {transform_indices = @transform_5, window_bounds = array<i64: 16, 128>}]} {
    %c0_i32 = arith.constant 0 : i32
    %0 = arith.cmpi eq, %arg1, %c0_i32 : i32
    %1 = arith.extui %0 : i1 to i32
    %c0_i32_0 = arith.constant 0 : i32
    %2 = arith.cmpi ne, %1, %c0_i32_0 : i32
    scf.if %2 {
      %c0_8 = arith.constant 0 : index
      %c0_9 = arith.constant 0 : index
      %11 = vector.load %arg2[%c0_8, %c0_9] : memref<16x128xf32, #tpu.memory_space<vmem>>, vector<16x128xf32>
      %cst_10 = arith.constant dense<0.000000e+00> : vector<16xf32>
      %12 = vector.multi_reduction <add>, %11, %cst_10 [1] : vector<16x128xf32> to vector<16xf32>
      %13 = vector.shape_cast %12 : vector<16xf32> to vector<16x1xf32>
      %cst_11 = arith.constant 1.280000e+02 : f32
      %14 = vector.broadcast %cst_11 : f32 to vector<16x1xf32>
      %15 = arith.divf %13, %14 : vector<16x1xf32>
      %16 = vector.broadcast %15 : vector<16x1xf32> to vector<16x128xf32>
      %17 = arith.subf %11, %16 : vector<16x128xf32>
      %18 = arith.mulf %17, %17 : vector<16x128xf32>
      %cst_12 = arith.constant dense<0.000000e+00> : vector<16xf32>
      %19 = vector.multi_reduction <add>, %18, %cst_12 [1] : vector<16x128xf32> to vector<16xf32>
      %20 = vector.shape_cast %19 : vector<16xf32> to vector<16x1xf32>
      %cst_13 = arith.constant 1.280000e+02 : f32
      %21 = vector.broadcast %cst_13 : f32 to vector<16x1xf32>
      %22 = arith.divf %20, %21 : vector<16x1xf32>
      %23 = vector.broadcast %15 : vector<16x1xf32> to vector<16x128xf32>
      %24 = arith.subf %11, %23 : vector<16x128xf32>
      %cst_14 = arith.constant 9.99999997E-7 : f32
      %25 = vector.broadcast %cst_14 : f32 to vector<16x1xf32>
      %26 = arith.addf %22, %25 : vector<16x1xf32>
      %27 = math.rsqrt %26 : vector<16x1xf32>
      %28 = vector.broadcast %27 : vector<16x1xf32> to vector<16x128xf32>
      %29 = arith.mulf %24, %28 : vector<16x128xf32>
      %c0_15 = arith.constant 0 : index
      %c0_16 = arith.constant 0 : index
      %30 = vector.load %arg3[%c0_15, %c0_16] : memref<1x128xf32, #tpu.memory_space<vmem>>, vector<1x128xf32>
      %31 = vector.broadcast %30 : vector<1x128xf32> to vector<16x128xf32>
      %32 = arith.mulf %29, %31 : vector<16x128xf32>
      %c0_17 = arith.constant 0 : index
      %c0_18 = arith.constant 0 : index
      %33 = vector.load %arg4[%c0_17, %c0_18] : memref<1x128xf32, #tpu.memory_space<vmem>>, vector<1x128xf32>
      %34 = vector.broadcast %33 : vector<1x128xf32> to vector<16x128xf32>
      %35 = arith.addf %32, %34 : vector<16x128xf32>
      %36 = arith.truncf %35 : vector<16x128xf32> to vector<16x128xbf16>
      %c0_19 = arith.constant 0 : index
      %c0_20 = arith.constant 0 : index
      %37 = vector.load %arg8[%c0_19, %c0_20] : memref<16x128xbf16, #tpu.memory_space<vmem>>, vector<16x128xbf16>
      tpu.vector_store %arg8[%c0_19, %c0_20], %36 {strides = array<i32>} : memref<16x128xbf16, #tpu.memory_space<vmem>>, vector<16x128xbf16>,
    } else {
    }
    %c0 = arith.constant 0 : index
    %c0_1 = arith.constant 0 : index
    %3 = vector.load %arg8[%c0, %c0_1] : memref<16x128xbf16, #tpu.memory_space<vmem>>, vector<16x128xbf16>
    %c0_2 = arith.constant 0 : index
    %c0_3 = arith.constant 0 : index
    %4 = vector.load %arg5[%c0_2, %c0_3] : memref<128x128xbf16, #tpu.memory_space<vmem>>, vector<128x128xbf16>
    %cst = arith.constant dense<0.000000e+00> : vector<16x128xf32>
    %5 = tpu.matmul %3, %4, %cst {dimension_numbers = #tpu.dot_dimension_numbers<[1], [0], [0], [1], [0, 0, 1, 1], [], []>} : vector<16x128xbf16>, vector<128x128xbf16>, vector<16x128xf32> -> vector<16x128xf32>
    %c0_4 = arith.constant 0 : index
    %c0_5 = arith.constant 0 : index
    %6 = vector.load %arg6[%c0_4, %c0_5] : memref<1x128xf32, #tpu.memory_space<vmem>>, vector<1x128xf32>
    %7 = vector.broadcast %6 : vector<1x128xf32> to vector<16x128xf32>
    %8 = arith.addf %5, %7 : vector<16x128xf32>
    %9 = arith.truncf %8 : vector<16x128xf32> to vector<16x128xbf16>
    %c0_6 = arith.constant 0 : index
    %c0_7 = arith.constant 0 : index
    %10 = vector.load %arg7[%c0_6, %c0_7] : memref<16x128xbf16, #tpu.memory_space<vmem>>, vector<16x128xbf16>
    tpu.vector_store %arg7[%c0_6, %c0_7], %9 {strides = array<i32>} : memref<16x128xbf16, #tpu.memory_space<vmem>>, vector<16x128xbf16>,
    return
  }
  func.func @transform_0(%arg0: i32, %arg1: i32) -> (i32, i32) {
    %c0_i32 = arith.constant 0 : i32
    %c0_i32_0 = arith.constant 0 : i32
    return %arg0, %c0_i32 : i32, i32
  }
  func.func @transform_1(%arg0: i32, %arg1: i32) -> (i32, i32) {
    %c0_i32 = arith.constant 0 : i32
    %c0_i32_0 = arith.constant 0 : i32
    %c0_i32_1 = arith.constant 0 : i32
    return %c0_i32, %c0_i32_0 : i32, i32
  }
  func.func @transform_2(%arg0: i32, %arg1: i32) -> (i32, i32) {
    %c0_i32 = arith.constant 0 : i32
    %c0_i32_0 = arith.constant 0 : i32
    %c0_i32_1 = arith.constant 0 : i32
    return %c0_i32, %c0_i32_0 : i32, i32
  }
  func.func @transform_3(%arg0: i32, %arg1: i32) -> (i32, i32) {
    %c0_i32 = arith.constant 0 : i32
    %c0_i32_0 = arith.constant 0 : i32
    return %c0_i32, %arg1 : i32, i32
  }
  func.func @transform_4(%arg0: i32, %arg1: i32) -> (i32, i32) {
    %c0_i32 = arith.constant 0 : i32
    %c0_i32_0 = arith.constant 0 : i32
    return %c0_i32, %arg1 : i32, i32
  }
  func.func @transform_5(%arg0: i32, %arg1: i32) -> (i32, i32) {
    %c0_i32 = arith.constant 0 : i32
    return %arg0, %arg1 : i32, i32
  }
}

module attributes {stable_mosaic.version = 11 : i64} {
  func.func @_attn_kernel(%arg0: i32, %arg1: i32, %arg2: memref<1x8x128xbf16, #tpu.memory_space<vmem>>, %arg3: memref<1x8x128xbf16, #tpu.memory_space<vmem>>, %arg4: memref<1x8x128xbf16, #tpu.memory_space<vmem>>, %arg5: memref<1x8x128xbf16, #tpu.memory_space<vmem>>) attributes {dimension_semantics = [#tpu.dimension_semantics<parallel>, #tpu.dimension_semantics<parallel>], iteration_bounds = array<i64: 2, 1>, scalar_prefetch = 0 : i64, scratch_operands = 0 : i64, tpu.core_type = #tpu.core_type<tc>, window_params = [{transform_indices = @transform_0, window_bounds = array<i64: 1, 8, 128>}, {transform_indices = @transform_1, window_bounds = array<i64: 1, 8, 128>}, {transform_indices = @transform_2, window_bounds = array<i64: 1, 8, 128>}, {transform_indices = @transform_3, window_bounds = array<i64: 1, 8, 128>}]} {
    %c0 = arith.constant 0 : index
    %c0_0 = arith.constant 0 : index
    %c0_1 = arith.constant 0 : index
    %0 = vector.load %arg2[%c0, %c0_0, %c0_1] : memref<1x8x128xbf16, #tpu.memory_space<vmem>>, vector<1x8x128xbf16>
    %1 = vector.shape_cast %0 : vector<1x8x128xbf16> to vector<8x128xbf16>
    %c0_2 = arith.constant 0 : index
    %c0_3 = arith.constant 0 : index
    %c0_4 = arith.constant 0 : index
    %2 = vector.load %arg3[%c0_2, %c0_3, %c0_4] : memref<1x8x128xbf16, #tpu.memory_space<vmem>>, vector<1x8x128xbf16>
    %3 = vector.shape_cast %2 : vector<1x8x128xbf16> to vector<8x128xbf16>
    %c0_5 = arith.constant 0 : index
    %c0_6 = arith.constant 0 : index
    %c0_7 = arith.constant 0 : index
    %4 = vector.load %arg4[%c0_5, %c0_6, %c0_7] : memref<1x8x128xbf16, #tpu.memory_space<vmem>>, vector<1x8x128xbf16>
    %5 = vector.shape_cast %4 : vector<1x8x128xbf16> to vector<8x128xbf16>
    %6 = vector.extract_strided_slice %1 {offsets = [0, 0], sizes = [8, 32], strides = [1, 1]} : vector<8x128xbf16> to vector<8x32xbf16>
    %7 = vector.extract_strided_slice %3 {offsets = [0, 0], sizes = [8, 32], strides = [1, 1]} : vector<8x128xbf16> to vector<8x32xbf16>
    %8 = vector.extract_strided_slice %5 {offsets = [0, 0], sizes = [8, 32], strides = [1, 1]} : vector<8x128xbf16> to vector<8x32xbf16>
    %cst = arith.constant dense<0.000000e+00> : vector<8x8xf32>
    %9 = tpu.matmul %6, %7, %cst {dimension_numbers = #tpu.dot_dimension_numbers<[1], [1], [0], [0], [0, 0, 1, 0], [], []>} : vector<8x32xbf16>, vector<8x32xbf16>, vector<8x8xf32> -> vector<8x8xf32>
    %cst_8 = arith.constant 0.176776692 : f32
    %10 = vector.broadcast %cst_8 : f32 to vector<8x8xf32>
    %11 = arith.mulf %9, %10 : vector<8x8xf32>
    %cst_9 = arith.constant dense<0xFF800000> : vector<8xf32>
    %12 = vector.multi_reduction <maximumf>, %11, %cst_9 [1] : vector<8x8xf32> to vector<8xf32>
    %13 = vector.shape_cast %12 : vector<8xf32> to vector<8x1xf32>
    %14 = vector.broadcast %13 : vector<8x1xf32> to vector<8x8xf32>
    %15 = arith.subf %11, %14 : vector<8x8xf32>
    %16 = math.exp %15 : vector<8x8xf32>
    %cst_10 = arith.constant dense<0.000000e+00> : vector<8xf32>
    %17 = vector.multi_reduction <add>, %16, %cst_10 [1] : vector<8x8xf32> to vector<8xf32>
    %18 = vector.shape_cast %17 : vector<8xf32> to vector<8x1xf32>
    %19 = tpu.reciprocal %18 {approx = true} : vector<8x1xf32> -> vector<8x1xf32>
    %20 = vector.broadcast %19 : vector<8x1xf32> to vector<8x8xf32>
    %21 = arith.mulf %16, %20 : vector<8x8xf32>
    %22 = arith.truncf %21 : vector<8x8xf32> to vector<8x8xbf16>
    %cst_11 = arith.constant dense<0.000000e+00> : vector<8x32xf32>
    %23 = tpu.matmul %22, %8, %cst_11 {dimension_numbers = #tpu.dot_dimension_numbers<[1], [0], [0], [1], [0, 0, 1, 1], [], []>} : vector<8x8xbf16>, vector<8x32xbf16>, vector<8x32xf32> -> vector<8x32xf32>
    %24 = arith.truncf %23 : vector<8x32xf32> to vector<8x32xbf16>
    %c0_12 = arith.constant 0 : index
    %c0_13 = arith.constant 0 : index
    %c0_14 = arith.constant 0 : index
    %25 = vector.load %arg5[%c0_12, %c0_13, %c0_14] : memref<1x8x128xbf16, #tpu.memory_space<vmem>>, vector<1x8x32xbf16>
    %26 = vector.shape_cast %25 : vector<1x8x32xbf16> to vector<8x32xbf16>
    %27 = vector.shape_cast %24 : vector<8x32xbf16> to vector<1x8x32xbf16>
    tpu.vector_store %arg5[%c0_12, %c0_13, %c0_14], %27 {strides = array<i32>} : memref<1x8x128xbf16, #tpu.memory_space<vmem>>, vector<1x8x32xbf16>,
    %28 = vector.extract_strided_slice %1 {offsets = [0, 32], sizes = [8, 32], strides = [1, 1]} : vector<8x128xbf16> to vector<8x32xbf16>
    %29 = vector.extract_strided_slice %3 {offsets = [0, 32], sizes = [8, 32], strides = [1, 1]} : vector<8x128xbf16> to vector<8x32xbf16>
    %30 = vector.extract_strided_slice %5 {offsets = [0, 32], sizes = [8, 32], strides = [1, 1]} : vector<8x128xbf16> to vector<8x32xbf16>
    %cst_15 = arith.constant dense<0.000000e+00> : vector<8x8xf32>
    %31 = tpu.matmul %28, %29, %cst_15 {dimension_numbers = #tpu.dot_dimension_numbers<[1], [1], [0], [0], [0, 0, 1, 0], [], []>} : vector<8x32xbf16>, vector<8x32xbf16>, vector<8x8xf32> -> vector<8x8xf32>
    %cst_16 = arith.constant 0.176776692 : f32
    %32 = vector.broadcast %cst_16 : f32 to vector<8x8xf32>
    %33 = arith.mulf %31, %32 : vector<8x8xf32>
    %cst_17 = arith.constant dense<0xFF800000> : vector<8xf32>
    %34 = vector.multi_reduction <maximumf>, %33, %cst_17 [1] : vector<8x8xf32> to vector<8xf32>
    %35 = vector.shape_cast %34 : vector<8xf32> to vector<8x1xf32>
    %36 = vector.broadcast %35 : vector<8x1xf32> to vector<8x8xf32>
    %37 = arith.subf %33, %36 : vector<8x8xf32>
    %38 = math.exp %37 : vector<8x8xf32>
    %cst_18 = arith.constant dense<0.000000e+00> : vector<8xf32>
    %39 = vector.multi_reduction <add>, %38, %cst_18 [1] : vector<8x8xf32> to vector<8xf32>
    %40 = vector.shape_cast %39 : vector<8xf32> to vector<8x1xf32>
    %41 = tpu.reciprocal %40 {approx = true} : vector<8x1xf32> -> vector<8x1xf32>
    %42 = vector.broadcast %41 : vector<8x1xf32> to vector<8x8xf32>
    %43 = arith.mulf %38, %42 : vector<8x8xf32>
    %44 = arith.truncf %43 : vector<8x8xf32> to vector<8x8xbf16>
    %cst_19 = arith.constant dense<0.000000e+00> : vector<8x32xf32>
    %45 = tpu.matmul %44, %30, %cst_19 {dimension_numbers = #tpu.dot_dimension_numbers<[1], [0], [0], [1], [0, 0, 1, 1], [], []>} : vector<8x8xbf16>, vector<8x32xbf16>, vector<8x32xf32> -> vector<8x32xf32>
    %46 = arith.truncf %45 : vector<8x32xf32> to vector<8x32xbf16>
    %c0_20 = arith.constant 0 : index
    %c0_21 = arith.constant 0 : index
    %c32 = arith.constant 32 : index
    %47 = vector.load %arg5[%c0_20, %c0_21, %c32] : memref<1x8x128xbf16, #tpu.memory_space<vmem>>, vector<1x8x32xbf16>
    %48 = vector.shape_cast %47 : vector<1x8x32xbf16> to vector<8x32xbf16>
    %49 = vector.shape_cast %46 : vector<8x32xbf16> to vector<1x8x32xbf16>
    tpu.vector_store %arg5[%c0_20, %c0_21, %c32], %49 {strides = array<i32>} : memref<1x8x128xbf16, #tpu.memory_space<vmem>>, vector<1x8x32xbf16>,
    %50 = vector.extract_strided_slice %1 {offsets = [0, 64], sizes = [8, 32], strides = [1, 1]} : vector<8x128xbf16> to vector<8x32xbf16>
    %51 = vector.extract_strided_slice %3 {offsets = [0, 64], sizes = [8, 32], strides = [1, 1]} : vector<8x128xbf16> to vector<8x32xbf16>
    %52 = vector.extract_strided_slice %5 {offsets = [0, 64], sizes = [8, 32], strides = [1, 1]} : vector<8x128xbf16> to vector<8x32xbf16>
    %cst_22 = arith.constant dense<0.000000e+00> : vector<8x8xf32>
    %53 = tpu.matmul %50, %51, %cst_22 {dimension_numbers = #tpu.dot_dimension_numbers<[1], [1], [0], [0], [0, 0, 1, 0], [], []>} : vector<8x32xbf16>, vector<8x32xbf16>, vector<8x8xf32> -> vector<8x8xf32>
    %cst_23 = arith.constant 0.176776692 : f32
    %54 = vector.broadcast %cst_23 : f32 to vector<8x8xf32>
    %55 = arith.mulf %53, %54 : vector<8x8xf32>
    %cst_24 = arith.constant dense<0xFF800000> : vector<8xf32>
    %56 = vector.multi_reduction <maximumf>, %55, %cst_24 [1] : vector<8x8xf32> to vector<8xf32>
    %57 = vector.shape_cast %56 : vector<8xf32> to vector<8x1xf32>
    %58 = vector.broadcast %57 : vector<8x1xf32> to vector<8x8xf32>
    %59 = arith.subf %55, %58 : vector<8x8xf32>
    %60 = math.exp %59 : vector<8x8xf32>
    %cst_25 = arith.constant dense<0.000000e+00> : vector<8xf32>
    %61 = vector.multi_reduction <add>, %60, %cst_25 [1] : vector<8x8xf32> to vector<8xf32>
    %62 = vector.shape_cast %61 : vector<8xf32> to vector<8x1xf32>
    %63 = tpu.reciprocal %62 {approx = true} : vector<8x1xf32> -> vector<8x1xf32>
    %64 = vector.broadcast %63 : vector<8x1xf32> to vector<8x8xf32>
    %65 = arith.mulf %60, %64 : vector<8x8xf32>
    %66 = arith.truncf %65 : vector<8x8xf32> to vector<8x8xbf16>
    %cst_26 = arith.constant dense<0.000000e+00> : vector<8x32xf32>
    %67 = tpu.matmul %66, %52, %cst_26 {dimension_numbers = #tpu.dot_dimension_numbers<[1], [0], [0], [1], [0, 0, 1, 1], [], []>} : vector<8x8xbf16>, vector<8x32xbf16>, vector<8x32xf32> -> vector<8x32xf32>
    %68 = arith.truncf %67 : vector<8x32xf32> to vector<8x32xbf16>
    %c0_27 = arith.constant 0 : index
    %c0_28 = arith.constant 0 : index
    %c64 = arith.constant 64 : index
    %69 = vector.load %arg5[%c0_27, %c0_28, %c64] : memref<1x8x128xbf16, #tpu.memory_space<vmem>>, vector<1x8x32xbf16>
    %70 = vector.shape_cast %69 : vector<1x8x32xbf16> to vector<8x32xbf16>
    %71 = vector.shape_cast %68 : vector<8x32xbf16> to vector<1x8x32xbf16>
    tpu.vector_store %arg5[%c0_27, %c0_28, %c64], %71 {strides = array<i32>} : memref<1x8x128xbf16, #tpu.memory_space<vmem>>, vector<1x8x32xbf16>,
    %72 = vector.extract_strided_slice %1 {offsets = [0, 96], sizes = [8, 32], strides = [1, 1]} : vector<8x128xbf16> to vector<8x32xbf16>
    %73 = vector.extract_strided_slice %3 {offsets = [0, 96], sizes = [8, 32], strides = [1, 1]} : vector<8x128xbf16> to vector<8x32xbf16>
    %74 = vector.extract_strided_slice %5 {offsets = [0, 96], sizes = [8, 32], strides = [1, 1]} : vector<8x128xbf16> to vector<8x32xbf16>
    %cst_29 = arith.constant dense<0.000000e+00> : vector<8x8xf32>
    %75 = tpu.matmul %72, %73, %cst_29 {dimension_numbers = #tpu.dot_dimension_numbers<[1], [1], [0], [0], [0, 0, 1, 0], [], []>} : vector<8x32xbf16>, vector<8x32xbf16>, vector<8x8xf32> -> vector<8x8xf32>
    %cst_30 = arith.constant 0.176776692 : f32
    %76 = vector.broadcast %cst_30 : f32 to vector<8x8xf32>
    %77 = arith.mulf %75, %76 : vector<8x8xf32>
    %cst_31 = arith.constant dense<0xFF800000> : vector<8xf32>
    %78 = vector.multi_reduction <maximumf>, %77, %cst_31 [1] : vector<8x8xf32> to vector<8xf32>
    %79 = vector.shape_cast %78 : vector<8xf32> to vector<8x1xf32>
    %80 = vector.broadcast %79 : vector<8x1xf32> to vector<8x8xf32>
    %81 = arith.subf %77, %80 : vector<8x8xf32>
    %82 = math.exp %81 : vector<8x8xf32>
    %cst_32 = arith.constant dense<0.000000e+00> : vector<8xf32>
    %83 = vector.multi_reduction <add>, %82, %cst_32 [1] : vector<8x8xf32> to vector<8xf32>
    %84 = vector.shape_cast %83 : vector<8xf32> to vector<8x1xf32>
    %85 = tpu.reciprocal %84 {approx = true} : vector<8x1xf32> -> vector<8x1xf32>
    %86 = vector.broadcast %85 : vector<8x1xf32> to vector<8x8xf32>
    %87 = arith.mulf %82, %86 : vector<8x8xf32>
    %88 = arith.truncf %87 : vector<8x8xf32> to vector<8x8xbf16>
    %cst_33 = arith.constant dense<0.000000e+00> : vector<8x32xf32>
    %89 = tpu.matmul %88, %74, %cst_33 {dimension_numbers = #tpu.dot_dimension_numbers<[1], [0], [0], [1], [0, 0, 1, 1], [], []>} : vector<8x8xbf16>, vector<8x32xbf16>, vector<8x32xf32> -> vector<8x32xf32>
    %90 = arith.truncf %89 : vector<8x32xf32> to vector<8x32xbf16>
    %c0_34 = arith.constant 0 : index
    %c0_35 = arith.constant 0 : index
    %c96 = arith.constant 96 : index
    %91 = vector.load %arg5[%c0_34, %c0_35, %c96] : memref<1x8x128xbf16, #tpu.memory_space<vmem>>, vector<1x8x32xbf16>
    %92 = vector.shape_cast %91 : vector<1x8x32xbf16> to vector<8x32xbf16>
    %93 = vector.shape_cast %90 : vector<8x32xbf16> to vector<1x8x32xbf16>
    tpu.vector_store %arg5[%c0_34, %c0_35, %c96], %93 {strides = array<i32>} : memref<1x8x128xbf16, #tpu.memory_space<vmem>>, vector<1x8x32xbf16>,
    return
  }
  func.func @transform_0(%arg0: i32, %arg1: i32) -> (i32, i32, i32) {
    %c0_i32 = arith.constant 0 : i32
    %c0_i32_0 = arith.constant 0 : i32
    return %arg0, %arg1, %c0_i32 : i32, i32, i32
  }
  func.func @transform_1(%arg0: i32, %arg1: i32) -> (i32, i32, i32) {
    %c0_i32 = arith.constant 0 : i32
    %c0_i32_0 = arith.constant 0 : i32
    %c0_i32_1 = arith.constant 0 : i32
    return %arg0, %c0_i32, %c0_i32_0 : i32, i32, i32
  }
  func.func @transform_2(%arg0: i32, %arg1: i32) -> (i32, i32, i32) {
    %c0_i32 = arith.constant 0 : i32
    %c1_i32 = arith.constant 1 : i32
    %c0_i32_0 = arith.constant 0 : i32
    return %arg0, %c0_i32, %c1_i32 : i32, i32, i32
  }
  func.func @transform_3(%arg0: i32, %arg1: i32) -> (i32, i32, i32) {
    %c0_i32 = arith.constant 0 : i32
    %c0_i32_0 = arith.constant 0 : i32
    return %arg0, %arg1, %c0_i32 : i32, i32, i32
  }
}

</mosaic_0001>

<llo_original>
// kernel: decoder_layer.10
$region0: #{decoder_layer.10}
  #allocation0 [shape = 'u32[]', space=smem, size = 0x4, offset = 0x4, fixed_abs, tag = 'smem constant byte address 0x4 - core index']
  #allocation1 [shape = 'u32[144,128]{1,0:T(1,128)}', space=vmem, size = 0x12000, scoped, tag = 'internal scratch']
  #allocation2 [shape = 'bf16[16,128]{1,0:T(8,128)(2,1)}', space=vmem, size = 0x1000, scoped, tag = 'scratch operand']
  %s0 = inlined_call_operand.vmem [shape: bf16[16,128], index: 0, kind: input, shape index: {}]
  %s1 = inlined_call_operand.vmem [shape: bf16[128,128], index: 1, kind: input, shape index: {}]
  %s2 = inlined_call_operand.vmem [shape: f32[1,128], index: 2, kind: input, shape index: {}]
  %s3 = inlined_call_operand.vmem [shape: f32[16,128], index: 3, kind: input, shape index: {}]
  %s4 = inlined_call_operand.vmem [shape: f32[16,128], index: 4, kind: output, shape index: {}]
  %s5 = sld [smem:[#allocation0]]
  $region30: #{decoder_layer.10} parent=0
    _
  %s7 = ssub.s32 1, %s5
  %s8 = scalar_select 0, %s7, %s5
  // Predicated region
  $region2: #{decoder_layer.10} parent=0 // pred_check
    _
  $region3: #{decoder_layer.10} parent=0 // pred_check_branch
    %10 = sbr.rel (0) target = $region5
  $region4: #{decoder_layer.10} parent=0 // pred_region
    _
  $region5: #{decoder_layer.10} parent=0 // pred_fallthru
    _
  // Predicated region
  $region6: #{decoder_layer.10} parent=0 // pred_check
    _
  $region7: #{decoder_layer.10} parent=0 // pred_check_branch
    %12 = sbr.rel (0) target = $region9
  $region8: #{decoder_layer.10} parent=0 // pred_region
    _
  $region9: #{decoder_layer.10} parent=0 // pred_fallthru
    _
  // Predicated region
  $region10: #{decoder_layer.10} parent=0 // pred_check
    _
  $region11: #{decoder_layer.10} parent=0 // pred_check_branch
    %14 = sbr.rel (0) target = $region13
  $region12: #{decoder_layer.10} parent=0 // pred_region
    _
  $region13: #{decoder_layer.10} parent=0 // pred_fallthru
    _
  // Predicated region
  $region14: #{decoder_layer.10} parent=0 // pred_check
    _
  $region15: #{decoder_layer.10} parent=0 // pred_check_branch
    %16 = sbr.rel (0) target = $region17
  $region16: #{decoder_layer.10} parent=0 // pred_region
    _
  $region17: #{decoder_layer.10} parent=0 // pred_fallthru
    _
  %p18 = scmp.eq.s32.totalorder 0, 0
  // Predicated region
  $region18: #{decoder_layer.10} parent=0 // pred_check
    %p19 = pneg %p18
  $region19: #{decoder_layer.10} parent=0 // pred_check_branch
    %21 = sbr.rel (%p19) target = $region21
  $region20: #{decoder_layer.10} parent=0 // pred_region
    %v22 = vld [vmem:[%s0] sm:$0xf]
    %v23 = vld [vmem:[%s0 + $0x4] sm:$0xf]
    %24 = vst [vmem:[#allocation2] sm:$0xf] %v22
    %25 = vst [vmem:[#allocation2 + $0x4] sm:$0xf] %v23
  $region21: #{decoder_layer.10} parent=0 // pred_fallthru
    _
  %v26 = vld [vmem:[#allocation2] sm:$0xf]
  %v27 = vld [vmem:[#allocation2 + $0x4] sm:$0xf]
  %v28 = vld [vmem:[%s1] sm:$0xf]
  %v29 = vld [vmem:[%s1 + $0x4] sm:$0xf]
  %v30 = vld [vmem:[%s1 + $0x8] sm:$0xf]
  %v31 = vld [vmem:[%s1 + $0xc] sm:$0xf]
  %v32 = vld [vmem:[%s1 + $0x10] sm:$0xf]
  %v33 = vld [vmem:[%s1 + $0x14] sm:$0xf]
  %v34 = vld [vmem:[%s1 + $0x18] sm:$0xf]
  %v35 = vld [vmem:[%s1 + $0x1c] sm:$0xf]
  %v36 = vld [vmem:[%s1 + $0x20] sm:$0xf]
  %v37 = vld [vmem:[%s1 + $0x24] sm:$0xf]
  %v38 = vld [vmem:[%s1 + $0x28] sm:$0xf]
  %v39 = vld [vmem:[%s1 + $0x2c] sm:$0xf]
  %v40 = vld [vmem:[%s1 + $0x30] sm:$0xf]
  %v41 = vld [vmem:[%s1 + $0x34] sm:$0xf]
  %v42 = vld [vmem:[%s1 + $0x38] sm:$0xf]
  %v43 = vld [vmem:[%s1 + $0x3c] sm:$0xf]
  %v44 = vld [vmem:[%s2] sm:$0x1]
  %v46 = vlaneseq
  %v47 = vshrl.u32 %v46, 7
  %v48 = vsub.s32 0, %v47
  %v49 = vrot.slane %v44, %v48
  %v53 = vunpack.c.l.b16 %v26
  %v54 = vunpack.c.l.b16 %v27
  %v55 = vpack.c.b16 %v54, %v53
  %v73 = vunpack.c.l.b16 %v28
  %v74 = vunpack.c.l.b16 %v29
  %v75 = vunpack.c.l.b16 %v30
  %v76 = vunpack.c.l.b16 %v31
  %v77 = vunpack.c.l.b16 %v32
  %v78 = vunpack.c.l.b16 %v33
  %v79 = vunpack.c.l.b16 %v34
  %v80 = vunpack.c.l.b16 %v35
  %v81 = vunpack.c.l.b16 %v36
  %v82 = vunpack.c.l.b16 %v37
  %v83 = vunpack.c.l.b16 %v38
  %v84 = vunpack.c.l.b16 %v39
  %v85 = vunpack.c.l.b16 %v40
  %v86 = vunpack.c.l.b16 %v41
  %v87 = vunpack.c.l.b16 %v42
  %v88 = vunpack.c.l.b16 %v43
  %v89 = vpack.c.b16 %v74, %v73
  %v90 = vpack.c.b16 %v76, %v75
  %v91 = vpack.c.b16 %v78, %v77
  %v92 = vpack.c.b16 %v80, %v79
  %v93 = vpack.c.b16 %v82, %v81
  %v94 = vpack.c.b16 %v84, %v83
  %v95 = vpack.c.b16 %v86, %v85
  %v96 = vpack.c.b16 %v88, %v87
  %105 = vmatprep.subr.bf16.mxu0 0
  %106 = vmatpush1.bf16.msra.mxu0 %v96
  %107 = vmatprep.subr.bf16.mxu0 0
  %108 = vmatpush1.bf16.msra.mxu0 %v95
  %109 = vmatprep.subr.bf16.mxu0 0
  %110 = vmatpush1.bf16.msra.mxu0 %v94
  %111 = vmatprep.subr.bf16.mxu0 0
  %112 = vmatpush1.bf16.msra.mxu0 %v93
  %113 = vmatprep.subr.bf16.mxu0 0
  %114 = vmatpush1.bf16.msra.mxu0 %v92
  %115 = vmatprep.subr.bf16.mxu0 0
  %116 = vmatpush1.bf16.msra.mxu0 %v91
  %117 = vmatprep.subr.bf16.mxu0 0
  %118 = vmatpush1.bf16.msra.mxu0 %v90
  %119 = vmatprep.subr.bf16.mxu0 0
  %120 = vmatpush1.bf16.msra.mxu0 %v89
  %121 = vmatprep.subr.bf16.mxu0 0
  %122 = vmatpush2.bf16.msra.mxu0 0
  %123 = vmatprep.subr.bf16.mxu0 0
  %124 = vmatpush2.bf16.msra.mxu0 0
  %125 = vmatprep.subr.bf16.mxu0 0
  %126 = vmatpush2.bf16.msra.mxu0 0
  %127 = vmatprep.subr.bf16.mxu0 0
  %128 = vmatpush2.bf16.msra.mxu0 0
  %129 = vmatprep.subr.bf16.mxu0 0
  %130 = vmatpush2.bf16.msra.mxu0 0
  %131 = vmatprep.subr.bf16.mxu0 0
  %132 = vmatpush2.bf16.msra.mxu0 0
  %133 = vmatprep.subr.bf16.mxu0 0
  %134 = vmatpush2.bf16.msra.mxu0 0
  %135 = vmatprep.subr.bf16.mxu0 0
  %136 = vmatpush2.bf16.msra.mxu0 0
  %137 = vmatprep.mubr.bf16.mxu0 0
  %138 = vmatmul.mubr.bf16.gmra.mxu0 %v55
  %v139 = vpop.f32.mrf.mxu0
  %v140 = vadd.f32 %v49, %v139
  %v141 = vpop.f32.mrf.mxu0
  %v142 = vpop.f32.mrf.mxu0
  %v143 = vadd.f32 %v49, %v142
  %v144 = vpop.f32.mrf.mxu0
  %145 = vdwg.mxu0
  %v146 = vld [vmem:[%s3] sm:$0xff]
  %v147 = vld [vmem:[%s3 + $0x8] sm:$0xff]
  %v148 = vadd.f32 %v140, %v146
  %v149 = vadd.f32 %v143, %v147
  %150 = vst [vmem:[%s4] sm:$0xff] %v148
  %151 = vst [vmem:[%s4 + $0x8] sm:$0xff] %v149
  // Predicated region
  $region22: #{decoder_layer.10} parent=0 // pred_check
    _
  $region23: #{decoder_layer.10} parent=0 // pred_check_branch
    %153 = sbr.rel (0) target = $region25
  $region24: #{decoder_layer.10} parent=0 // pred_region
    _
  $region25: #{decoder_layer.10} parent=0 // pred_fallthru
    _
  // Predicated region
  $region26: #{decoder_layer.10} parent=0 // pred_check
    _
  $region27: #{decoder_layer.10} parent=0 // pred_check_branch
    %155 = sbr.rel (0) target = $region29
  $region28: #{decoder_layer.10} parent=0 // pred_region
    _
  $region29: #{decoder_layer.10} parent=0 // pred_fallthru
    _

// kernel: decoder_layer.12
$region0: #{decoder_layer.12}
  #allocation0 [shape = 'u32[]', space=smem, size = 0x4, offset = 0x4, fixed_abs, tag = 'smem constant byte address 0x4 - core index']
  #allocation1 [shape = 'u32[144,128]{1,0:T(1,128)}', space=vmem, size = 0x12000, scoped, tag = 'internal scratch']
  #allocation2 [shape = 'bf16[16,128]{1,0:T(8,128)(2,1)}', space=vmem, size = 0x1000, scoped, tag = 'scratch operand']
  %s0 = inlined_call_operand.hbm [shape: f32[16,128], index: 0, kind: input, shape index: {}]
  %s1 = inlined_call_operand.hbm [shape: bf16[128,256], index: 1, kind: input, shape index: {}]
  %s2 = inlined_call_operand.vmem [shape: f32[1,256], index: 2, kind: input, shape index: {}]
  %s3 = inlined_call_operand.vmem [shape: bf16[16,256], index: 3, kind: output, shape index: {}]
  %s4 = sld [smem:[#allocation0]]
  $region34: #{decoder_layer.12} parent=0
    _
  %s6 = ssub.s32 1, %s4
  %s7 = scalar_select 0, %s6, %s4
  $region1: #{decoder_layer.12} parent=0
    #allocation3 [shape = 'u8[8192]{0}', space=vmem, size = 0x2000, scoped, tag = 'input window, operand 0, single buffered']
    #allocation4 [shape = 's32[1]{0}', space=sflag, size = 0x4, scoped, tag = 'scoped memory for decoder_layer.12']
    #allocation5 [shape = 'u8[65536]{0}', space=vmem, size = 0x10000, scoped, tag = 'input window, operand 1, single buffered']
    #allocation6 [shape = 's32[1]{0}', space=sflag, size = 0x4, scoped, tag = 'scoped memory for decoder_layer.12']
    %8 = vsyncpa [#allocation4], 0
    %9 = vsyncpa [#allocation6], 0
    // Predicated region
    $region2: #{decoder_layer.12} parent=1 // pred_check
      _
    $region3: #{decoder_layer.12} parent=1 // pred_check_branch
      %11 = sbr.rel (0) target = $region5
    $region4: #{decoder_layer.12} parent=1 // pred_region
      %s13 = ssub.s32 256, 256
      %14 = vsyncadd [#allocation4], %s13
      %s15 = sshll.u32 [#allocation3], 4
      %s16 = int_to_ptr.vmem [resolvable:$true] %s15
      %21 = dma.hbm_to_vmem [thread:$0]  %s0, 256, %s16, [#allocation4], 128, 128, 8
    $region5: #{decoder_layer.12} parent=1 // pred_fallthru
      _
    // Predicated region
    $region6: #{decoder_layer.12} parent=1 // pred_check
      _
    $region7: #{decoder_layer.12} parent=1 // pred_check_branch
      %23 = sbr.rel (0) target = $region9
    $region8: #{decoder_layer.12} parent=1 // pred_region
      %s25 = ssub.s32 2048, 2048
      %26 = vsyncadd [#allocation6], %s25
      %s27 = sshll.u32 [#allocation5], 4
      %s28 = int_to_ptr.vmem [resolvable:$true] %s27
      %33 = dma.hbm_to_vmem [thread:$0]  %s1, 2048, %s28, [#allocation6], 128, 128, 8
    $region9: #{decoder_layer.12} parent=1 // pred_fallthru
      _
    // Predicated region
    $region10: #{decoder_layer.12} parent=1 // pred_check
      _
    $region11: #{decoder_layer.12} parent=1 // pred_check_branch
      %35 = sbr.rel (0) target = $region13
    $region12: #{decoder_layer.12} parent=1 // pred_region
      _
    $region13: #{decoder_layer.12} parent=1 // pred_fallthru
      _
    // Predicated region
    $region14: #{decoder_layer.12} parent=1 // pred_check
      _
    $region15: #{decoder_layer.12} parent=1 // pred_check_branch
      %37 = sbr.rel (0) target = $region17
    $region16: #{decoder_layer.12} parent=1 // pred_region
      %38 = dma.done [#allocation4], 256
    $region17: #{decoder_layer.12} parent=1 // pred_fallthru
      _
    // Predicated region
    $region18: #{decoder_layer.12} parent=1 // pred_check
      _
    $region19: #{decoder_layer.12} parent=1 // pred_check_branch
      %40 = sbr.rel (0) target = $region21
    $region20: #{decoder_layer.12} parent=1 // pred_region
      %41 = dma.done [#allocation6], 2048
    $region21: #{decoder_layer.12} parent=1 // pred_fallthru
      _
    %p43 = scmp.eq.s32.totalorder 0, 0
    // Predicated region
    $region22: #{decoder_layer.12} parent=1 // pred_check
      %p44 = pneg %p43
    $region23: #{decoder_layer.12} parent=1 // pred_check_branch
      %46 = sbr.rel (%p44) target = $region25
    $region24: #{decoder_layer.12} parent=1 // pred_region
      %v47 = vld [vmem:[#allocation3] sm:$0xff]
      %v48 = vld [vmem:[#allocation3 + $0x8] sm:$0xff]
      %v49 = vpack.c.bf16 %v48, %v47
      %v51 = vunpack.c.l.b16 %v49
      %v52 = vunpack.c.h.b16 %v49
      %v53 = vpack.c.b16 %v51, %v51
      %v54 = vpack.c.b16 %v52, %v52
      %57 = vst [vmem:[#allocation2] sm:$0xf] %v53
      %58 = vst [vmem:[#allocation2 + $0x4] sm:$0xf] %v54
    $region25: #{decoder_layer.12} parent=1 // pred_fallthru
      _
    %v59 = vld [vmem:[#allocation2] sm:$0xf]
    %v60 = vld [vmem:[#allocation2 + $0x4] sm:$0xf]
    %v61 = vld [vmem:[#allocation5] sm:$0xff]
    %v62 = vld [vmem:[#allocation5 + $0x8] sm:$0xff]
    %v63 = vld [vmem:[#allocation5 + $0x10] sm:$0xff]
    %v64 = vld [vmem:[#allocation5 + $0x18] sm:$0xff]
    %v65 = vld [vmem:[#allocation5 + $0x20] sm:$0xff]
    %v66 = vld [vmem:[#allocation5 + $0x28] sm:$0xff]
    %v67 = vld [vmem:[#allocation5 + $0x30] sm:$0xff]
    %v68 = vld [vmem:[#allocation5 + $0x38] sm:$0xff]
    %v69 = vld [vmem:[#allocation5 + $0x40] sm:$0xff]
    %v70 = vld [vmem:[#allocation5 + $0x48] sm:$0xff]
    %v71 = vld [vmem:[#allocation5 + $0x50] sm:$0xff]
    %v72 = vld [vmem:[#allocation5 + $0x58] sm:$0xff]
    %v73 = vld [vmem:[#allocation5 + $0x60] sm:$0xff]
    %v74 = vld [vmem:[#allocation5 + $0x68] sm:$0xff]
    %v75 = vld [vmem:[#allocation5 + $0x70] sm:$0xff]
    %v76 = vld [vmem:[#allocation5 + $0x78] sm:$0xff]
    %v77 = vld [vmem:[%s2] sm:$0x3]
    %v79 = vlaneseq
    %v80 = vshrl.u32 %v79, 7
    %v81 = vsub.s32 0, %v80
    %v82 = vrot.slane %v77, %v81
    %v83 = vlaneseq
    %v84 = vshrl.u32 %v83, 7
    %v85 = vsub.s32 1, %v84
    %v86 = vrot.slane %v77, %v85
    %v91 = vunpack.c.l.b16 %v59
    %v92 = vunpack.c.l.b16 %v60
    %v93 = vpack.c.b16 %v92, %v91
    %v111 = vunpack.c.l.b16 %v61
    %v112 = vunpack.c.h.b16 %v61
    %v113 = vunpack.c.l.b16 %v62
    %v114 = vunpack.c.h.b16 %v62
    %v115 = vunpack.c.l.b16 %v63
    %v116 = vunpack.c.h.b16 %v63
    %v117 = vunpack.c.l.b16 %v64
    %v118 = vunpack.c.h.b16 %v64
    %v119 = vunpack.c.l.b16 %v65
    %v120 = vunpack.c.h.b16 %v65
    %v121 = vunpack.c.l.b16 %v66
    %v122 = vunpack.c.h.b16 %v66
    %v123 = vunpack.c.l.b16 %v67
    %v124 = vunpack.c.h.b16 %v67
    %v125 = vunpack.c.l.b16 %v68
    %v126 = vunpack.c.h.b16 %v68
    %v127 = vunpack.c.l.b16 %v69
    %v128 = vunpack.c.h.b16 %v69
    %v129 = vunpack.c.l.b16 %v70
    %v130 = vunpack.c.h.b16 %v70
    %v131 = vunpack.c.l.b16 %v71
    %v132 = vunpack.c.h.b16 %v71
    %v133 = vunpack.c.l.b16 %v72
    %v134 = vunpack.c.h.b16 %v72
    %v135 = vunpack.c.l.b16 %v73
    %v136 = vunpack.c.h.b16 %v73
    %v137 = vunpack.c.l.b16 %v74
    %v138 = vunpack.c.h.b16 %v74
    %v139 = vunpack.c.l.b16 %v75
    %v140 = vunpack.c.h.b16 %v75
    %v141 = vunpack.c.l.b16 %v76
    %v142 = vunpack.c.h.b16 %v76
    %v143 = vpack.c.b16 %v113, %v111
    %v144 = vpack.c.b16 %v114, %v112
    %v145 = vpack.c.b16 %v117, %v115
    %v146 = vpack.c.b16 %v118, %v116
    %v147 = vpack.c.b16 %v121, %v119
    %v148 = vpack.c.b16 %v122, %v120
    %v149 = vpack.c.b16 %v125, %v123
    %v150 = vpack.c.b16 %v126, %v124
    %v151 = vpack.c.b16 %v129, %v127
    %v152 = vpack.c.b16 %v130, %v128
    %v153 = vpack.c.b16 %v133, %v131
    %v154 = vpack.c.b16 %v134, %v132
    %v155 = vpack.c.b16 %v137, %v135
    %v156 = vpack.c.b16 %v138, %v136
    %v157 = vpack.c.b16 %v141, %v139
    %v158 = vpack.c.b16 %v142, %v140
    %175 = vmatprep.subr.bf16.mxu0 %v158
    %176 = vmatpush1.bf16.msra.mxu0 %v157
    %177 = vmatprep.subr.bf16.mxu0 %v156
    %178 = vmatpush1.bf16.msra.mxu0 %v155
    %179 = vmatprep.subr.bf16.mxu0 %v154
    %180 = vmatpush1.bf16.msra.mxu0 %v153
    %181 = vmatprep.subr.bf16.mxu0 %v152
    %182 = vmatpush1.bf16.msra.mxu0 %v151
    %183 = vmatprep.subr.bf16.mxu0 %v150
    %184 = vmatpush1.bf16.msra.mxu0 %v149
    %185 = vmatprep.subr.bf16.mxu0 %v148
    %186 = vmatpush1.bf16.msra.mxu0 %v147
    %187 = vmatprep.subr.bf16.mxu0 %v146
    %188 = vmatpush1.bf16.msra.mxu0 %v145
    %189 = vmatprep.subr.bf16.mxu0 %v144
    %190 = vmatpush1.bf16.msra.mxu0 %v143
    %191 = vmatprep.subr.bf16.mxu0 0
    %192 = vmatpush2.bf16.msra.mxu0 0
    %193 = vmatprep.subr.bf16.mxu0 0
    %194 = vmatpush2.bf16.msra.mxu0 0
    %195 = vmatprep.subr.bf16.mxu0 0
    %196 = vmatpush2.bf16.msra.mxu0 0
    %197 = vmatprep.subr.bf16.mxu0 0
    %198 = vmatpush2.bf16.msra.mxu0 0
    %199 = vmatprep.subr.bf16.mxu0 0
    %200 = vmatpush2.bf16.msra.mxu0 0
    %201 = vmatprep.subr.bf16.mxu0 0
    %202 = vmatpush2.bf16.msra.mxu0 0
    %203 = vmatprep.subr.bf16.mxu0 0
    %204 = vmatpush2.bf16.msra.mxu0 0
    %205 = vmatprep.subr.bf16.mxu0 0
    %206 = vmatpush2.bf16.msra.mxu0 0
    %207 = vmatprep.mubr.bf16.mxu0 0
    %208 = vmatmul.mubr.bf16.gmra.mxu0 %v93
    %v209 = vpop.f32.mrf.mxu0
    %v210 = vadd.f32 %v82, %v209
    %v211 = vpop.f32.mrf.mxu0
    %v212 = vadd.f32 %v86, %v211
    %v213 = vpop.f32.mrf.mxu0
    %v214 = vadd.f32 %v82, %v213
    %v215 = vpop.f32.mrf.mxu0
    %v216 = vadd.f32 %v86, %v215
    %217 = vdwg.mxu0
    %v218 = vpack.c.bf16 %v214, %v210
    %v219 = vpack.c.bf16 %v216, %v212
    %v222 = vunpack.c.l.b16 %v218
    %v223 = vunpack.c.l.b16 %v219
    %v224 = vunpack.c.h.b16 %v218
    %v225 = vunpack.c.h.b16 %v219
    %v226 = vpack.c.b16 %v223, %v222
    %v227 = vpack.c.b16 %v225, %v224
    %230 = vst [vmem:[%s3] sm:$0xff] %v226
    %231 = vst [vmem:[%s3 + $0x8] sm:$0xff] %v227
    // Predicated region
    $region26: #{decoder_layer.12} parent=1 // pred_check
      _
    $region27: #{decoder_layer.12} parent=1 // pred_check_branch
      %233 = sbr.rel (0) target = $region29
    $region28: #{decoder_layer.12} parent=1 // pred_region
      _
    $region29: #{decoder_layer.12} parent=1 // pred_fallthru
      _
    // Predicated region
    $region30: #{decoder_layer.12} parent=1 // pred_check
      _
    $region31: #{decoder_layer.12} parent=1 // pred_check_branch
      %235 = sbr.rel (0) target = $region33
    $region32: #{decoder_layer.12} parent=1 // pred_region
      _
    $region33: #{decoder_layer.12} parent=1 // pred_fallthru
      _
    %236 = vsyncpa [#allocation4], 1
    %237 = vsyncpa [#allocation6], 1

// kernel: decoder_layer.9
$region0: #{decoder_layer.9}
  #allocation0 [shape = 'u32[]', space=smem, size = 0x4, offset = 0x4, fixed_abs, tag = 'smem constant byte address 0x4 - core index']
  #allocation1 [shape = 'u32[144,128]{1,0:T(1,128)}', space=vmem, size = 0x12000, scoped, tag = 'internal scratch']
  %s0 = inlined_call_operand.vmem [shape: bf16[2,8,384], index: 0, kind: input, shape index: {}, may-alias: {0,1,2}]
  %s1 = inlined_call_operand.vmem [shape: bf16[2,8,384], index: 1, kind: input, shape index: {}, may-alias: {0,1,2}]
  %s2 = inlined_call_operand.vmem [shape: bf16[2,8,384], index: 2, kind: input, shape index: {}, may-alias: {0,1,2}]
  %s3 = inlined_call_operand.vmem [shape: bf16[2,8,128], index: 3, kind: output, shape index: {}]
  %s4 = sld [smem:[#allocation0]]
  $region45: #{decoder_layer.9} parent=0
    _
  %s6 = ssub.s32 1, %s4
  %s7 = scalar_select 0, %s6, %s4
  loop: start=0, step=1, limit=4
  $region2: #{decoder_layer.9} parent=0 // loop_pre_header
    _
  $region3: #{decoder_layer.9} parent=0 // loop_header
    %s9 = sphi 0, %s13
    %p10 = scmp.ge.s32.totalorder %s9, 4
    %s16 = sphi 0, %s28
    %s17 = sphi 0, %s24
    %s18 = sphi 0, %s16
    %s19 = sphi 0, %s17
    %s20 = sphi 0, %s18
    %s21 = sphi 0, %s19
    %s33 = sphi 0, %s35
    %s36 = sphi 0, %s33
    %s37 = sphi 0, %s36
    %s53 = sphi 0, %s37
    %s59 = sphi 0, %s61
    %s62 = sphi 0, %s59
    %s63 = sphi 0, %s62
    %s79 = sphi 0, %s63
    %s85 = sphi 0, %s87
    %s88 = sphi 0, %s85
    %s89 = sphi 0, %s88
    %s105 = sphi 0, %s89
    %s113 = sphi 0, %s115
    %s116 = sphi 0, %s113
    %s117 = sphi 0, %s116
    %s133 = sphi 0, %s117
  $region4: #{decoder_layer.9} parent=0 // loop_header_branch
    %12 = sbr.rel (%p10) target = $region8
  $region5: #{decoder_layer.9} parent=0 // loop_body
    %s14 = ssub.s32 %s9, 1
    %s15 = ssub.s32 %s9, 2
    %s22 = sadd.s32 1, %s17
    %p23 = scmp.ge.s32.totalorder %s22, 1
    %s24 = scalar_select %p23, 0, %s22
    %s25 = sadd.s32 1, %s16
    %s26 = scalar_select %p23, %s25, %s16
    %p27 = scmp.ge.s32.totalorder %s26, 2
    %s28 = scalar_select %p27, 0, %s26
    %s29 = ssub.s32 %s16, %s28
    %s30 = ssub.s32 %s17, %s24
    %s31 = sor.u32 %s29, %s30
    %p32 = scmp.eq.s32.totalorder %s31, 0
    %s34 = sadd.s32 %s33, 1
    %s35 = scalar_select %p32, %s33, %s34
    %p38 = pneg %p32
    %p39 = scmp.eq.s32.totalorder %s9, 1
    %p40 = por %p38, %p39
    %p41 = scmp.ne.s32.totalorder %s33, %s36
    %p42 = scmp.eq.s32.totalorder %s9, 0
    %p43 = por %p41, %p42
    %p44 = scmp.ne.s32.totalorder %s33, %s36
    %p45 = scmp.eq.s32.totalorder %s14, 1
    %p46 = por %p44, %p45
    %p47 = scmp.ne.s32.totalorder %s36, %s37
    %p48 = scmp.eq.s32.totalorder %s14, 0
    %p49 = por %p47, %p48
    %p50 = scmp.ne.s32.totalorder %s36, %s37
    %p51 = scmp.eq.s32.totalorder %s15, 1
    %p52 = por %p50, %p51
    %p54 = scmp.ne.s32.totalorder %s37, %s53
    %p55 = scmp.eq.s32.totalorder %s15, 0
    %p56 = por %p54, %p55
    %s57 = ssub.s32 %s16, %s28
    %p58 = scmp.eq.s32.totalorder %s57, 0
    %s60 = sadd.s32 %s59, 1
    %s61 = scalar_select %p58, %s59, %s60
    %p64 = pneg %p58
    %p65 = scmp.eq.s32.totalorder %s9, 1
    %p66 = por %p64, %p65
    %p67 = scmp.ne.s32.totalorder %s59, %s62
    %p68 = scmp.eq.s32.totalorder %s9, 0
    %p69 = por %p67, %p68
    %p70 = scmp.ne.s32.totalorder %s59, %s62
    %p71 = scmp.eq.s32.totalorder %s14, 1
    %p72 = por %p70, %p71
    %p73 = scmp.ne.s32.totalorder %s62, %s63
    %p74 = scmp.eq.s32.totalorder %s14, 0
    %p75 = por %p73, %p74
    %p76 = scmp.ne.s32.totalorder %s62, %s63
    %p77 = scmp.eq.s32.totalorder %s15, 1
    %p78 = por %p76, %p77
    %p80 = scmp.ne.s32.totalorder %s63, %s79
    %p81 = scmp.eq.s32.totalorder %s15, 0
    %p82 = por %p80, %p81
    %s83 = ssub.s32 %s16, %s28
    %p84 = scmp.eq.s32.totalorder %s83, 0
    %s86 = sadd.s32 %s85, 1
    %s87 = scalar_select %p84, %s85, %s86
    %p90 = pneg %p84
    %p91 = scmp.eq.s32.totalorder %s9, 1
    %p92 = por %p90, %p91
    %p93 = scmp.ne.s32.totalorder %s85, %s88
    %p94 = scmp.eq.s32.totalorder %s9, 0
    %p95 = por %p93, %p94
    %p96 = scmp.ne.s32.totalorder %s85, %s88
    %p97 = scmp.eq.s32.totalorder %s14, 1
    %p98 = por %p96, %p97
    %p99 = scmp.ne.s32.totalorder %s88, %s89
    %p100 = scmp.eq.s32.totalorder %s14, 0
    %p101 = por %p99, %p100
    %p102 = scmp.ne.s32.totalorder %s88, %s89
    %p103 = scmp.eq.s32.totalorder %s15, 1
    %p104 = por %p102, %p103
    %p106 = scmp.ne.s32.totalorder %s89, %s105
    %p107 = scmp.eq.s32.totalorder %s15, 0
    %p108 = por %p106, %p107
    %s109 = ssub.s32 %s16, %s28
    %s110 = ssub.s32 %s17, %s24
    %s111 = sor.u32 %s109, %s110
    %p112 = scmp.eq.s32.totalorder %s111, 0
    %s114 = sadd.s32 %s113, 1
    %s115 = scalar_select %p112, %s113, %s114
    %p118 = pneg %p112
    %p119 = scmp.eq.s32.totalorder %s9, 1
    %p120 = por %p118, %p119
    %p121 = scmp.ne.s32.totalorder %s113, %s116
    %p122 = scmp.eq.s32.totalorder %s9, 0
    %p123 = por %p121, %p122
    %p124 = scmp.ne.s32.totalorder %s113, %s116
    %p125 = scmp.eq.s32.totalorder %s14, 1
    %p126 = por %p124, %p125
    %p127 = scmp.ne.s32.totalorder %s116, %s117
    %p128 = scmp.eq.s32.totalorder %s14, 0
    %p129 = por %p127, %p128
    %p130 = scmp.ne.s32.totalorder %s116, %s117
    %p131 = scmp.eq.s32.totalorder %s15, 1
    %p132 = por %p130, %p131
    %p134 = scmp.ne.s32.totalorder %s117, %s133
    %p135 = scmp.eq.s32.totalorder %s15, 0
    %p136 = por %p134, %p135
    %p137 = scmp.le.s32.totalorder 1, %s9
    %p138 = scmp.lt.s32.totalorder %s9, 3
    %p139 = pnand %p137, %p138
    %p140 = pneg %p139
    // Predicated region
    $region9: #{decoder_layer.9} parent=5 // pred_check
      _
    $region10: #{decoder_layer.9} parent=5 // pred_check_branch
      %142 = sbr.rel (%p139) target = $region12
    $region11: #{decoder_layer.9} parent=5 // pred_region
      %s143 = ssub.s32 %s9, 1
    $region12: #{decoder_layer.9} parent=5 // pred_fallthru
      _
    %p144 = scmp.lt.s32.totalorder %s9, 2
    // Predicated region
    $region13: #{decoder_layer.9} parent=5 // pred_check
      %p145 = pneg %p144
    $region14: #{decoder_layer.9} parent=5 // pred_check_branch
      %147 = sbr.rel (%p145) target = $region16
    $region15: #{decoder_layer.9} parent=5 // pred_region
      // Predicated region
      $region17: #{decoder_layer.9} parent=15 // pred_check
        %p148 = pneg %p43
      $region18: #{decoder_layer.9} parent=15 // pred_check_branch
        %150 = sbr.rel (%p148) target = $region20
      $region19: #{decoder_layer.9} parent=15 // pred_region
        %p151 = scmp.lt.s32.totalorder %s16, 1
        %s152 = scalar_select %p151, %s16, 1
        %p153 = scmp.lt.s32.totalorder %s17, 0
        %s154 = scalar_select %p153, %s17, 0
        %s155 = smul.addr %s154, 3
        %s156 = smul.addr %s152, 3
        %s157 = sadd.s32 %s155, %s156
        %s158 = smul.addr %s157, 4
        %s159 = scalar_lea.vmem %s0, %s158
      $region20: #{decoder_layer.9} parent=15 // pred_fallthru
        _
      // Predicated region
      $region21: #{decoder_layer.9} parent=15 // pred_check
        %p160 = pneg %p69
      $region22: #{decoder_layer.9} parent=15 // pred_check_branch
        %162 = sbr.rel (%p160) target = $region24
      $region23: #{decoder_layer.9} parent=15 // pred_region
        %p163 = scmp.lt.s32.totalorder %s16, 1
        %s164 = scalar_select %p163, %s16, 1
        %s165 = smul.addr %s164, 3
        %s166 = sadd.s32 1, %s165
        %s167 = smul.addr %s166, 4
        %s168 = scalar_lea.vmem %s1, %s167
      $region24: #{decoder_layer.9} parent=15 // pred_fallthru
        _
      // Predicated region
      $region25: #{decoder_layer.9} parent=15 // pred_check
        %p169 = pneg %p95
      $region26: #{decoder_layer.9} parent=15 // pred_check_branch
        %171 = sbr.rel (%p169) target = $region28
      $region27: #{decoder_layer.9} parent=15 // pred_region
        %p172 = scmp.lt.s32.totalorder %s16, 1
        %s173 = scalar_select %p172, %s16, 1
        %s174 = smul.addr %s173, 3
        %s175 = sadd.s32 2, %s174
        %s176 = smul.addr %s175, 4
        %s177 = scalar_lea.vmem %s2, %s176
      $region28: #{decoder_layer.9} parent=15 // pred_fallthru
        _
    $region16: #{decoder_layer.9} parent=5 // pred_fallthru
      _
    %p178 = scmp.le.s32.totalorder 1, %s9
    %p179 = scmp.lt.s32.totalorder %s9, 3
    %p180 = pnand %p178, %p179
    %p181 = pneg %p180
    // Predicated region
    $region29: #{decoder_layer.9} parent=5 // pred_check
      _
    $region30: #{decoder_layer.9} parent=5 // pred_check_branch
      %183 = sbr.rel (%p180) target = $region32
    $region31: #{decoder_layer.9} parent=5 // pred_region
      %s184 = ssub.s32 %s9, 1
      %p185 = scmp.lt.s32.totalorder %s18, 1
      %s186 = scalar_select %p185, %s18, 1
      %p187 = scmp.lt.s32.totalorder %s19, 0
      %s188 = scalar_select %p187, %s19, 0
      %s189 = smul.addr %s188, 3
      %s190 = smul.addr %s186, 3
      %s191 = sadd.s32 %s189, %s190
      %s192 = smul.addr %s191, 4
      %s193 = scalar_lea.vmem %s0, %s192
      %p194 = pneg %p49
      %p195 = pneg %p46
      %p196 = scmp.lt.s32.totalorder %s18, 1
      %s197 = scalar_select %p196, %s18, 1
      %s198 = smul.addr %s197, 3
      %s199 = sadd.s32 1, %s198
      %s200 = smul.addr %s199, 4
      %s201 = scalar_lea.vmem %s1, %s200
      %p202 = pneg %p75
      %p203 = pneg %p72
      %p204 = scmp.lt.s32.totalorder %s18, 1
      %s205 = scalar_select %p204, %s18, 1
      %s206 = smul.addr %s205, 3
      %s207 = sadd.s32 2, %s206
      %s208 = smul.addr %s207, 4
      %s209 = scalar_lea.vmem %s2, %s208
      %p210 = pneg %p101
      %p211 = pneg %p98
      %p212 = pneg %p129
      %p213 = pneg %p126
      %p214 = scmp.lt.s32.totalorder %s18, 1
      %s215 = scalar_select %p214, %s18, 1
      %p216 = scmp.lt.s32.totalorder %s19, 0
      %s217 = scalar_select %p216, %s19, 0
      %s218 = sadd.s32 %s217, %s215
      %s219 = smul.addr %s218, 4
      %s220 = scalar_lea.vmem %s3, %s219
      %p221 = scmp.lt.s32.totalorder %s18, 1
      %s222 = scalar_select %p221, %s18, 1
      %p223 = scmp.lt.s32.totalorder %s19, 0
      %s224 = scalar_select %p223, %s19, 0
      %s225 = smul.addr %s224, 3
      %s226 = smul.addr %s222, 3
      %s227 = sadd.s32 %s225, %s226
      %s228 = smul.addr %s227, 4
      %s229 = scalar_lea.vmem %s0, %s228
      %p230 = scmp.lt.s32.totalorder %s18, 1
      %s231 = scalar_select %p230, %s18, 1
      %s232 = smul.addr %s231, 3
      %s233 = sadd.s32 1, %s232
      %s234 = smul.addr %s233, 4
      %s235 = scalar_lea.vmem %s1, %s234
      %p236 = scmp.lt.s32.totalorder %s18, 1
      %s237 = scalar_select %p236, %s18, 1
      %s238 = smul.addr %s237, 3
      %s239 = sadd.s32 2, %s238
      %s240 = smul.addr %s239, 4
      %s241 = scalar_lea.vmem %s2, %s240
      %p242 = scmp.lt.s32.totalorder %s18, 1
      %s243 = scalar_select %p242, %s18, 1
      %p244 = scmp.lt.s32.totalorder %s19, 0
      %s245 = scalar_select %p244, %s19, 0
      %s246 = sadd.s32 %s245, %s243
      %s247 = smul.addr %s246, 4
      %s248 = scalar_lea.vmem %s3, %s247
      %v250 = vld [vmem:[%s229] sm:$0xf]
      %v251 = vld [vmem:[%s235] sm:$0xf]
      %v252 = vld [vmem:[%s241] sm:$0xf]
      %v253 = vlaneseq
      %v254 = vshrl.u32 %v253, 7
      %s255 = smul.u32 %s19, 8
      %v256 = vstv %s255
      %v257 = vadd.s32 %v254, %v256
      %v258 = vlaneseq
      %v259 = vand.u32 %v258, 127
      %vm260 = vcmp.le.s32.totalorder %v259, %v257
      %v261 = vsel %vm260, 0.0, -1e+09
      %vm262 = vcmask 261120
      %v264 = vsel %vm262, %v250, 0
      %v267 = vsel %vm262, %v251, 0
      %269 = vmatprep.subr.bf16.mxu0 0
      %270 = vmatpush1.bf16.xpose.msra.mxu0 0
      %271 = vmatprep.subr.bf16.mxu0 0
      %272 = vmatpush1.bf16.xpose.msra.mxu0 0
      %273 = vmatprep.subr.bf16.mxu0 0
      %274 = vmatpush1.bf16.xpose.msra.mxu0 0
      %275 = vmatprep.subr.bf16.mxu0 0
      %276 = vmatpush1.bf16.xpose.msra.mxu0 0
      %277 = vmatprep.subr.bf16.mxu0 0
      %278 = vmatpush1.bf16.xpose.msra.mxu0 0
      %279 = vmatprep.subr.bf16.mxu0 0
      %280 = vmatpush1.bf16.xpose.msra.mxu0 0
      %281 = vmatprep.subr.bf16.mxu0 0
      %282 = vmatpush1.bf16.xpose.msra.mxu0 0
      %283 = vmatprep.subr.bf16.mxu0 0
      %284 = vmatpush1.bf16.xpose.msra.mxu0 %v267
      %285 = vmatprep.subr.bf16.mxu0 0
      %286 = vmatpush2.bf16.xpose.msra.mxu0 0
      %287 = vmatprep.subr.bf16.mxu0 0
      %288 = vmatpush2.bf16.xpose.msra.mxu0 0
      %289 = vmatprep.subr.bf16.mxu0 0
      %290 = vmatpush2.bf16.xpose.msra.mxu0 0
      %291 = vmatprep.subr.bf16.mxu0 0
      %292 = vmatpush2.bf16.xpose.msra.mxu0 0
      %293 = vmatprep.subr.bf16.mxu0 0
      %294 = vmatpush2.bf16.xpose.msra.mxu0 0
      %295 = vmatprep.subr.bf16.mxu0 0
      %296 = vmatpush2.bf16.xpose.msra.mxu0 0
      %297 = vmatprep.subr.bf16.mxu0 0
      %298 = vmatpush2.bf16.xpose.msra.mxu0 0
      %299 = vmatprep.subr.bf16.mxu0 0
      %300 = vmatpush2.bf16.xpose.msra.mxu0 0
      %301 = vmatprep.mubr.bf16.mxu0 0
      %302 = vmatmul.mubr.bf16.gmra.mxu0 %v264
      %v303 = vpop.f32.mrf.mxu0
      %v304 = vadd.f32 0.0, %v303
      %v305 = vpop.f32.mrf.mxu0
      %v306 = vpop.f32.mrf.mxu0
      %v307 = vpop.f32.mrf.mxu0
      %308 = vdwg.mxu0
      %v309 = vmul.f32 %v304, 0.17677669
      %v310 = vadd.f32 %v309, %v261
      %vm311 = vcmask 64512
      %v312 = vsel %vm311, %v310, -inf
      %313 = vmax.xlane.f32.xlu0 %v312
      %v314 = vpop.xlane.xlu0 %313
      %v315 = vsub.f32 %v310, %v314
      %v316 = vmul.f32 %v315, 1.442695
      %v317 = vpow.pop %v316
      %v318 = vsel %vm311, %v317, 0.0
      %319 = vadd.xlane.f32.xlu0 %v318
      %v320 = vpop.xlane.xlu0 %319
      %v321 = vrcp.pop %v320
      %v322 = vmul.f32 %v317, %v321
      %v323 = vpack.c.bf16 %v322, %v322
      %v325 = vsel %vm311, %v323, 0
      %vm327 = vcmask 1043456
      %v329 = vsel %vm327, %v252, 0
      %331 = vmatprep.subr.bf16.mxu0 0
      %332 = vmatpush1.bf16.msra.mxu0 0
      %333 = vmatprep.subr.bf16.mxu0 0
      %334 = vmatpush1.bf16.msra.mxu0 0
      %335 = vmatprep.subr.bf16.mxu0 0
      %336 = vmatpush1.bf16.msra.mxu0 0
      %337 = vmatprep.subr.bf16.mxu0 0
      %338 = vmatpush1.bf16.msra.mxu0 0
      %339 = vmatprep.subr.bf16.mxu0 0
      %340 = vmatpush1.bf16.msra.mxu0 0
      %341 = vmatprep.subr.bf16.mxu0 0
      %342 = vmatpush1.bf16.msra.mxu0 0
      %343 = vmatprep.subr.bf16.mxu0 0
      %344 = vmatpush1.bf16.msra.mxu0 0
      %345 = vmatprep.subr.bf16.mxu0 0
      %346 = vmatpush1.bf16.msra.mxu0 %v329
      %347 = vmatprep.subr.bf16.mxu0 0
      %348 = vmatpush2.bf16.msra.mxu0 0
      %349 = vmatprep.subr.bf16.mxu0 0
      %350 = vmatpush2.bf16.msra.mxu0 0
      %351 = vmatprep.subr.bf16.mxu0 0
      %352 = vmatpush2.bf16.msra.mxu0 0
      %353 = vmatprep.subr.bf16.mxu0 0
      %354 = vmatpush2.bf16.msra.mxu0 0
      %355 = vmatprep.subr.bf16.mxu0 0
      %356 = vmatpush2.bf16.msra.mxu0 0
      %357 = vmatprep.subr.bf16.mxu0 0
      %358 = vmatpush2.bf16.msra.mxu0 0
      %359 = vmatprep.subr.bf16.mxu0 0
      %360 = vmatpush2.bf16.msra.mxu0 0
      %361 = vmatprep.subr.bf16.mxu0 0
      %362 = vmatpush2.bf16.msra.mxu0 0
      %363 = vmatprep.mubr.bf16.mxu0 0
      %364 = vmatmul.mubr.bf16.gmra.mxu0 %v325
      %v365 = vpop.f32.mrf.mxu0
      %v366 = vadd.f32 0.0, %v365
      %v367 = vpop.f32.mrf.mxu0
      %v368 = vpop.f32.mrf.mxu0
      %v369 = vpop.f32.mrf.mxu0
      %370 = vdwg.mxu0
      %v371 = vpack.c.bf16 %v366, %v366
      %vm372 = vcmask 257024
      %373 = vst.msk [vmem:[%s248] sm:$0xf] %vm372, %v371
      %v375 = vunpack.c.l.b16 %v250
      %v376 = vpack.c.b16 %v375, %v375
      %377 = vrot.lane.b32.xlu0 %v376, 96
      %v378 = vpop.permute.xlu0 %377
      %v380 = vunpack.c.l.b16 %v251
      %v381 = vpack.c.b16 %v380, %v380
      %382 = vrot.lane.b32.xlu0 %v381, 96
      %v383 = vpop.permute.xlu0 %382
      %v385 = vsel %vm262, %v378, 0
      %v388 = vsel %vm262, %v383, 0
      %390 = vmatprep.subr.bf16.mxu0 0
      %391 = vmatpush1.bf16.xpose.msra.mxu0 0
      %392 = vmatprep.subr.bf16.mxu0 0
      %393 = vmatpush1.bf16.xpose.msra.mxu0 0
      %394 = vmatprep.subr.bf16.mxu0 0
      %395 = vmatpush1.bf16.xpose.msra.mxu0 0
      %396 = vmatprep.subr.bf16.mxu0 0
      %397 = vmatpush1.bf16.xpose.msra.mxu0 0
      %398 = vmatprep.subr.bf16.mxu0 0
      %399 = vmatpush1.bf16.xpose.msra.mxu0 0
      %400 = vmatprep.subr.bf16.mxu0 0
      %401 = vmatpush1.bf16.xpose.msra.mxu0 0
      %402 = vmatprep.subr.bf16.mxu0 0
      %403 = vmatpush1.bf16.xpose.msra.mxu0 0
      %404 = vmatprep.subr.bf16.mxu0 0
      %405 = vmatpush1.bf16.xpose.msra.mxu0 %v388
      %406 = vmatprep.subr.bf16.mxu0 0
      %407 = vmatpush2.bf16.xpose.msra.mxu0 0
      %408 = vmatprep.subr.bf16.mxu0 0
      %409 = vmatpush2.bf16.xpose.msra.mxu0 0
      %410 = vmatprep.subr.bf16.mxu0 0
      %411 = vmatpush2.bf16.xpose.msra.mxu0 0
      %412 = vmatprep.subr.bf16.mxu0 0
      %413 = vmatpush2.bf16.xpose.msra.mxu0 0
      %414 = vmatprep.subr.bf16.mxu0 0
      %415 = vmatpush2.bf16.xpose.msra.mxu0 0
      %416 = vmatprep.subr.bf16.mxu0 0
      %417 = vmatpush2.bf16.xpose.msra.mxu0 0
      %418 = vmatprep.subr.bf16.mxu0 0
      %419 = vmatpush2.bf16.xpose.msra.mxu0 0
      %420 = vmatprep.subr.bf16.mxu0 0
      %421 = vmatpush2.bf16.xpose.msra.mxu0 0
      %422 = vmatprep.mubr.bf16.mxu0 0
      %423 = vmatmul.mubr.bf16.gmra.mxu0 %v385
      %v424 = vpop.f32.mrf.mxu0
      %v425 = vadd.f32 0.0, %v424
      %v426 = vpop.f32.mrf.mxu0
      %v427 = vpop.f32.mrf.mxu0
      %v428 = vpop.f32.mrf.mxu0
      %429 = vdwg.mxu0
      %v430 = vmul.f32 %v425, 0.17677669
      %v431 = vadd.f32 %v430, %v261
      %v432 = vsel %vm311, %v431, -inf
      %433 = vmax.xlane.f32.xlu0 %v432
      %v434 = vpop.xlane.xlu0 %433
      %v435 = vsub.f32 %v431, %v434
      %v436 = vmul.f32 %v435, 1.442695
      %v437 = vpow.pop %v436
      %v438 = vsel %vm311, %v437, 0.0
      %439 = vadd.xlane.f32.xlu0 %v438
      %v440 = vpop.xlane.xlu0 %439
      %v441 = vrcp.pop %v440
      %v442 = vmul.f32 %v437, %v441
      %v443 = vpack.c.bf16 %v442, %v442
      %v445 = vunpack.c.l.b16 %v252
      %v446 = vpack.c.b16 %v445, %v445
      %447 = vrot.lane.b32.xlu0 %v446, 96
      %v448 = vpop.permute.xlu0 %447
      %v450 = vsel %vm311, %v443, 0
      %v453 = vsel %vm327, %v448, 0
      %455 = vmatprep.subr.bf16.mxu0 0
      %456 = vmatpush1.bf16.msra.mxu0 0
      %457 = vmatprep.subr.bf16.mxu0 0
      %458 = vmatpush1.bf16.msra.mxu0 0
      %459 = vmatprep.subr.bf16.mxu0 0
      %460 = vmatpush1.bf16.msra.mxu0 0
      %461 = vmatprep.subr.bf16.mxu0 0
      %462 = vmatpush1.bf16.msra.mxu0 0
      %463 = vmatprep.subr.bf16.mxu0 0
      %464 = vmatpush1.bf16.msra.mxu0 0
      %465 = vmatprep.subr.bf16.mxu0 0
      %466 = vmatpush1.bf16.msra.mxu0 0
      %467 = vmatprep.subr.bf16.mxu0 0
      %468 = vmatpush1.bf16.msra.mxu0 0
      %469 = vmatprep.subr.bf16.mxu0 0
      %470 = vmatpush1.bf16.msra.mxu0 %v453
      %471 = vmatprep.subr.bf16.mxu0 0
      %472 = vmatpush2.bf16.msra.mxu0 0
      %473 = vmatprep.subr.bf16.mxu0 0
      %474 = vmatpush2.bf16.msra.mxu0 0
      %475 = vmatprep.subr.bf16.mxu0 0
      %476 = vmatpush2.bf16.msra.mxu0 0
      %477 = vmatprep.subr.bf16.mxu0 0
      %478 = vmatpush2.bf16.msra.mxu0 0
      %479 = vmatprep.subr.bf16.mxu0 0
      %480 = vmatpush2.bf16.msra.mxu0 0
      %481 = vmatprep.subr.bf16.mxu0 0
      %482 = vmatpush2.bf16.msra.mxu0 0
      %483 = vmatprep.subr.bf16.mxu0 0
      %484 = vmatpush2.bf16.msra.mxu0 0
      %485 = vmatprep.subr.bf16.mxu0 0
      %486 = vmatpush2.bf16.msra.mxu0 0
      %487 = vmatprep.mubr.bf16.mxu0 0
      %488 = vmatmul.mubr.bf16.gmra.mxu0 %v450
      %v489 = vpop.f32.mrf.mxu0
      %v490 = vadd.f32 0.0, %v489
      %v491 = vpop.f32.mrf.mxu0
      %v492 = vpop.f32.mrf.mxu0
      %v493 = vpop.f32.mrf.mxu0
      %494 = vdwg.mxu0
      %v495 = vpack.c.bf16 %v490, %v490
      %v497 = vunpack.c.l.b16 %v495
      %v498 = vpack.c.b16 %v497, %v497
      %499 = vrot.lane.b32.xlu0 %v498, 32
      %v500 = vpop.permute.xlu0 %499
      %vm502 = vcmask 519424
      %503 = vst.msk [vmem:[%s248] sm:$0xf] %vm502, %v500
      %504 = vrot.lane.b32.xlu0 %v376, 64
      %v505 = vpop.permute.xlu0 %504
      %506 = vrot.lane.b32.xlu0 %v381, 64
      %v507 = vpop.permute.xlu0 %506
      %v509 = vsel %vm262, %v505, 0
      %v512 = vsel %vm262, %v507, 0
      %514 = vmatprep.subr.bf16.mxu0 0
      %515 = vmatpush1.bf16.xpose.msra.mxu0 0
      %516 = vmatprep.subr.bf16.mxu0 0
      %517 = vmatpush1.bf16.xpose.msra.mxu0 0
      %518 = vmatprep.subr.bf16.mxu0 0
      %519 = vmatpush1.bf16.xpose.msra.mxu0 0
      %520 = vmatprep.subr.bf16.mxu0 0
      %521 = vmatpush1.bf16.xpose.msra.mxu0 0
      %522 = vmatprep.subr.bf16.mxu0 0
      %523 = vmatpush1.bf16.xpose.msra.mxu0 0
      %524 = vmatprep.subr.bf16.mxu0 0
      %525 = vmatpush1.bf16.xpose.msra.mxu0 0
      %526 = vmatprep.subr.bf16.mxu0 0
      %527 = vmatpush1.bf16.xpose.msra.mxu0 0
      %528 = vmatprep.subr.bf16.mxu0 0
      %529 = vmatpush1.bf16.xpose.msra.mxu0 %v512
      %530 = vmatprep.subr.bf16.mxu0 0
      %531 = vmatpush2.bf16.xpose.msra.mxu0 0
      %532 = vmatprep.subr.bf16.mxu0 0
      %533 = vmatpush2.bf16.xpose.msra.mxu0 0
      %534 = vmatprep.subr.bf16.mxu0 0
      %535 = vmatpush2.bf16.xpose.msra.mxu0 0
      %536 = vmatprep.subr.bf16.mxu0 0
      %537 = vmatpush2.bf16.xpose.msra.mxu0 0
      %538 = vmatprep.subr.bf16.mxu0 0
      %539 = vmatpush2.bf16.xpose.msra.mxu0 0
      %540 = vmatprep.subr.bf16.mxu0 0
      %541 = vmatpush2.bf16.xpose.msra.mxu0 0
      %542 = vmatprep.subr.bf16.mxu0 0
      %543 = vmatpush2.bf16.xpose.msra.mxu0 0
      %544 = vmatprep.subr.bf16.mxu0 0
      %545 = vmatpush2.bf16.xpose.msra.mxu0 0
      %546 = vmatprep.mubr.bf16.mxu0 0
      %547 = vmatmul.mubr.bf16.gmra.mxu0 %v509
      %v548 = vpop.f32.mrf.mxu0
      %v549 = vadd.f32 0.0, %v548
      %v550 = vpop.f32.mrf.mxu0
      %v551 = vpop.f32.mrf.mxu0
      %v552 = vpop.f32.mrf.mxu0
      %553 = vdwg.mxu0
      %v554 = vmul.f32 %v549, 0.17677669
      %v555 = vadd.f32 %v554, %v261
      %v556 = vsel %vm311, %v555, -inf
      %557 = vmax.xlane.f32.xlu0 %v556
      %v558 = vpop.xlane.xlu0 %557
      %v559 = vsub.f32 %v555, %v558
      %v560 = vmul.f32 %v559, 1.442695
      %v561 = vpow.pop %v560
      %v562 = vsel %vm311, %v561, 0.0
      %563 = vadd.xlane.f32.xlu0 %v562
      %v564 = vpop.xlane.xlu0 %563
      %v565 = vrcp.pop %v564
      %v566 = vmul.f32 %v561, %v565
      %v567 = vpack.c.bf16 %v566, %v566
      %568 = vrot.lane.b32.xlu0 %v446, 64
      %v569 = vpop.permute.xlu0 %568
      %v571 = vsel %vm311, %v567, 0
      %v574 = vsel %vm327, %v569, 0
      %576 = vmatprep.subr.bf16.mxu0 0
      %577 = vmatpush1.bf16.msra.mxu0 0
      %578 = vmatprep.subr.bf16.mxu0 0
      %579 = vmatpush1.bf16.msra.mxu0 0
      %580 = vmatprep.subr.bf16.mxu0 0
      %581 = vmatpush1.bf16.msra.mxu0 0
      %582 = vmatprep.subr.bf16.mxu0 0
      %583 = vmatpush1.bf16.msra.mxu0 0
      %584 = vmatprep.subr.bf16.mxu0 0
      %585 = vmatpush1.bf16.msra.mxu0 0
      %586 = vmatprep.subr.bf16.mxu0 0
      %587 = vmatpush1.bf16.msra.mxu0 0
      %588 = vmatprep.subr.bf16.mxu0 0
      %589 = vmatpush1.bf16.msra.mxu0 0
      %590 = vmatprep.subr.bf16.mxu0 0
      %591 = vmatpush1.bf16.msra.mxu0 %v574
      %592 = vmatprep.subr.bf16.mxu0 0
      %593 = vmatpush2.bf16.msra.mxu0 0
      %594 = vmatprep.subr.bf16.mxu0 0
      %595 = vmatpush2.bf16.msra.mxu0 0
      %596 = vmatprep.subr.bf16.mxu0 0
      %597 = vmatpush2.bf16.msra.mxu0 0
      %598 = vmatprep.subr.bf16.mxu0 0
      %599 = vmatpush2.bf16.msra.mxu0 0
      %600 = vmatprep.subr.bf16.mxu0 0
      %601 = vmatpush2.bf16.msra.mxu0 0
      %602 = vmatprep.subr.bf16.mxu0 0
      %603 = vmatpush2.bf16.msra.mxu0 0
      %604 = vmatprep.subr.bf16.mxu0 0
      %605 = vmatpush2.bf16.msra.mxu0 0
      %606 = vmatprep.subr.bf16.mxu0 0
      %607 = vmatpush2.bf16.msra.mxu0 0
      %608 = vmatprep.mubr.bf16.mxu0 0
      %609 = vmatmul.mubr.bf16.gmra.mxu0 %v571
      %v610 = vpop.f32.mrf.mxu0
      %v611 = vadd.f32 0.0, %v610
      %v612 = vpop.f32.mrf.mxu0
      %v613 = vpop.f32.mrf.mxu0
      %v614 = vpop.f32.mrf.mxu0
      %615 = vdwg.mxu0
      %v616 = vpack.c.bf16 %v611, %v611
      %v618 = vunpack.c.l.b16 %v616
      %v619 = vpack.c.b16 %v618, %v618
      %620 = vrot.lane.b32.xlu0 %v619, 64
      %v621 = vpop.permute.xlu0 %620
      %vm623 = vcmask 781824
      %624 = vst.msk [vmem:[%s248] sm:$0xf] %vm623, %v621
      %625 = vrot.lane.b32.xlu0 %v376, 32
      %v626 = vpop.permute.xlu0 %625
      %627 = vrot.lane.b32.xlu0 %v381, 32
      %v628 = vpop.permute.xlu0 %627
      %v630 = vsel %vm262, %v626, 0
      %v633 = vsel %vm262, %v628, 0
      %635 = vmatprep.subr.bf16.mxu0 0
      %636 = vmatpush1.bf16.xpose.msra.mxu0 0
      %637 = vmatprep.subr.bf16.mxu0 0
      %638 = vmatpush1.bf16.xpose.msra.mxu0 0
      %639 = vmatprep.subr.bf16.mxu0 0
      %640 = vmatpush1.bf16.xpose.msra.mxu0 0
      %641 = vmatprep.subr.bf16.mxu0 0
      %642 = vmatpush1.bf16.xpose.msra.mxu0 0
      %643 = vmatprep.subr.bf16.mxu0 0
      %644 = vmatpush1.bf16.xpose.msra.mxu0 0
      %645 = vmatprep.subr.bf16.mxu0 0
      %646 = vmatpush1.bf16.xpose.msra.mxu0 0
      %647 = vmatprep.subr.bf16.mxu0 0
      %648 = vmatpush1.bf16.xpose.msra.mxu0 0
      %649 = vmatprep.subr.bf16.mxu0 0
      %650 = vmatpush1.bf16.xpose.msra.mxu0 %v633
      %651 = vmatprep.subr.bf16.mxu0 0
      %652 = vmatpush2.bf16.xpose.msra.mxu0 0
      %653 = vmatprep.subr.bf16.mxu0 0
      %654 = vmatpush2.bf16.xpose.msra.mxu0 0
      %655 = vmatprep.subr.bf16.mxu0 0
      %656 = vmatpush2.bf16.xpose.msra.mxu0 0
      %657 = vmatprep.subr.bf16.mxu0 0
      %658 = vmatpush2.bf16.xpose.msra.mxu0 0
      %659 = vmatprep.subr.bf16.mxu0 0
      %660 = vmatpush2.bf16.xpose.msra.mxu0 0
      %661 = vmatprep.subr.bf16.mxu0 0
      %662 = vmatpush2.bf16.xpose.msra.mxu0 0
      %663 = vmatprep.subr.bf16.mxu0 0
      %664 = vmatpush2.bf16.xpose.msra.mxu0 0
      %665 = vmatprep.subr.bf16.mxu0 0
      %666 = vmatpush2.bf16.xpose.msra.mxu0 0
      %667 = vmatprep.mubr.bf16.mxu0 0
      %668 = vmatmul.mubr.bf16.gmra.mxu0 %v630
      %v669 = vpop.f32.mrf.mxu0
      %v670 = vadd.f32 0.0, %v669
      %v671 = vpop.f32.mrf.mxu0
      %v672 = vpop.f32.mrf.mxu0
      %v673 = vpop.f32.mrf.mxu0
      %674 = vdwg.mxu0
      %v675 = vmul.f32 %v670, 0.17677669
      %v676 = vadd.f32 %v675, %v261
      %v677 = vsel %vm311, %v676, -inf
      %678 = vmax.xlane.f32.xlu0 %v677
      %v679 = vpop.xlane.xlu0 %678
      %v680 = vsub.f32 %v676, %v679
      %v681 = vmul.f32 %v680, 1.442695
      %v682 = vpow.pop %v681
      %v683 = vsel %vm311, %v682, 0.0
      %684 = vadd.xlane.f32.xlu0 %v683
      %v685 = vpop.xlane.xlu0 %684
      %v686 = vrcp.pop %v685
      %v687 = vmul.f32 %v682, %v686
      %v688 = vpack.c.bf16 %v687, %v687
      %689 = vrot.lane.b32.xlu0 %v446, 32
      %v690 = vpop.permute.xlu0 %689
      %v692 = vsel %vm311, %v688, 0
      %v695 = vsel %vm327, %v690, 0
      %697 = vmatprep.subr.bf16.mxu0 0
      %698 = vmatpush1.bf16.msra.mxu0 0
      %699 = vmatprep.subr.bf16.mxu0 0
      %700 = vmatpush1.bf16.msra.mxu0 0
      %701 = vmatprep.subr.bf16.mxu0 0
      %702 = vmatpush1.bf16.msra.mxu0 0
      %703 = vmatprep.subr.bf16.mxu0 0
      %704 = vmatpush1.bf16.msra.mxu0 0
      %705 = vmatprep.subr.bf16.mxu0 0
      %706 = vmatpush1.bf16.msra.mxu0 0
      %707 = vmatprep.subr.bf16.mxu0 0
      %708 = vmatpush1.bf16.msra.mxu0 0
      %709 = vmatprep.subr.bf16.mxu0 0
      %710 = vmatpush1.bf16.msra.mxu0 0
      %711 = vmatprep.subr.bf16.mxu0 0
      %712 = vmatpush1.bf16.msra.mxu0 %v695
      %713 = vmatprep.subr.bf16.mxu0 0
      %714 = vmatpush2.bf16.msra.mxu0 0
      %715 = vmatprep.subr.bf16.mxu0 0
      %716 = vmatpush2.bf16.msra.mxu0 0
      %717 = vmatprep.subr.bf16.mxu0 0
      %718 = vmatpush2.bf16.msra.mxu0 0
      %719 = vmatprep.subr.bf16.mxu0 0
      %720 = vmatpush2.bf16.msra.mxu0 0
      %721 = vmatprep.subr.bf16.mxu0 0
      %722 = vmatpush2.bf16.msra.mxu0 0
      %723 = vmatprep.subr.bf16.mxu0 0
      %724 = vmatpush2.bf16.msra.mxu0 0
      %725 = vmatprep.subr.bf16.mxu0 0
      %726 = vmatpush2.bf16.msra.mxu0 0
      %727 = vmatprep.subr.bf16.mxu0 0
      %728 = vmatpush2.bf16.msra.mxu0 0
      %729 = vmatprep.mubr.bf16.mxu0 0
      %730 = vmatmul.mubr.bf16.gmra.mxu0 %v692
      %v731 = vpop.f32.mrf.mxu0
      %v732 = vadd.f32 0.0, %v731
      %v733 = vpop.f32.mrf.mxu0
      %v734 = vpop.f32.mrf.mxu0
      %v735 = vpop.f32.mrf.mxu0
      %736 = vdwg.mxu0
      %v737 = vpack.c.bf16 %v732, %v732
      %v739 = vunpack.c.l.b16 %v737
      %v740 = vpack.c.b16 %v739, %v739
      %741 = vrot.lane.b32.xlu0 %v740, 96
      %v742 = vpop.permute.xlu0 %741
      %vm744 = vcmask 1044224
      %745 = vst.msk [vmem:[%s248] sm:$0xf] %vm744, %v742
      %p746 = scmp.lt.s32.totalorder %s18, 1
      %s747 = scalar_select %p746, %s18, 1
      %p748 = scmp.lt.s32.totalorder %s19, 0
      %s749 = scalar_select %p748, %s19, 0
      %s750 = sadd.s32 %s749, %s747
      %s751 = smul.addr %s750, 4
      %s752 = scalar_lea.vmem %s3, %s751
      // Predicated region
      $region33: #{decoder_layer.9} parent=31 // pred_check
        %p753 = pneg %p126
      $region34: #{decoder_layer.9} parent=31 // pred_check_branch
        %755 = sbr.rel (%p753) target = $region36
      $region35: #{decoder_layer.9} parent=31 // pred_region
        _
      $region36: #{decoder_layer.9} parent=31 // pred_fallthru
        _
    $region32: #{decoder_layer.9} parent=5 // pred_fallthru
      _
    %p756 = scmp.le.s32.totalorder 2, %s9
    // Predicated region
    $region37: #{decoder_layer.9} parent=5 // pred_check
      %p757 = pneg %p756
    $region38: #{decoder_layer.9} parent=5 // pred_check_branch
      %759 = sbr.rel (%p757) target = $region40
    $region39: #{decoder_layer.9} parent=5 // pred_region
      %s760 = ssub.s32 %s9, 2
      // Predicated region
      $region41: #{decoder_layer.9} parent=39 // pred_check
        %p761 = pneg %p132
      $region42: #{decoder_layer.9} parent=39 // pred_check_branch
        %763 = sbr.rel (%p761) target = $region44
      $region43: #{decoder_layer.9} parent=39 // pred_region
        %p764 = scmp.lt.s32.totalorder %s20, 1
        %s765 = scalar_select %p764, %s20, 1
        %p766 = scmp.lt.s32.totalorder %s21, 0
        %s767 = scalar_select %p766, %s21, 0
        %s768 = sadd.s32 %s767, %s765
        %s769 = smul.addr %s768, 4
        %s770 = scalar_lea.vmem %s3, %s769
      $region44: #{decoder_layer.9} parent=39 // pred_fallthru
        _
    $region40: #{decoder_layer.9} parent=5 // pred_fallthru
      _
  $region6: #{decoder_layer.9} parent=0 // loop_footer
    %s13 = sadd.s32 1, %s9
  $region7: #{decoder_layer.9} parent=0 // loop_footer_branch
    %8 = sbr.rel target = $region3
  $region8: #{decoder_layer.9} parent=0 // loop_exit
    _

// kernel: decoder_layer.8
$region0: #{decoder_layer.8}
  #allocation0 [shape = 'u32[]', space=smem, size = 0x4, offset = 0x4, fixed_abs, tag = 'smem constant byte address 0x4 - core index']
  #allocation1 [shape = 'u32[144,128]{1,0:T(1,128)}', space=vmem, size = 0x12000, scoped, tag = 'internal scratch']
  #allocation2 [shape = 'bf16[16,128]{1,0:T(8,128)(2,1)}', space=vmem, size = 0x1000, scoped, tag = 'scratch operand']
  %s0 = inlined_call_operand.hbm [shape: f32[16,128], index: 0, kind: input, shape index: {}]
  %s1 = inlined_call_operand.hbm [shape: f32[1,128], index: 1, kind: input, shape index: {}]
  %s2 = inlined_call_operand.hbm [shape: f32[1,128], index: 2, kind: input, shape index: {}]
  %s3 = inlined_call_operand.vmem [shape: bf16[128,384], index: 3, kind: input, shape index: {}]
  %s4 = inlined_call_operand.hbm [shape: f32[1,384], index: 4, kind: input, shape index: {}]
  %s5 = inlined_call_operand.vmem [shape: bf16[16,384], index: 5, kind: output, shape index: {}]
  %s6 = sld [smem:[#allocation0]]
  $region50: #{decoder_layer.8} parent=0
    _
  %s8 = ssub.s32 1, %s6
  %s9 = scalar_select 0, %s8, %s6
  $region1: #{decoder_layer.8} parent=0
    #allocation3 [shape = 'u8[8192]{0}', space=vmem, size = 0x2000, scoped, tag = 'input window, operand 0, single buffered']
    #allocation4 [shape = 's32[1]{0}', space=sflag, size = 0x4, scoped, tag = 'scoped memory for decoder_layer.8']
    #allocation5 [shape = 'u8[512]{0}', space=vmem, size = 0x400, scoped, tag = 'input window, operand 1, single buffered']
    #allocation6 [shape = 's32[1]{0}', space=sflag, size = 0x4, scoped, tag = 'scoped memory for decoder_layer.8']
    #allocation7 [shape = 'u8[512]{0}', space=vmem, size = 0x400, scoped, tag = 'input window, operand 2, single buffered']
    #allocation8 [shape = 'u8[1536]{0}', space=vmem, size = 0x800, scoped, tag = 'input window, operand 4, single buffered']
    #allocation9 [shape = 's32[1]{0}', space=sflag, size = 0x4, scoped, tag = 'scoped memory for decoder_layer.8']
    %10 = vsyncpa [#allocation4], 0
    %11 = vsyncpa [#allocation6], 0
    %12 = vsyncpa [#allocation9], 0
    // Predicated region
    $region2: #{decoder_layer.8} parent=1 // pred_check
      _
    $region3: #{decoder_layer.8} parent=1 // pred_check_branch
      %14 = sbr.rel (0) target = $region5
    $region4: #{decoder_layer.8} parent=1 // pred_region
      %s16 = ssub.s32 256, 256
      %17 = vsyncadd [#allocation4], %s16
      %s18 = sshll.u32 [#allocation3], 4
      %s19 = int_to_ptr.vmem [resolvable:$true] %s18
      %24 = dma.hbm_to_vmem [thread:$0]  %s0, 256, %s19, [#allocation4], 128, 128, 8
    $region5: #{decoder_layer.8} parent=1 // pred_fallthru
      _
    // Predicated region
    $region6: #{decoder_layer.8} parent=1 // pred_check
      _
    $region7: #{decoder_layer.8} parent=1 // pred_check_branch
      %26 = sbr.rel (0) target = $region9
    $region8: #{decoder_layer.8} parent=1 // pred_region
      %s28 = ssub.s32 16, 16
      %29 = vsyncadd [#allocation6], %s28
      %s31 = sshll.u32 [#allocation5], 4
      %s32 = int_to_ptr.vmem [resolvable:$true] %s31
      %34 = dma.hbm_to_vmem [thread:$0]  %s1, 16, %s32, [#allocation6]
    $region9: #{decoder_layer.8} parent=1 // pred_fallthru
      _
    // Predicated region
    $region10: #{decoder_layer.8} parent=1 // pred_check
      _
    $region11: #{decoder_layer.8} parent=1 // pred_check_branch
      %36 = sbr.rel (0) target = $region13
    $region12: #{decoder_layer.8} parent=1 // pred_region
      %s38 = ssub.s32 16, 16
      %39 = vsyncadd [#allocation6], %s38
      %s41 = sshll.u32 [#allocation7], 4
      %s42 = int_to_ptr.vmem [resolvable:$true] %s41
      %44 = dma.hbm_to_vmem [thread:$0]  %s2, 16, %s42, [#allocation6]
    $region13: #{decoder_layer.8} parent=1 // pred_fallthru
      _
    // Predicated region
    $region14: #{decoder_layer.8} parent=1 // pred_check
      _
    $region15: #{decoder_layer.8} parent=1 // pred_check_branch
      %46 = sbr.rel (0) target = $region17
    $region16: #{decoder_layer.8} parent=1 // pred_region
      _
    $region17: #{decoder_layer.8} parent=1 // pred_fallthru
      _
    // Predicated region
    $region18: #{decoder_layer.8} parent=1 // pred_check
      _
    $region19: #{decoder_layer.8} parent=1 // pred_check_branch
      %48 = sbr.rel (0) target = $region21
    $region20: #{decoder_layer.8} parent=1 // pred_region
      %s50 = ssub.s32 48, 48
      %51 = vsyncadd [#allocation9], %s50
      %s53 = sshll.u32 [#allocation8], 4
      %s54 = int_to_ptr.vmem [resolvable:$true] %s53
      %56 = dma.hbm_to_vmem [thread:$0]  %s4, 48, %s54, [#allocation9]
    $region21: #{decoder_layer.8} parent=1 // pred_fallthru
      _
    // Predicated region
    $region22: #{decoder_layer.8} parent=1 // pred_check
      _
    $region23: #{decoder_layer.8} parent=1 // pred_check_branch
      %58 = sbr.rel (0) target = $region25
    $region24: #{decoder_layer.8} parent=1 // pred_region
      %59 = dma.done [#allocation4], 256
    $region25: #{decoder_layer.8} parent=1 // pred_fallthru
      _
    // Predicated region
    $region26: #{decoder_layer.8} parent=1 // pred_check
      _
    $region27: #{decoder_layer.8} parent=1 // pred_check_branch
      %61 = sbr.rel (0) target = $region29
    $region28: #{decoder_layer.8} parent=1 // pred_region
      %62 = dma.done [#allocation6], 16
    $region29: #{decoder_layer.8} parent=1 // pred_fallthru
      _
    // Predicated region
    $region30: #{decoder_layer.8} parent=1 // pred_check
      _
    $region31: #{decoder_layer.8} parent=1 // pred_check_branch
      %64 = sbr.rel (0) target = $region33
    $region32: #{decoder_layer.8} parent=1 // pred_region
      %65 = dma.done [#allocation6], 16
    $region33: #{decoder_layer.8} parent=1 // pred_fallthru
      _
    // Predicated region
    $region34: #{decoder_layer.8} parent=1 // pred_check
      _
    $region35: #{decoder_layer.8} parent=1 // pred_check_branch
      %67 = sbr.rel (0) target = $region37
    $region36: #{decoder_layer.8} parent=1 // pred_region
      %68 = dma.done [#allocation9], 48
    $region37: #{decoder_layer.8} parent=1 // pred_fallthru
      _
    %p70 = scmp.eq.s32.totalorder 0, 0
    // Predicated region
    $region38: #{decoder_layer.8} parent=1 // pred_check
      %p71 = pneg %p70
    $region39: #{decoder_layer.8} parent=1 // pred_check_branch
      %73 = sbr.rel (%p71) target = $region41
    $region40: #{decoder_layer.8} parent=1 // pred_region
      %v74 = vld [vmem:[#allocation3] sm:$0xff]
      %v75 = vld [vmem:[#allocation3 + $0x8] sm:$0xff]
      %76 = vadd.xlane.f32.xlu0 %v74
      %v77 = vpop.xlane.xlu0 %76
      %78 = vadd.xlane.f32.xlu0 %v75
      %v79 = vpop.xlane.xlu0 %78
      %v80 = vrcp.pop 128.0
      %v81 = vmul.f32 %v77, %v80
      %v82 = vmul.f32 %v79, %v80
      %v83 = vsub.f32 %v74, %v81
      %v84 = vsub.f32 %v75, %v82
      %v85 = vmul.f32 %v83, %v83
      %v86 = vmul.f32 %v84, %v84
      %87 = vadd.xlane.f32.xlu0 %v85
      %v88 = vpop.xlane.xlu0 %87
      %89 = vadd.xlane.f32.xlu0 %v86
      %v90 = vpop.xlane.xlu0 %89
      %v91 = vmul.f32 %v88, %v80
      %v92 = vmul.f32 %v90, %v80
      %v93 = vadd.f32 %v91, 1e-06
      %v94 = vadd.f32 %v92, 1e-06
      %v95 = vrsqrt.pop %v93
      %v96 = vrsqrt.pop %v94
      %v97 = vmul.f32 %v83, %v95
      %v98 = vmul.f32 %v84, %v96
      %v99 = vld [vmem:[#allocation5] sm:$0x1]
      %v101 = vlaneseq
      %v102 = vshrl.u32 %v101, 7
      %v103 = vsub.s32 0, %v102
      %v104 = vrot.slane %v99, %v103
      %v106 = vmul.f32 %v97, %v104
      %v107 = vmul.f32 %v98, %v104
      %v108 = vld [vmem:[#allocation7] sm:$0x1]
      %v110 = vlaneseq
      %v111 = vshrl.u32 %v110, 7
      %v112 = vsub.s32 0, %v111
      %v113 = vrot.slane %v108, %v112
      %v115 = vadd.f32 %v106, %v113
      %v116 = vadd.f32 %v107, %v113
      %v117 = vpack.c.bf16 %v116, %v115
      %v119 = vunpack.c.l.b16 %v117
      %v120 = vunpack.c.h.b16 %v117
      %v121 = vpack.c.b16 %v119, %v119
      %v122 = vpack.c.b16 %v120, %v120
      %125 = vst [vmem:[#allocation2] sm:$0xf] %v121
      %126 = vst [vmem:[#allocation2 + $0x4] sm:$0xf] %v122
    $region41: #{decoder_layer.8} parent=1 // pred_fallthru
      _
    %v127 = vld [vmem:[#allocation2] sm:$0xf]
    %v128 = vld [vmem:[#allocation2 + $0x4] sm:$0xf]
    %v129 = vld [vmem:[%s3] sm:$0xff]
    %v130 = vld [vmem:[%s3 + $0x8] sm:$0xf]
    %v131 = vld [vmem:[%s3 + $0xc] sm:$0xff]
    %v132 = vld [vmem:[%s3 + $0x14] sm:$0xf]
    %v133 = vld [vmem:[%s3 + $0x18] sm:$0xff]
    %v134 = vld [vmem:[%s3 + $0x20] sm:$0xf]
    %v135 = vld [vmem:[%s3 + $0x24] sm:$0xff]
    %v136 = vld [vmem:[%s3 + $0x2c] sm:$0xf]
    %v137 = vld [vmem:[%s3 + $0x30] sm:$0xff]
    %v138 = vld [vmem:[%s3 + $0x38] sm:$0xf]
    %v139 = vld [vmem:[%s3 + $0x3c] sm:$0xff]
    %v140 = vld [vmem:[%s3 + $0x44] sm:$0xf]
    %v141 = vld [vmem:[%s3 + $0x48] sm:$0xff]
    %v142 = vld [vmem:[%s3 + $0x50] sm:$0xf]
    %v143 = vld [vmem:[%s3 + $0x54] sm:$0xff]
    %v144 = vld [vmem:[%s3 + $0x5c] sm:$0xf]
    %v145 = vld [vmem:[%s3 + $0x60] sm:$0xff]
    %v146 = vld [vmem:[%s3 + $0x68] sm:$0xf]
    %v147 = vld [vmem:[%s3 + $0x6c] sm:$0xff]
    %v148 = vld [vmem:[%s3 + $0x74] sm:$0xf]
    %v149 = vld [vmem:[%s3 + $0x78] sm:$0xff]
    %v150 = vld [vmem:[%s3 + $0x80] sm:$0xf]
    %v151 = vld [vmem:[%s3 + $0x84] sm:$0xff]
    %v152 = vld [vmem:[%s3 + $0x8c] sm:$0xf]
    %v153 = vld [vmem:[%s3 + $0x90] sm:$0xff]
    %v154 = vld [vmem:[%s3 + $0x98] sm:$0xf]
    %v155 = vld [vmem:[%s3 + $0x9c] sm:$0xff]
    %v156 = vld [vmem:[%s3 + $0xa4] sm:$0xf]
    %v157 = vld [vmem:[%s3 + $0xa8] sm:$0xff]
    %v158 = vld [vmem:[%s3 + $0xb0] sm:$0xf]
    %v159 = vld [vmem:[%s3 + $0xb4] sm:$0xff]
    %v160 = vld [vmem:[%s3 + $0xbc] sm:$0xf]
    %v161 = vld [vmem:[#allocation8] sm:$0x7]
    %v163 = vlaneseq
    %v164 = vshrl.u32 %v163, 7
    %v165 = vsub.s32 0, %v164
    %v166 = vrot.slane %v161, %v165
    %v167 = vlaneseq
    %v168 = vshrl.u32 %v167, 7
    %v169 = vsub.s32 1, %v168
    %v170 = vrot.slane %v161, %v169
    %v171 = vlaneseq
    %v172 = vshrl.u32 %v171, 7
    %v173 = vsub.s32 2, %v172
    %v174 = vrot.slane %v161, %v173
    %v180 = vunpack.c.l.b16 %v127
    %v181 = vunpack.c.l.b16 %v128
    %v182 = vpack.c.b16 %v181, %v180
    %v216 = vunpack.c.l.b16 %v129
    %v217 = vunpack.c.h.b16 %v129
    %v218 = vunpack.c.l.b16 %v130
    %v219 = vunpack.c.l.b16 %v131
    %v220 = vunpack.c.h.b16 %v131
    %v221 = vunpack.c.l.b16 %v132
    %v222 = vunpack.c.l.b16 %v133
    %v223 = vunpack.c.h.b16 %v133
    %v224 = vunpack.c.l.b16 %v134
    %v225 = vunpack.c.l.b16 %v135
    %v226 = vunpack.c.h.b16 %v135
    %v227 = vunpack.c.l.b16 %v136
    %v228 = vunpack.c.l.b16 %v137
    %v229 = vunpack.c.h.b16 %v137
    %v230 = vunpack.c.l.b16 %v138
    %v231 = vunpack.c.l.b16 %v139
    %v232 = vunpack.c.h.b16 %v139
    %v233 = vunpack.c.l.b16 %v140
    %v234 = vunpack.c.l.b16 %v141
    %v235 = vunpack.c.h.b16 %v141
    %v236 = vunpack.c.l.b16 %v142
    %v237 = vunpack.c.l.b16 %v143
    %v238 = vunpack.c.h.b16 %v143
    %v239 = vunpack.c.l.b16 %v144
    %v240 = vunpack.c.l.b16 %v145
    %v241 = vunpack.c.h.b16 %v145
    %v242 = vunpack.c.l.b16 %v146
    %v243 = vunpack.c.l.b16 %v147
    %v244 = vunpack.c.h.b16 %v147
    %v245 = vunpack.c.l.b16 %v148
    %v246 = vunpack.c.l.b16 %v149
    %v247 = vunpack.c.h.b16 %v149
    %v248 = vunpack.c.l.b16 %v150
    %v249 = vunpack.c.l.b16 %v151
    %v250 = vunpack.c.h.b16 %v151
    %v251 = vunpack.c.l.b16 %v152
    %v252 = vunpack.c.l.b16 %v153
    %v253 = vunpack.c.h.b16 %v153
    %v254 = vunpack.c.l.b16 %v154
    %v255 = vunpack.c.l.b16 %v155
    %v256 = vunpack.c.h.b16 %v155
    %v257 = vunpack.c.l.b16 %v156
    %v258 = vunpack.c.l.b16 %v157
    %v259 = vunpack.c.h.b16 %v157
    %v260 = vunpack.c.l.b16 %v158
    %v261 = vunpack.c.l.b16 %v159
    %v262 = vunpack.c.h.b16 %v159
    %v263 = vunpack.c.l.b16 %v160
    %v264 = vpack.c.b16 %v219, %v216
    %v265 = vpack.c.b16 %v220, %v217
    %v266 = vpack.c.b16 %v221, %v218
    %v267 = vpack.c.b16 %v225, %v222
    %v268 = vpack.c.b16 %v226, %v223
    %v269 = vpack.c.b16 %v227, %v224
    %v270 = vpack.c.b16 %v231, %v228
    %v271 = vpack.c.b16 %v232, %v229
    %v272 = vpack.c.b16 %v233, %v230
    %v273 = vpack.c.b16 %v237, %v234
    %v274 = vpack.c.b16 %v238, %v235
    %v275 = vpack.c.b16 %v239, %v236
    %v276 = vpack.c.b16 %v243, %v240
    %v277 = vpack.c.b16 %v244, %v241
    %v278 = vpack.c.b16 %v245, %v242
    %v279 = vpack.c.b16 %v249, %v246
    %v280 = vpack.c.b16 %v250, %v247
    %v281 = vpack.c.b16 %v251, %v248
    %v282 = vpack.c.b16 %v255, %v252
    %v283 = vpack.c.b16 %v256, %v253
    %v284 = vpack.c.b16 %v257, %v254
    %v285 = vpack.c.b16 %v261, %v258
    %v286 = vpack.c.b16 %v262, %v259
    %v287 = vpack.c.b16 %v263, %v260
    %312 = vmatprep.subr.bf16.mxu0 %v286
    %313 = vmatpush1.bf16.msra.mxu0 %v285
    %314 = vmatprep.subr.bf16.mxu0 %v283
    %315 = vmatpush1.bf16.msra.mxu0 %v282
    %316 = vmatprep.subr.bf16.mxu0 %v280
    %317 = vmatpush1.bf16.msra.mxu0 %v279
    %318 = vmatprep.subr.bf16.mxu0 %v277
    %319 = vmatpush1.bf16.msra.mxu0 %v276
    %320 = vmatprep.subr.bf16.mxu0 %v274
    %321 = vmatpush1.bf16.msra.mxu0 %v273
    %322 = vmatprep.subr.bf16.mxu0 %v271
    %323 = vmatpush1.bf16.msra.mxu0 %v270
    %324 = vmatprep.subr.bf16.mxu0 %v268
    %325 = vmatpush1.bf16.msra.mxu0 %v267
    %326 = vmatprep.subr.bf16.mxu0 %v265
    %327 = vmatpush1.bf16.msra.mxu0 %v264
    %328 = vmatprep.subr.bf16.mxu0 0
    %329 = vmatpush2.bf16.msra.mxu0 0
    %330 = vmatprep.subr.bf16.mxu0 0
    %331 = vmatpush2.bf16.msra.mxu0 0
    %332 = vmatprep.subr.bf16.mxu0 0
    %333 = vmatpush2.bf16.msra.mxu0 0
    %334 = vmatprep.subr.bf16.mxu0 0
    %335 = vmatpush2.bf16.msra.mxu0 0
    %336 = vmatprep.subr.bf16.mxu0 0
    %337 = vmatpush2.bf16.msra.mxu0 0
    %338 = vmatprep.subr.bf16.mxu0 0
    %339 = vmatpush2.bf16.msra.mxu0 0
    %340 = vmatprep.subr.bf16.mxu0 0
    %341 = vmatpush2.bf16.msra.mxu0 0
    %342 = vmatprep.subr.bf16.mxu0 0
    %343 = vmatpush2.bf16.msra.mxu0 0
    %344 = vmatprep.mubr.bf16.mxu0 0
    %345 = vmatmul.mubr.bf16.gmra.mxu0 %v182
    %v346 = vpop.f32.mrf.mxu0
    %v347 = vadd.f32 %v166, %v346
    %v348 = vpop.f32.mrf.mxu0
    %v349 = vadd.f32 %v170, %v348
    %v350 = vpop.f32.mrf.mxu0
    %v351 = vadd.f32 %v166, %v350
    %v352 = vpop.f32.mrf.mxu0
    %v353 = vadd.f32 %v170, %v352
    %354 = vdwg.mxu0
    %355 = vmatprep.subr.bf16.mxu0 0
    %356 = vmatpush1.bf16.msra.mxu0 %v287
    %357 = vmatprep.subr.bf16.mxu0 0
    %358 = vmatpush1.bf16.msra.mxu0 %v284
    %359 = vmatprep.subr.bf16.mxu0 0
    %360 = vmatpush1.bf16.msra.mxu0 %v281
    %361 = vmatprep.subr.bf16.mxu0 0
    %362 = vmatpush1.bf16.msra.mxu0 %v278
    %363 = vmatprep.subr.bf16.mxu0 0
    %364 = vmatpush1.bf16.msra.mxu0 %v275
    %365 = vmatprep.subr.bf16.mxu0 0
    %366 = vmatpush1.bf16.msra.mxu0 %v272
    %367 = vmatprep.subr.bf16.mxu0 0
    %368 = vmatpush1.bf16.msra.mxu0 %v269
    %369 = vmatprep.subr.bf16.mxu0 0
    %370 = vmatpush1.bf16.msra.mxu0 %v266
    %371 = vmatprep.subr.bf16.mxu0 0
    %372 = vmatpush2.bf16.msra.mxu0 0
    %373 = vmatprep.subr.bf16.mxu0 0
    %374 = vmatpush2.bf16.msra.mxu0 0
    %375 = vmatprep.subr.bf16.mxu0 0
    %376 = vmatpush2.bf16.msra.mxu0 0
    %377 = vmatprep.subr.bf16.mxu0 0
    %378 = vmatpush2.bf16.msra.mxu0 0
    %379 = vmatprep.subr.bf16.mxu0 0
    %380 = vmatpush2.bf16.msra.mxu0 0
    %381 = vmatprep.subr.bf16.mxu0 0
    %382 = vmatpush2.bf16.msra.mxu0 0
    %383 = vmatprep.subr.bf16.mxu0 0
    %384 = vmatpush2.bf16.msra.mxu0 0
    %385 = vmatprep.subr.bf16.mxu0 0
    %386 = vmatpush2.bf16.msra.mxu0 0
    %387 = vmatprep.mubr.bf16.mxu0 0
    %388 = vmatmul.mubr.bf16.gmra.mxu0 %v182
    %v389 = vpop.f32.mrf.mxu0
    %v390 = vadd.f32 %v174, %v389
    %v391 = vpop.f32.mrf.mxu0
    %v392 = vpop.f32.mrf.mxu0
    %v393 = vadd.f32 %v174, %v392
    %v394 = vpop.f32.mrf.mxu0
    %395 = vdwg.mxu0
    %v396 = vpack.c.bf16 %v351, %v347
    %v397 = vpack.c.bf16 %v353, %v349
    %v398 = vpack.c.bf16 %v393, %v390
    %v402 = vunpack.c.l.b16 %v396
    %v403 = vunpack.c.l.b16 %v397
    %v404 = vunpack.c.l.b16 %v398
    %v405 = vunpack.c.h.b16 %v396
    %v406 = vunpack.c.h.b16 %v397
    %v407 = vunpack.c.h.b16 %v398
    %v408 = vpack.c.b16 %v403, %v402
    %v409 = vpack.c.b16 %v404, %v404
    %v410 = vpack.c.b16 %v406, %v405
    %v411 = vpack.c.b16 %v407, %v407
    %416 = vst [vmem:[%s5] sm:$0xff] %v408
    %417 = vst [vmem:[%s5 + $0x8] sm:$0xf] %v409
    %418 = vst [vmem:[%s5 + $0xc] sm:$0xff] %v410
    %419 = vst [vmem:[%s5 + $0x14] sm:$0xf] %v411
    // Predicated region
    $region42: #{decoder_layer.8} parent=1 // pred_check
      _
    $region43: #{decoder_layer.8} parent=1 // pred_check_branch
      %421 = sbr.rel (0) target = $region45
    $region44: #{decoder_layer.8} parent=1 // pred_region
      _
    $region45: #{decoder_layer.8} parent=1 // pred_fallthru
      _
    // Predicated region
    $region46: #{decoder_layer.8} parent=1 // pred_check
      _
    $region47: #{decoder_layer.8} parent=1 // pred_check_branch
      %423 = sbr.rel (0) target = $region49
    $region48: #{decoder_layer.8} parent=1 // pred_region
      _
    $region49: #{decoder_layer.8} parent=1 // pred_fallthru
      _
    %424 = vsyncpa [#allocation4], 1
    %425 = vsyncpa [#allocation6], 1
    %426 = vsyncpa [#allocation9], 1

// kernel: decoder_layer.15
$region0: #{decoder_layer.15}
  #allocation0 [shape = 'u32[]', space=smem, size = 0x4, offset = 0x4, fixed_abs, tag = 'smem constant byte address 0x4 - core index']
  #allocation1 [shape = 'u32[144,128]{1,0:T(1,128)}', space=vmem, size = 0x12000, scoped, tag = 'internal scratch']
  #allocation2 [shape = 'bf16[16,128]{1,0:T(8,128)(2,1)}', space=vmem, size = 0x1000, scoped, tag = 'scratch operand']
  #allocation3 [shape = 'f32[16,128]{1,0:T(8,128)}', space=vmem, size = 0x2000, scoped, tag = 'scratch operand']
  %s0 = inlined_call_operand.vmem [shape: f32[16,128], index: 0, kind: input, shape index: {}]
  %s1 = inlined_call_operand.vmem [shape: f32[1,128], index: 1, kind: input, shape index: {}]
  %s2 = inlined_call_operand.vmem [shape: f32[1,128], index: 2, kind: input, shape index: {}]
  %s3 = inlined_call_operand.vmem [shape: bf16[128,256], index: 3, kind: input, shape index: {}]
  %s4 = inlined_call_operand.vmem [shape: f32[1,256], index: 4, kind: input, shape index: {}]
  %s5 = inlined_call_operand.vmem [shape: bf16[256,128], index: 5, kind: input, shape index: {}]
  %s6 = inlined_call_operand.vmem [shape: f32[1,128], index: 6, kind: input, shape index: {}]
  %s7 = inlined_call_operand.hbm [shape: f32[16,128], index: 7, kind: output, shape index: {}]
  %s8 = sld [smem:[#allocation0]]
  $region46: #{decoder_layer.15} parent=0
    _
  %s10 = ssub.s32 1, %s8
  %s11 = scalar_select 0, %s10, %s8
  $region1: #{decoder_layer.15} parent=0
    #allocation4 [shape = 'u8[8192]{0}', space=vmem, size = 0x2000, scoped, tag = 'output window, operand 0, single buffered']
    #allocation5 [shape = 's32[1]{0}', space=sflag, size = 0x4, scoped, tag = 'scoped memory for decoder_layer.15']
    %12 = vsyncpa [#allocation5], 0
    // Predicated region
    $region2: #{decoder_layer.15} parent=1 // pred_check
      _
    $region3: #{decoder_layer.15} parent=1 // pred_check_branch
      %14 = sbr.rel (0) target = $region5
    $region4: #{decoder_layer.15} parent=1 // pred_region
      _
    $region5: #{decoder_layer.15} parent=1 // pred_fallthru
      _
    // Predicated region
    $region6: #{decoder_layer.15} parent=1 // pred_check
      _
    $region7: #{decoder_layer.15} parent=1 // pred_check_branch
      %16 = sbr.rel (0) target = $region9
    $region8: #{decoder_layer.15} parent=1 // pred_region
      _
    $region9: #{decoder_layer.15} parent=1 // pred_fallthru
      _
    // Predicated region
    $region10: #{decoder_layer.15} parent=1 // pred_check
      _
    $region11: #{decoder_layer.15} parent=1 // pred_check_branch
      %18 = sbr.rel (0) target = $region13
    $region12: #{decoder_layer.15} parent=1 // pred_region
      _
    $region13: #{decoder_layer.15} parent=1 // pred_fallthru
      _
    // Predicated region
    $region14: #{decoder_layer.15} parent=1 // pred_check
      _
    $region15: #{decoder_layer.15} parent=1 // pred_check_branch
      %20 = sbr.rel (0) target = $region17
    $region16: #{decoder_layer.15} parent=1 // pred_region
      _
    $region17: #{decoder_layer.15} parent=1 // pred_fallthru
      _
    // Predicated region
    $region18: #{decoder_layer.15} parent=1 // pred_check
      _
    $region19: #{decoder_layer.15} parent=1 // pred_check_branch
      %22 = sbr.rel (0) target = $region21
    $region20: #{decoder_layer.15} parent=1 // pred_region
      _
    $region21: #{decoder_layer.15} parent=1 // pred_fallthru
      _
    // Predicated region
    $region22: #{decoder_layer.15} parent=1 // pred_check
      _
    $region23: #{decoder_layer.15} parent=1 // pred_check_branch
      %24 = sbr.rel (0) target = $region25
    $region24: #{decoder_layer.15} parent=1 // pred_region
      _
    $region25: #{decoder_layer.15} parent=1 // pred_fallthru
      _
    // Predicated region
    $region26: #{decoder_layer.15} parent=1 // pred_check
      _
    $region27: #{decoder_layer.15} parent=1 // pred_check_branch
      %26 = sbr.rel (0) target = $region29
    $region28: #{decoder_layer.15} parent=1 // pred_region
      _
    $region29: #{decoder_layer.15} parent=1 // pred_fallthru
      _
    %p28 = scmp.eq.s32.totalorder 0, 0
    // Predicated region
    $region30: #{decoder_layer.15} parent=1 // pred_check
      %p29 = pneg %p28
    $region31: #{decoder_layer.15} parent=1 // pred_check_branch
      %31 = sbr.rel (%p29) target = $region33
    $region32: #{decoder_layer.15} parent=1 // pred_region
      %v32 = vld [vmem:[%s0] sm:$0xff]
      %v33 = vld [vmem:[%s0 + $0x8] sm:$0xff]
      %34 = vadd.xlane.f32.xlu0 %v32
      %v35 = vpop.xlane.xlu0 %34
      %36 = vadd.xlane.f32.xlu0 %v33
      %v37 = vpop.xlane.xlu0 %36
      %v38 = vrcp.pop 128.0
      %v39 = vmul.f32 %v35, %v38
      %v40 = vmul.f32 %v37, %v38
      %v41 = vsub.f32 %v32, %v39
      %v42 = vsub.f32 %v33, %v40
      %v43 = vmul.f32 %v41, %v41
      %v44 = vmul.f32 %v42, %v42
      %45 = vadd.xlane.f32.xlu0 %v43
      %v46 = vpop.xlane.xlu0 %45
      %47 = vadd.xlane.f32.xlu0 %v44
      %v48 = vpop.xlane.xlu0 %47
      %v49 = vmul.f32 %v46, %v38
      %v50 = vmul.f32 %v48, %v38
      %v51 = vadd.f32 %v49, 1e-06
      %v52 = vadd.f32 %v50, 1e-06
      %v53 = vrsqrt.pop %v51
      %v54 = vrsqrt.pop %v52
      %v55 = vmul.f32 %v41, %v53
      %v56 = vmul.f32 %v42, %v54
      %v57 = vld [vmem:[%s1] sm:$0x1]
      %v59 = vlaneseq
      %v60 = vshrl.u32 %v59, 7
      %v61 = vsub.s32 0, %v60
      %v62 = vrot.slane %v57, %v61
      %v64 = vmul.f32 %v55, %v62
      %v65 = vmul.f32 %v56, %v62
      %v66 = vld [vmem:[%s2] sm:$0x1]
      %v68 = vlaneseq
      %v69 = vshrl.u32 %v68, 7
      %v70 = vsub.s32 0, %v69
      %v71 = vrot.slane %v66, %v70
      %v73 = vadd.f32 %v64, %v71
      %v74 = vadd.f32 %v65, %v71
      %v75 = vpack.c.bf16 %v74, %v73
      %v77 = vunpack.c.l.b16 %v75
      %v78 = vunpack.c.h.b16 %v75
      %v79 = vpack.c.b16 %v77, %v77
      %v80 = vpack.c.b16 %v78, %v78
      %83 = vst [vmem:[#allocation2] sm:$0xf] %v79
      %84 = vst [vmem:[#allocation2 + $0x4] sm:$0xf] %v80
      %v85 = vld [vmem:[%s6] sm:$0x1]
      %v87 = vlaneseq
      %v88 = vshrl.u32 %v87, 7
      %v89 = vsub.s32 0, %v88
      %v90 = vrot.slane %v85, %v89
      %92 = vst [vmem:[#allocation3] sm:$0xff] %v90
      %93 = vst [vmem:[#allocation3 + $0x8] sm:$0xff] %v90
    $region33: #{decoder_layer.15} parent=1 // pred_fallthru
      _
    %v94 = vld [vmem:[#allocation2] sm:$0xf]
    %v95 = vld [vmem:[#allocation2 + $0x4] sm:$0xf]
    %v96 = vld [vmem:[%s3] sm:$0xff]
    %v97 = vld [vmem:[%s3 + $0x8] sm:$0xff]
    %v98 = vld [vmem:[%s3 + $0x10] sm:$0xff]
    %v99 = vld [vmem:[%s3 + $0x18] sm:$0xff]
    %v100 = vld [vmem:[%s3 + $0x20] sm:$0xff]
    %v101 = vld [vmem:[%s3 + $0x28] sm:$0xff]
    %v102 = vld [vmem:[%s3 + $0x30] sm:$0xff]
    %v103 = vld [vmem:[%s3 + $0x38] sm:$0xff]
    %v104 = vld [vmem:[%s3 + $0x40] sm:$0xff]
    %v105 = vld [vmem:[%s3 + $0x48] sm:$0xff]
    %v106 = vld [vmem:[%s3 + $0x50] sm:$0xff]
    %v107 = vld [vmem:[%s3 + $0x58] sm:$0xff]
    %v108 = vld [vmem:[%s3 + $0x60] sm:$0xff]
    %v109 = vld [vmem:[%s3 + $0x68] sm:$0xff]
    %v110 = vld [vmem:[%s3 + $0x70] sm:$0xff]
    %v111 = vld [vmem:[%s3 + $0x78] sm:$0xff]
    %v112 = vld [vmem:[%s4] sm:$0x3]
    %v114 = vlaneseq
    %v115 = vshrl.u32 %v114, 7
    %v116 = vsub.s32 0, %v115
    %v117 = vrot.slane %v112, %v116
    %v118 = vlaneseq
    %v119 = vshrl.u32 %v118, 7
    %v120 = vsub.s32 1, %v119
    %v121 = vrot.slane %v112, %v120
    %v126 = vunpack.c.l.b16 %v94
    %v127 = vunpack.c.l.b16 %v95
    %v128 = vpack.c.b16 %v127, %v126
    %v146 = vunpack.c.l.b16 %v96
    %v147 = vunpack.c.h.b16 %v96
    %v148 = vunpack.c.l.b16 %v97
    %v149 = vunpack.c.h.b16 %v97
    %v150 = vunpack.c.l.b16 %v98
    %v151 = vunpack.c.h.b16 %v98
    %v152 = vunpack.c.l.b16 %v99
    %v153 = vunpack.c.h.b16 %v99
    %v154 = vunpack.c.l.b16 %v100
    %v155 = vunpack.c.h.b16 %v100
    %v156 = vunpack.c.l.b16 %v101
    %v157 = vunpack.c.h.b16 %v101
    %v158 = vunpack.c.l.b16 %v102
    %v159 = vunpack.c.h.b16 %v102
    %v160 = vunpack.c.l.b16 %v103
    %v161 = vunpack.c.h.b16 %v103
    %v162 = vunpack.c.l.b16 %v104
    %v163 = vunpack.c.h.b16 %v104
    %v164 = vunpack.c.l.b16 %v105
    %v165 = vunpack.c.h.b16 %v105
    %v166 = vunpack.c.l.b16 %v106
    %v167 = vunpack.c.h.b16 %v106
    %v168 = vunpack.c.l.b16 %v107
    %v169 = vunpack.c.h.b16 %v107
    %v170 = vunpack.c.l.b16 %v108
    %v171 = vunpack.c.h.b16 %v108
    %v172 = vunpack.c.l.b16 %v109
    %v173 = vunpack.c.h.b16 %v109
    %v174 = vunpack.c.l.b16 %v110
    %v175 = vunpack.c.h.b16 %v110
    %v176 = vunpack.c.l.b16 %v111
    %v177 = vunpack.c.h.b16 %v111
    %v178 = vpack.c.b16 %v148, %v146
    %v179 = vpack.c.b16 %v149, %v147
    %v180 = vpack.c.b16 %v152, %v150
    %v181 = vpack.c.b16 %v153, %v151
    %v182 = vpack.c.b16 %v156, %v154
    %v183 = vpack.c.b16 %v157, %v155
    %v184 = vpack.c.b16 %v160, %v158
    %v185 = vpack.c.b16 %v161, %v159
    %v186 = vpack.c.b16 %v164, %v162
    %v187 = vpack.c.b16 %v165, %v163
    %v188 = vpack.c.b16 %v168, %v166
    %v189 = vpack.c.b16 %v169, %v167
    %v190 = vpack.c.b16 %v172, %v170
    %v191 = vpack.c.b16 %v173, %v171
    %v192 = vpack.c.b16 %v176, %v174
    %v193 = vpack.c.b16 %v177, %v175
    %210 = vmatprep.subr.bf16.mxu0 %v193
    %211 = vmatpush1.bf16.msra.mxu0 %v192
    %212 = vmatprep.subr.bf16.mxu0 %v191
    %213 = vmatpush1.bf16.msra.mxu0 %v190
    %214 = vmatprep.subr.bf16.mxu0 %v189
    %215 = vmatpush1.bf16.msra.mxu0 %v188
    %216 = vmatprep.subr.bf16.mxu0 %v187
    %217 = vmatpush1.bf16.msra.mxu0 %v186
    %218 = vmatprep.subr.bf16.mxu0 %v185
    %219 = vmatpush1.bf16.msra.mxu0 %v184
    %220 = vmatprep.subr.bf16.mxu0 %v183
    %221 = vmatpush1.bf16.msra.mxu0 %v182
    %222 = vmatprep.subr.bf16.mxu0 %v181
    %223 = vmatpush1.bf16.msra.mxu0 %v180
    %224 = vmatprep.subr.bf16.mxu0 %v179
    %225 = vmatpush1.bf16.msra.mxu0 %v178
    %226 = vmatprep.subr.bf16.mxu0 0
    %227 = vmatpush2.bf16.msra.mxu0 0
    %228 = vmatprep.subr.bf16.mxu0 0
    %229 = vmatpush2.bf16.msra.mxu0 0
    %230 = vmatprep.subr.bf16.mxu0 0
    %231 = vmatpush2.bf16.msra.mxu0 0
    %232 = vmatprep.subr.bf16.mxu0 0
    %233 = vmatpush2.bf16.msra.mxu0 0
    %234 = vmatprep.subr.bf16.mxu0 0
    %235 = vmatpush2.bf16.msra.mxu0 0
    %236 = vmatprep.subr.bf16.mxu0 0
    %237 = vmatpush2.bf16.msra.mxu0 0
    %238 = vmatprep.subr.bf16.mxu0 0
    %239 = vmatpush2.bf16.msra.mxu0 0
    %240 = vmatprep.subr.bf16.mxu0 0
    %241 = vmatpush2.bf16.msra.mxu0 0
    %242 = vmatprep.mubr.bf16.mxu0 0
    %243 = vmatmul.mubr.bf16.gmra.mxu0 %v128
    %v244 = vpop.f32.mrf.mxu0
    %v245 = vadd.f32 %v117, %v244
    %v246 = vpop.f32.mrf.mxu0
    %v247 = vadd.f32 %v121, %v246
    %v248 = vpop.f32.mrf.mxu0
    %v249 = vadd.f32 %v117, %v248
    %v250 = vpop.f32.mrf.mxu0
    %v251 = vadd.f32 %v121, %v250
    %252 = vdwg.mxu0
    %v253 = vmax.f32 %v245, 0.0
    %v254 = vmax.f32 %v247, 0.0
    %v255 = vmax.f32 %v249, 0.0
    %v256 = vmax.f32 %v251, 0.0
    %v257 = vld [vmem:[#allocation3] sm:$0xff]
    %v258 = vld [vmem:[#allocation3 + $0x8] sm:$0xff]
    %v259 = vpack.c.bf16 %v255, %v253
    %v260 = vpack.c.bf16 %v256, %v254
    %v261 = vld [vmem:[%s5] sm:$0xf]
    %v262 = vld [vmem:[%s5 + $0x4] sm:$0xf]
    %v263 = vld [vmem:[%s5 + $0x8] sm:$0xf]
    %v264 = vld [vmem:[%s5 + $0xc] sm:$0xf]
    %v265 = vld [vmem:[%s5 + $0x10] sm:$0xf]
    %v266 = vld [vmem:[%s5 + $0x14] sm:$0xf]
    %v267 = vld [vmem:[%s5 + $0x18] sm:$0xf]
    %v268 = vld [vmem:[%s5 + $0x1c] sm:$0xf]
    %v269 = vld [vmem:[%s5 + $0x20] sm:$0xf]
    %v270 = vld [vmem:[%s5 + $0x24] sm:$0xf]
    %v271 = vld [vmem:[%s5 + $0x28] sm:$0xf]
    %v272 = vld [vmem:[%s5 + $0x2c] sm:$0xf]
    %v273 = vld [vmem:[%s5 + $0x30] sm:$0xf]
    %v274 = vld [vmem:[%s5 + $0x34] sm:$0xf]
    %v275 = vld [vmem:[%s5 + $0x38] sm:$0xf]
    %v276 = vld [vmem:[%s5 + $0x3c] sm:$0xf]
    %v277 = vld [vmem:[%s5 + $0x40] sm:$0xf]
    %v278 = vld [vmem:[%s5 + $0x44] sm:$0xf]
    %v279 = vld [vmem:[%s5 + $0x48] sm:$0xf]
    %v280 = vld [vmem:[%s5 + $0x4c] sm:$0xf]
    %v281 = vld [vmem:[%s5 + $0x50] sm:$0xf]
    %v282 = vld [vmem:[%s5 + $0x54] sm:$0xf]
    %v283 = vld [vmem:[%s5 + $0x58] sm:$0xf]
    %v284 = vld [vmem:[%s5 + $0x5c] sm:$0xf]
    %v285 = vld [vmem:[%s5 + $0x60] sm:$0xf]
    %v286 = vld [vmem:[%s5 + $0x64] sm:$0xf]
    %v287 = vld [vmem:[%s5 + $0x68] sm:$0xf]
    %v288 = vld [vmem:[%s5 + $0x6c] sm:$0xf]
    %v289 = vld [vmem:[%s5 + $0x70] sm:$0xf]
    %v290 = vld [vmem:[%s5 + $0x74] sm:$0xf]
    %v291 = vld [vmem:[%s5 + $0x78] sm:$0xf]
    %v292 = vld [vmem:[%s5 + $0x7c] sm:$0xf]
    %v325 = vunpack.c.l.b16 %v261
    %v326 = vunpack.c.l.b16 %v262
    %v327 = vunpack.c.l.b16 %v263
    %v328 = vunpack.c.l.b16 %v264
    %v329 = vunpack.c.l.b16 %v265
    %v330 = vunpack.c.l.b16 %v266
    %v331 = vunpack.c.l.b16 %v267
    %v332 = vunpack.c.l.b16 %v268
    %v333 = vunpack.c.l.b16 %v269
    %v334 = vunpack.c.l.b16 %v270
    %v335 = vunpack.c.l.b16 %v271
    %v336 = vunpack.c.l.b16 %v272
    %v337 = vunpack.c.l.b16 %v273
    %v338 = vunpack.c.l.b16 %v274
    %v339 = vunpack.c.l.b16 %v275
    %v340 = vunpack.c.l.b16 %v276
    %v341 = vunpack.c.l.b16 %v277
    %v342 = vunpack.c.l.b16 %v278
    %v343 = vunpack.c.l.b16 %v279
    %v344 = vunpack.c.l.b16 %v280
    %v345 = vunpack.c.l.b16 %v281
    %v346 = vunpack.c.l.b16 %v282
    %v347 = vunpack.c.l.b16 %v283
    %v348 = vunpack.c.l.b16 %v284
    %v349 = vunpack.c.l.b16 %v285
    %v350 = vunpack.c.l.b16 %v286
    %v351 = vunpack.c.l.b16 %v287
    %v352 = vunpack.c.l.b16 %v288
    %v353 = vunpack.c.l.b16 %v289
    %v354 = vunpack.c.l.b16 %v290
    %v355 = vunpack.c.l.b16 %v291
    %v356 = vunpack.c.l.b16 %v292
    %v357 = vpack.c.b16 %v326, %v325
    %v358 = vpack.c.b16 %v328, %v327
    %v359 = vpack.c.b16 %v330, %v329
    %v360 = vpack.c.b16 %v332, %v331
    %v361 = vpack.c.b16 %v334, %v333
    %v362 = vpack.c.b16 %v336, %v335
    %v363 = vpack.c.b16 %v338, %v337
    %v364 = vpack.c.b16 %v340, %v339
    %v365 = vpack.c.b16 %v342, %v341
    %v366 = vpack.c.b16 %v344, %v343
    %v367 = vpack.c.b16 %v346, %v345
    %v368 = vpack.c.b16 %v348, %v347
    %v369 = vpack.c.b16 %v350, %v349
    %v370 = vpack.c.b16 %v352, %v351
    %v371 = vpack.c.b16 %v354, %v353
    %v372 = vpack.c.b16 %v356, %v355
    %389 = vmatprep.subr.bf16.mxu0 0
    %390 = vmatpush1.bf16.msra.mxu0 %v364
    %391 = vmatprep.subr.bf16.mxu0 0
    %392 = vmatpush1.bf16.msra.mxu0 %v363
    %393 = vmatprep.subr.bf16.mxu0 0
    %394 = vmatpush1.bf16.msra.mxu0 %v362
    %395 = vmatprep.subr.bf16.mxu0 0
    %396 = vmatpush1.bf16.msra.mxu0 %v361
    %397 = vmatprep.subr.bf16.mxu0 0
    %398 = vmatpush1.bf16.msra.mxu0 %v360
    %399 = vmatprep.subr.bf16.mxu0 0
    %400 = vmatpush1.bf16.msra.mxu0 %v359
    %401 = vmatprep.subr.bf16.mxu0 0
    %402 = vmatpush1.bf16.msra.mxu0 %v358
    %403 = vmatprep.subr.bf16.mxu0 0
    %404 = vmatpush1.bf16.msra.mxu0 %v357
    %405 = vmatprep.subr.bf16.mxu0 0
    %406 = vmatpush2.bf16.msra.mxu0 %v372
    %407 = vmatprep.subr.bf16.mxu0 0
    %408 = vmatpush2.bf16.msra.mxu0 %v371
    %409 = vmatprep.subr.bf16.mxu0 0
    %410 = vmatpush2.bf16.msra.mxu0 %v370
    %411 = vmatprep.subr.bf16.mxu0 0
    %412 = vmatpush2.bf16.msra.mxu0 %v369
    %413 = vmatprep.subr.bf16.mxu0 0
    %414 = vmatpush2.bf16.msra.mxu0 %v368
    %415 = vmatprep.subr.bf16.mxu0 0
    %416 = vmatpush2.bf16.msra.mxu0 %v367
    %417 = vmatprep.subr.bf16.mxu0 0
    %418 = vmatpush2.bf16.msra.mxu0 %v366
    %419 = vmatprep.subr.bf16.mxu0 0
    %420 = vmatpush2.bf16.msra.mxu0 %v365
    %421 = vmatprep.mubr.bf16.mxu0 %v260
    %422 = vmatmul.mubr.bf16.gmra.mxu0 %v259
    %v423 = vpop.f32.mrf.mxu0
    %v424 = vadd.f32 0.0, %v423
    %v425 = vpop.f32.mrf.mxu0
    %v426 = vpop.f32.mrf.mxu0
    %v427 = vadd.f32 0.0, %v426
    %v428 = vpop.f32.mrf.mxu0
    %429 = vdwg.mxu0
    %v430 = vadd.f32 %v257, %v424
    %v431 = vadd.f32 %v258, %v427
    %432 = vst [vmem:[#allocation3] sm:$0xff] %v430
    %433 = vst [vmem:[#allocation3 + $0x8] sm:$0xff] %v431
    // Predicated region
    $region34: #{decoder_layer.15} parent=1 // pred_check
      %p434 = pneg %p28
    $region35: #{decoder_layer.15} parent=1 // pred_check_branch
      %436 = sbr.rel (%p434) target = $region37
    $region36: #{decoder_layer.15} parent=1 // pred_region
      %v437 = vld [vmem:[#allocation3] sm:$0xff]
      %v438 = vld [vmem:[#allocation3 + $0x8] sm:$0xff]
      %v439 = vld [vmem:[%s0] sm:$0xff]
      %v440 = vld [vmem:[%s0 + $0x8] sm:$0xff]
      %v441 = vadd.f32 %v437, %v439
      %v442 = vadd.f32 %v438, %v440
      %443 = vst [vmem:[#allocation4] sm:$0xff] %v441
      %444 = vst [vmem:[#allocation4 + $0x8] sm:$0xff] %v442
    $region37: #{decoder_layer.15} parent=1 // pred_fallthru
      _
    // Predicated region
    $region38: #{decoder_layer.15} parent=1 // pred_check
      _
    $region39: #{decoder_layer.15} parent=1 // pred_check_branch
      %446 = sbr.rel (0) target = $region41
    $region40: #{decoder_layer.15} parent=1 // pred_region
      %s448 = ssub.s32 256, 256
      %449 = vsyncadd [#allocation5], %s448
      %s450 = sshll.u32 [#allocation4], 4
      %s451 = int_to_ptr.vmem [resolvable:$true] %s450
      %456 = dma.vmem_to_hbm [thread:$0]  %s451, 256, %s7, [#allocation5], 128, 128, 8
    $region41: #{decoder_layer.15} parent=1 // pred_fallthru
      _
    // Predicated region
    $region42: #{decoder_layer.15} parent=1 // pred_check
      _
    $region43: #{decoder_layer.15} parent=1 // pred_check_branch
      %458 = sbr.rel (0) target = $region45
    $region44: #{decoder_layer.15} parent=1 // pred_region
      %459 = dma.done [#allocation5], 256
    $region45: #{decoder_layer.15} parent=1 // pred_fallthru
      _
    %460 = vsyncpa [#allocation5], 1

// kernel: decoder_layer.11
$region0: #{decoder_layer.11}
  #allocation0 [shape = 'u32[]', space=smem, size = 0x4, offset = 0x4, fixed_abs, tag = 'smem constant byte address 0x4 - core index']
  #allocation1 [shape = 'u32[144,128]{1,0:T(1,128)}', space=vmem, size = 0x12000, scoped, tag = 'internal scratch']
  #allocation2 [shape = 'bf16[16,128]{1,0:T(8,128)(2,1)}', space=vmem, size = 0x1000, scoped, tag = 'scratch operand']
  %s0 = inlined_call_operand.vmem [shape: f32[16,128], index: 0, kind: input, shape index: {}]
  %s1 = inlined_call_operand.vmem [shape: f32[1,128], index: 1, kind: input, shape index: {}]
  %s2 = inlined_call_operand.vmem [shape: f32[1,128], index: 2, kind: input, shape index: {}]
  %s3 = inlined_call_operand.vmem [shape: bf16[128,128], index: 3, kind: input, shape index: {}]
  %s4 = inlined_call_operand.vmem [shape: f32[1,128], index: 4, kind: input, shape index: {}]
  %s5 = inlined_call_operand.vmem [shape: bf16[16,128], index: 5, kind: output, shape index: {}]
  %s6 = sld [smem:[#allocation0]]
  $region34: #{decoder_layer.11} parent=0
    _
  %s8 = ssub.s32 1, %s6
  %s9 = scalar_select 0, %s8, %s6
  // Predicated region
  $region2: #{decoder_layer.11} parent=0 // pred_check
    _
  $region3: #{decoder_layer.11} parent=0 // pred_check_branch
    %11 = sbr.rel (0) target = $region5
  $region4: #{decoder_layer.11} parent=0 // pred_region
    _
  $region5: #{decoder_layer.11} parent=0 // pred_fallthru
    _
  // Predicated region
  $region6: #{decoder_layer.11} parent=0 // pred_check
    _
  $region7: #{decoder_layer.11} parent=0 // pred_check_branch
    %13 = sbr.rel (0) target = $region9
  $region8: #{decoder_layer.11} parent=0 // pred_region
    _
  $region9: #{decoder_layer.11} parent=0 // pred_fallthru
    _
  // Predicated region
  $region10: #{decoder_layer.11} parent=0 // pred_check
    _
  $region11: #{decoder_layer.11} parent=0 // pred_check_branch
    %15 = sbr.rel (0) target = $region13
  $region12: #{decoder_layer.11} parent=0 // pred_region
    _
  $region13: #{decoder_layer.11} parent=0 // pred_fallthru
    _
  // Predicated region
  $region14: #{decoder_layer.11} parent=0 // pred_check
    _
  $region15: #{decoder_layer.11} parent=0 // pred_check_branch
    %17 = sbr.rel (0) target = $region17
  $region16: #{decoder_layer.11} parent=0 // pred_region
    _
  $region17: #{decoder_layer.11} parent=0 // pred_fallthru
    _
  // Predicated region
  $region18: #{decoder_layer.11} parent=0 // pred_check
    _
  $region19: #{decoder_layer.11} parent=0 // pred_check_branch
    %19 = sbr.rel (0) target = $region21
  $region20: #{decoder_layer.11} parent=0 // pred_region
    _
  $region21: #{decoder_layer.11} parent=0 // pred_fallthru
    _
  %p21 = scmp.eq.s32.totalorder 0, 0
  // Predicated region
  $region22: #{decoder_layer.11} parent=0 // pred_check
    %p22 = pneg %p21
  $region23: #{decoder_layer.11} parent=0 // pred_check_branch
    %24 = sbr.rel (%p22) target = $region25
  $region24: #{decoder_layer.11} parent=0 // pred_region
    %v25 = vld [vmem:[%s0] sm:$0xff]
    %v26 = vld [vmem:[%s0 + $0x8] sm:$0xff]
    %27 = vadd.xlane.f32.xlu0 %v25
    %v28 = vpop.xlane.xlu0 %27
    %29 = vadd.xlane.f32.xlu0 %v26
    %v30 = vpop.xlane.xlu0 %29
    %v31 = vrcp.pop 128.0
    %v32 = vmul.f32 %v28, %v31
    %v33 = vmul.f32 %v30, %v31
    %v34 = vsub.f32 %v25, %v32
    %v35 = vsub.f32 %v26, %v33
    %v36 = vmul.f32 %v34, %v34
    %v37 = vmul.f32 %v35, %v35
    %38 = vadd.xlane.f32.xlu0 %v36
    %v39 = vpop.xlane.xlu0 %38
    %40 = vadd.xlane.f32.xlu0 %v37
    %v41 = vpop.xlane.xlu0 %40
    %v42 = vmul.f32 %v39, %v31
    %v43 = vmul.f32 %v41, %v31
    %v44 = vadd.f32 %v42, 1e-06
    %v45 = vadd.f32 %v43, 1e-06
    %v46 = vrsqrt.pop %v44
    %v47 = vrsqrt.pop %v45
    %v48 = vmul.f32 %v34, %v46
    %v49 = vmul.f32 %v35, %v47
    %v50 = vld [vmem:[%s1] sm:$0x1]
    %v52 = vlaneseq
    %v53 = vshrl.u32 %v52, 7
    %v54 = vsub.s32 0, %v53
    %v55 = vrot.slane %v50, %v54
    %v57 = vmul.f32 %v48, %v55
    %v58 = vmul.f32 %v49, %v55
    %v59 = vld [vmem:[%s2] sm:$0x1]
    %v61 = vlaneseq
    %v62 = vshrl.u32 %v61, 7
    %v63 = vsub.s32 0, %v62
    %v64 = vrot.slane %v59, %v63
    %v66 = vadd.f32 %v57, %v64
    %v67 = vadd.f32 %v58, %v64
    %v68 = vpack.c.bf16 %v67, %v66
    %v70 = vunpack.c.l.b16 %v68
    %v71 = vunpack.c.h.b16 %v68
    %v72 = vpack.c.b16 %v70, %v70
    %v73 = vpack.c.b16 %v71, %v71
    %76 = vst [vmem:[#allocation2] sm:$0xf] %v72
    %77 = vst [vmem:[#allocation2 + $0x4] sm:$0xf] %v73
  $region25: #{decoder_layer.11} parent=0 // pred_fallthru
    _
  %v78 = vld [vmem:[#allocation2] sm:$0xf]
  %v79 = vld [vmem:[#allocation2 + $0x4] sm:$0xf]
  %v80 = vld [vmem:[%s3] sm:$0xf]
  %v81 = vld [vmem:[%s3 + $0x4] sm:$0xf]
  %v82 = vld [vmem:[%s3 + $0x8] sm:$0xf]
  %v83 = vld [vmem:[%s3 + $0xc] sm:$0xf]
  %v84 = vld [vmem:[%s3 + $0x10] sm:$0xf]
  %v85 = vld [vmem:[%s3 + $0x14] sm:$0xf]
  %v86 = vld [vmem:[%s3 + $0x18] sm:$0xf]
  %v87 = vld [vmem:[%s3 + $0x1c] sm:$0xf]
  %v88 = vld [vmem:[%s3 + $0x20] sm:$0xf]
  %v89 = vld [vmem:[%s3 + $0x24] sm:$0xf]
  %v90 = vld [vmem:[%s3 + $0x28] sm:$0xf]
  %v91 = vld [vmem:[%s3 + $0x2c] sm:$0xf]
  %v92 = vld [vmem:[%s3 + $0x30] sm:$0xf]
  %v93 = vld [vmem:[%s3 + $0x34] sm:$0xf]
  %v94 = vld [vmem:[%s3 + $0x38] sm:$0xf]
  %v95 = vld [vmem:[%s3 + $0x3c] sm:$0xf]
  %v96 = vld [vmem:[%s4] sm:$0x1]
  %v98 = vlaneseq
  %v99 = vshrl.u32 %v98, 7
  %v100 = vsub.s32 0, %v99
  %v101 = vrot.slane %v96, %v100
  %v105 = vunpack.c.l.b16 %v78
  %v106 = vunpack.c.l.b16 %v79
  %v107 = vpack.c.b16 %v106, %v105
  %v125 = vunpack.c.l.b16 %v80
  %v126 = vunpack.c.l.b16 %v81
  %v127 = vunpack.c.l.b16 %v82
  %v128 = vunpack.c.l.b16 %v83
  %v129 = vunpack.c.l.b16 %v84
  %v130 = vunpack.c.l.b16 %v85
  %v131 = vunpack.c.l.b16 %v86
  %v132 = vunpack.c.l.b16 %v87
  %v133 = vunpack.c.l.b16 %v88
  %v134 = vunpack.c.l.b16 %v89
  %v135 = vunpack.c.l.b16 %v90
  %v136 = vunpack.c.l.b16 %v91
  %v137 = vunpack.c.l.b16 %v92
  %v138 = vunpack.c.l.b16 %v93
  %v139 = vunpack.c.l.b16 %v94
  %v140 = vunpack.c.l.b16 %v95
  %v141 = vpack.c.b16 %v126, %v125
  %v142 = vpack.c.b16 %v128, %v127
  %v143 = vpack.c.b16 %v130, %v129
  %v144 = vpack.c.b16 %v132, %v131
  %v145 = vpack.c.b16 %v134, %v133
  %v146 = vpack.c.b16 %v136, %v135
  %v147 = vpack.c.b16 %v138, %v137
  %v148 = vpack.c.b16 %v140, %v139
  %157 = vmatprep.subr.bf16.mxu0 0
  %158 = vmatpush1.bf16.msra.mxu0 %v148
  %159 = vmatprep.subr.bf16.mxu0 0
  %160 = vmatpush1.bf16.msra.mxu0 %v147
  %161 = vmatprep.subr.bf16.mxu0 0
  %162 = vmatpush1.bf16.msra.mxu0 %v146
  %163 = vmatprep.subr.bf16.mxu0 0
  %164 = vmatpush1.bf16.msra.mxu0 %v145
  %165 = vmatprep.subr.bf16.mxu0 0
  %166 = vmatpush1.bf16.msra.mxu0 %v144
  %167 = vmatprep.subr.bf16.mxu0 0
  %168 = vmatpush1.bf16.msra.mxu0 %v143
  %169 = vmatprep.subr.bf16.mxu0 0
  %170 = vmatpush1.bf16.msra.mxu0 %v142
  %171 = vmatprep.subr.bf16.mxu0 0
  %172 = vmatpush1.bf16.msra.mxu0 %v141
  %173 = vmatprep.subr.bf16.mxu0 0
  %174 = vmatpush2.bf16.msra.mxu0 0
  %175 = vmatprep.subr.bf16.mxu0 0
  %176 = vmatpush2.bf16.msra.mxu0 0
  %177 = vmatprep.subr.bf16.mxu0 0
  %178 = vmatpush2.bf16.msra.mxu0 0
  %179 = vmatprep.subr.bf16.mxu0 0
  %180 = vmatpush2.bf16.msra.mxu0 0
  %181 = vmatprep.subr.bf16.mxu0 0
  %182 = vmatpush2.bf16.msra.mxu0 0
  %183 = vmatprep.subr.bf16.mxu0 0
  %184 = vmatpush2.bf16.msra.mxu0 0
  %185 = vmatprep.subr.bf16.mxu0 0
  %186 = vmatpush2.bf16.msra.mxu0 0
  %187 = vmatprep.subr.bf16.mxu0 0
  %188 = vmatpush2.bf16.msra.mxu0 0
  %189 = vmatprep.mubr.bf16.mxu0 0
  %190 = vmatmul.mubr.bf16.gmra.mxu0 %v107
  %v191 = vpop.f32.mrf.mxu0
  %v192 = vadd.f32 %v101, %v191
  %v193 = vpop.f32.mrf.mxu0
  %v194 = vpop.f32.mrf.mxu0
  %v195 = vadd.f32 %v101, %v194
  %v196 = vpop.f32.mrf.mxu0
  %197 = vdwg.mxu0
  %v198 = vpack.c.bf16 %v195, %v192
  %v200 = vunpack.c.l.b16 %v198
  %v201 = vunpack.c.h.b16 %v198
  %v202 = vpack.c.b16 %v200, %v200
  %v203 = vpack.c.b16 %v201, %v201
  %206 = vst [vmem:[%s5] sm:$0xf] %v202
  %207 = vst [vmem:[%s5 + $0x4] sm:$0xf] %v203
  // Predicated region
  $region26: #{decoder_layer.11} parent=0 // pred_check
    _
  $region27: #{decoder_layer.11} parent=0 // pred_check_branch
    %209 = sbr.rel (0) target = $region29
  $region28: #{decoder_layer.11} parent=0 // pred_region
    _
  $region29: #{decoder_layer.11} parent=0 // pred_fallthru
    _
  // Predicated region
  $region30: #{decoder_layer.11} parent=0 // pred_check
    _
  $region31: #{decoder_layer.11} parent=0 // pred_check_branch
    %211 = sbr.rel (0) target = $region33
  $region32: #{decoder_layer.11} parent=0 // pred_region
    _
  $region33: #{decoder_layer.11} parent=0 // pred_fallthru
    _

// kernel: decoder_layer.13
$region0: #{decoder_layer.13}
  #allocation0 [shape = 'u32[]', space=smem, size = 0x4, offset = 0x4, fixed_abs, tag = 'smem constant byte address 0x4 - core index']
  #allocation1 [shape = 'u32[144,128]{1,0:T(1,128)}', space=vmem, size = 0x12000, scoped, tag = 'internal scratch']
  %s0 = inlined_call_operand.vmem [shape: bf16[2,8,128], index: 0, kind: input, shape index: {}]
  %s1 = inlined_call_operand.vmem [shape: bf16[2,8,256], index: 1, kind: input, shape index: {}, may-alias: {1,2}]
  %s2 = inlined_call_operand.vmem [shape: bf16[2,8,256], index: 2, kind: input, shape index: {}, may-alias: {1,2}]
  %s3 = inlined_call_operand.vmem [shape: bf16[2,8,128], index: 3, kind: output, shape index: {}]
  %s4 = sld [smem:[#allocation0]]
  $region45: #{decoder_layer.13} parent=0
    _
  %s6 = ssub.s32 1, %s4
  %s7 = scalar_select 0, %s6, %s4
  loop: start=0, step=1, limit=4
  $region2: #{decoder_layer.13} parent=0 // loop_pre_header
    _
  $region3: #{decoder_layer.13} parent=0 // loop_header
    %s9 = sphi 0, %s13
    %p10 = scmp.ge.s32.totalorder %s9, 4
    %s16 = sphi 0, %s28
    %s17 = sphi 0, %s24
    %s18 = sphi 0, %s16
    %s19 = sphi 0, %s17
    %s20 = sphi 0, %s18
    %s21 = sphi 0, %s19
    %s33 = sphi 0, %s35
    %s36 = sphi 0, %s33
    %s37 = sphi 0, %s36
    %s53 = sphi 0, %s37
    %s59 = sphi 0, %s61
    %s62 = sphi 0, %s59
    %s63 = sphi 0, %s62
    %s79 = sphi 0, %s63
    %s85 = sphi 0, %s87
    %s88 = sphi 0, %s85
    %s89 = sphi 0, %s88
    %s105 = sphi 0, %s89
    %s113 = sphi 0, %s115
    %s116 = sphi 0, %s113
    %s117 = sphi 0, %s116
    %s133 = sphi 0, %s117
  $region4: #{decoder_layer.13} parent=0 // loop_header_branch
    %12 = sbr.rel (%p10) target = $region8
  $region5: #{decoder_layer.13} parent=0 // loop_body
    %s14 = ssub.s32 %s9, 1
    %s15 = ssub.s32 %s9, 2
    %s22 = sadd.s32 1, %s17
    %p23 = scmp.ge.s32.totalorder %s22, 1
    %s24 = scalar_select %p23, 0, %s22
    %s25 = sadd.s32 1, %s16
    %s26 = scalar_select %p23, %s25, %s16
    %p27 = scmp.ge.s32.totalorder %s26, 2
    %s28 = scalar_select %p27, 0, %s26
    %s29 = ssub.s32 %s16, %s28
    %s30 = ssub.s32 %s17, %s24
    %s31 = sor.u32 %s29, %s30
    %p32 = scmp.eq.s32.totalorder %s31, 0
    %s34 = sadd.s32 %s33, 1
    %s35 = scalar_select %p32, %s33, %s34
    %p38 = pneg %p32
    %p39 = scmp.eq.s32.totalorder %s9, 1
    %p40 = por %p38, %p39
    %p41 = scmp.ne.s32.totalorder %s33, %s36
    %p42 = scmp.eq.s32.totalorder %s9, 0
    %p43 = por %p41, %p42
    %p44 = scmp.ne.s32.totalorder %s33, %s36
    %p45 = scmp.eq.s32.totalorder %s14, 1
    %p46 = por %p44, %p45
    %p47 = scmp.ne.s32.totalorder %s36, %s37
    %p48 = scmp.eq.s32.totalorder %s14, 0
    %p49 = por %p47, %p48
    %p50 = scmp.ne.s32.totalorder %s36, %s37
    %p51 = scmp.eq.s32.totalorder %s15, 1
    %p52 = por %p50, %p51
    %p54 = scmp.ne.s32.totalorder %s37, %s53
    %p55 = scmp.eq.s32.totalorder %s15, 0
    %p56 = por %p54, %p55
    %s57 = ssub.s32 %s16, %s28
    %p58 = scmp.eq.s32.totalorder %s57, 0
    %s60 = sadd.s32 %s59, 1
    %s61 = scalar_select %p58, %s59, %s60
    %p64 = pneg %p58
    %p65 = scmp.eq.s32.totalorder %s9, 1
    %p66 = por %p64, %p65
    %p67 = scmp.ne.s32.totalorder %s59, %s62
    %p68 = scmp.eq.s32.totalorder %s9, 0
    %p69 = por %p67, %p68
    %p70 = scmp.ne.s32.totalorder %s59, %s62
    %p71 = scmp.eq.s32.totalorder %s14, 1
    %p72 = por %p70, %p71
    %p73 = scmp.ne.s32.totalorder %s62, %s63
    %p74 = scmp.eq.s32.totalorder %s14, 0
    %p75 = por %p73, %p74
    %p76 = scmp.ne.s32.totalorder %s62, %s63
    %p77 = scmp.eq.s32.totalorder %s15, 1
    %p78 = por %p76, %p77
    %p80 = scmp.ne.s32.totalorder %s63, %s79
    %p81 = scmp.eq.s32.totalorder %s15, 0
    %p82 = por %p80, %p81
    %s83 = ssub.s32 %s16, %s28
    %p84 = scmp.eq.s32.totalorder %s83, 0
    %s86 = sadd.s32 %s85, 1
    %s87 = scalar_select %p84, %s85, %s86
    %p90 = pneg %p84
    %p91 = scmp.eq.s32.totalorder %s9, 1
    %p92 = por %p90, %p91
    %p93 = scmp.ne.s32.totalorder %s85, %s88
    %p94 = scmp.eq.s32.totalorder %s9, 0
    %p95 = por %p93, %p94
    %p96 = scmp.ne.s32.totalorder %s85, %s88
    %p97 = scmp.eq.s32.totalorder %s14, 1
    %p98 = por %p96, %p97
    %p99 = scmp.ne.s32.totalorder %s88, %s89
    %p100 = scmp.eq.s32.totalorder %s14, 0
    %p101 = por %p99, %p100
    %p102 = scmp.ne.s32.totalorder %s88, %s89
    %p103 = scmp.eq.s32.totalorder %s15, 1
    %p104 = por %p102, %p103
    %p106 = scmp.ne.s32.totalorder %s89, %s105
    %p107 = scmp.eq.s32.totalorder %s15, 0
    %p108 = por %p106, %p107
    %s109 = ssub.s32 %s16, %s28
    %s110 = ssub.s32 %s17, %s24
    %s111 = sor.u32 %s109, %s110
    %p112 = scmp.eq.s32.totalorder %s111, 0
    %s114 = sadd.s32 %s113, 1
    %s115 = scalar_select %p112, %s113, %s114
    %p118 = pneg %p112
    %p119 = scmp.eq.s32.totalorder %s9, 1
    %p120 = por %p118, %p119
    %p121 = scmp.ne.s32.totalorder %s113, %s116
    %p122 = scmp.eq.s32.totalorder %s9, 0
    %p123 = por %p121, %p122
    %p124 = scmp.ne.s32.totalorder %s113, %s116
    %p125 = scmp.eq.s32.totalorder %s14, 1
    %p126 = por %p124, %p125
    %p127 = scmp.ne.s32.totalorder %s116, %s117
    %p128 = scmp.eq.s32.totalorder %s14, 0
    %p129 = por %p127, %p128
    %p130 = scmp.ne.s32.totalorder %s116, %s117
    %p131 = scmp.eq.s32.totalorder %s15, 1
    %p132 = por %p130, %p131
    %p134 = scmp.ne.s32.totalorder %s117, %s133
    %p135 = scmp.eq.s32.totalorder %s15, 0
    %p136 = por %p134, %p135
    %p137 = scmp.le.s32.totalorder 1, %s9
    %p138 = scmp.lt.s32.totalorder %s9, 3
    %p139 = pnand %p137, %p138
    %p140 = pneg %p139
    // Predicated region
    $region9: #{decoder_layer.13} parent=5 // pred_check
      _
    $region10: #{decoder_layer.13} parent=5 // pred_check_branch
      %142 = sbr.rel (%p139) target = $region12
    $region11: #{decoder_layer.13} parent=5 // pred_region
      %s143 = ssub.s32 %s9, 1
    $region12: #{decoder_layer.13} parent=5 // pred_fallthru
      _
    %p144 = scmp.lt.s32.totalorder %s9, 2
    // Predicated region
    $region13: #{decoder_layer.13} parent=5 // pred_check
      %p145 = pneg %p144
    $region14: #{decoder_layer.13} parent=5 // pred_check_branch
      %147 = sbr.rel (%p145) target = $region16
    $region15: #{decoder_layer.13} parent=5 // pred_region
      // Predicated region
      $region17: #{decoder_layer.13} parent=15 // pred_check
        %p148 = pneg %p43
      $region18: #{decoder_layer.13} parent=15 // pred_check_branch
        %150 = sbr.rel (%p148) target = $region20
      $region19: #{decoder_layer.13} parent=15 // pred_region
        %p151 = scmp.lt.s32.totalorder %s16, 1
        %s152 = scalar_select %p151, %s16, 1
        %p153 = scmp.lt.s32.totalorder %s17, 0
        %s154 = scalar_select %p153, %s17, 0
        %s155 = sadd.s32 %s154, %s152
        %s156 = smul.addr %s155, 4
        %s157 = scalar_lea.vmem %s0, %s156
      $region20: #{decoder_layer.13} parent=15 // pred_fallthru
        _
      // Predicated region
      $region21: #{decoder_layer.13} parent=15 // pred_check
        %p158 = pneg %p69
      $region22: #{decoder_layer.13} parent=15 // pred_check_branch
        %160 = sbr.rel (%p158) target = $region24
      $region23: #{decoder_layer.13} parent=15 // pred_region
        %p161 = scmp.lt.s32.totalorder %s16, 1
        %s162 = scalar_select %p161, %s16, 1
        %s163 = smul.addr %s162, 2
        %s164 = smul.addr %s163, 4
        %s165 = scalar_lea.vmem %s1, %s164
      $region24: #{decoder_layer.13} parent=15 // pred_fallthru
        _
      // Predicated region
      $region25: #{decoder_layer.13} parent=15 // pred_check
        %p166 = pneg %p95
      $region26: #{decoder_layer.13} parent=15 // pred_check_branch
        %168 = sbr.rel (%p166) target = $region28
      $region27: #{decoder_layer.13} parent=15 // pred_region
        %p169 = scmp.lt.s32.totalorder %s16, 1
        %s170 = scalar_select %p169, %s16, 1
        %s171 = smul.addr %s170, 2
        %s172 = sadd.s32 1, %s171
        %s173 = smul.addr %s172, 4
        %s174 = scalar_lea.vmem %s2, %s173
      $region28: #{decoder_layer.13} parent=15 // pred_fallthru
        _
    $region16: #{decoder_layer.13} parent=5 // pred_fallthru
      _
    %p175 = scmp.le.s32.totalorder 1, %s9
    %p176 = scmp.lt.s32.totalorder %s9, 3
    %p177 = pnand %p175, %p176
    %p178 = pneg %p177
    // Predicated region
    $region29: #{decoder_layer.13} parent=5 // pred_check
      _
    $region30: #{decoder_layer.13} parent=5 // pred_check_branch
      %180 = sbr.rel (%p177) target = $region32
    $region31: #{decoder_layer.13} parent=5 // pred_region
      %s181 = ssub.s32 %s9, 1
      %p182 = scmp.lt.s32.totalorder %s18, 1
      %s183 = scalar_select %p182, %s18, 1
      %p184 = scmp.lt.s32.totalorder %s19, 0
      %s185 = scalar_select %p184, %s19, 0
      %s186 = sadd.s32 %s185, %s183
      %s187 = smul.addr %s186, 4
      %s188 = scalar_lea.vmem %s0, %s187
      %p189 = pneg %p49
      %p190 = pneg %p46
      %p191 = scmp.lt.s32.totalorder %s18, 1
      %s192 = scalar_select %p191, %s18, 1
      %s193 = smul.addr %s192, 2
      %s194 = smul.addr %s193, 4
      %s195 = scalar_lea.vmem %s1, %s194
      %p196 = pneg %p75
      %p197 = pneg %p72
      %p198 = scmp.lt.s32.totalorder %s18, 1
      %s199 = scalar_select %p198, %s18, 1
      %s200 = smul.addr %s199, 2
      %s201 = sadd.s32 1, %s200
      %s202 = smul.addr %s201, 4
      %s203 = scalar_lea.vmem %s2, %s202
      %p204 = pneg %p101
      %p205 = pneg %p98
      %p206 = pneg %p129
      %p207 = pneg %p126
      %p208 = scmp.lt.s32.totalorder %s18, 1
      %s209 = scalar_select %p208, %s18, 1
      %p210 = scmp.lt.s32.totalorder %s19, 0
      %s211 = scalar_select %p210, %s19, 0
      %s212 = sadd.s32 %s211, %s209
      %s213 = smul.addr %s212, 4
      %s214 = scalar_lea.vmem %s3, %s213
      %p215 = scmp.lt.s32.totalorder %s18, 1
      %s216 = scalar_select %p215, %s18, 1
      %p217 = scmp.lt.s32.totalorder %s19, 0
      %s218 = scalar_select %p217, %s19, 0
      %s219 = sadd.s32 %s218, %s216
      %s220 = smul.addr %s219, 4
      %s221 = scalar_lea.vmem %s0, %s220
      %p222 = scmp.lt.s32.totalorder %s18, 1
      %s223 = scalar_select %p222, %s18, 1
      %s224 = smul.addr %s223, 2
      %s225 = smul.addr %s224, 4
      %s226 = scalar_lea.vmem %s1, %s225
      %p227 = scmp.lt.s32.totalorder %s18, 1
      %s228 = scalar_select %p227, %s18, 1
      %s229 = smul.addr %s228, 2
      %s230 = sadd.s32 1, %s229
      %s231 = smul.addr %s230, 4
      %s232 = scalar_lea.vmem %s2, %s231
      %p233 = scmp.lt.s32.totalorder %s18, 1
      %s234 = scalar_select %p233, %s18, 1
      %p235 = scmp.lt.s32.totalorder %s19, 0
      %s236 = scalar_select %p235, %s19, 0
      %s237 = sadd.s32 %s236, %s234
      %s238 = smul.addr %s237, 4
      %s239 = scalar_lea.vmem %s3, %s238
      %v241 = vld [vmem:[%s221] sm:$0xf]
      %v242 = vld [vmem:[%s226] sm:$0xf]
      %v243 = vld [vmem:[%s232] sm:$0xf]
      %vm244 = vcmask 261120
      %v246 = vsel %vm244, %v241, 0
      %v249 = vsel %vm244, %v242, 0
      %251 = vmatprep.subr.bf16.mxu0 0
      %252 = vmatpush1.bf16.xpose.msra.mxu0 0
      %253 = vmatprep.subr.bf16.mxu0 0
      %254 = vmatpush1.bf16.xpose.msra.mxu0 0
      %255 = vmatprep.subr.bf16.mxu0 0
      %256 = vmatpush1.bf16.xpose.msra.mxu0 0
      %257 = vmatprep.subr.bf16.mxu0 0
      %258 = vmatpush1.bf16.xpose.msra.mxu0 0
      %259 = vmatprep.subr.bf16.mxu0 0
      %260 = vmatpush1.bf16.xpose.msra.mxu0 0
      %261 = vmatprep.subr.bf16.mxu0 0
      %262 = vmatpush1.bf16.xpose.msra.mxu0 0
      %263 = vmatprep.subr.bf16.mxu0 0
      %264 = vmatpush1.bf16.xpose.msra.mxu0 0
      %265 = vmatprep.subr.bf16.mxu0 0
      %266 = vmatpush1.bf16.xpose.msra.mxu0 %v249
      %267 = vmatprep.subr.bf16.mxu0 0
      %268 = vmatpush2.bf16.xpose.msra.mxu0 0
      %269 = vmatprep.subr.bf16.mxu0 0
      %270 = vmatpush2.bf16.xpose.msra.mxu0 0
      %271 = vmatprep.subr.bf16.mxu0 0
      %272 = vmatpush2.bf16.xpose.msra.mxu0 0
      %273 = vmatprep.subr.bf16.mxu0 0
      %274 = vmatpush2.bf16.xpose.msra.mxu0 0
      %275 = vmatprep.subr.bf16.mxu0 0
      %276 = vmatpush2.bf16.xpose.msra.mxu0 0
      %277 = vmatprep.subr.bf16.mxu0 0
      %278 = vmatpush2.bf16.xpose.msra.mxu0 0
      %279 = vmatprep.subr.bf16.mxu0 0
      %280 = vmatpush2.bf16.xpose.msra.mxu0 0
      %281 = vmatprep.subr.bf16.mxu0 0
      %282 = vmatpush2.bf16.xpose.msra.mxu0 0
      %283 = vmatprep.mubr.bf16.mxu0 0
      %284 = vmatmul.mubr.bf16.gmra.mxu0 %v246
      %v285 = vpop.f32.mrf.mxu0
      %v286 = vadd.f32 0.0, %v285
      %v287 = vpop.f32.mrf.mxu0
      %v288 = vpop.f32.mrf.mxu0
      %v289 = vpop.f32.mrf.mxu0
      %290 = vdwg.mxu0
      %v291 = vmul.f32 %v286, 0.17677669
      %vm292 = vcmask 64512
      %v293 = vsel %vm292, %v291, -inf
      %294 = vmax.xlane.f32.xlu0 %v293
      %v295 = vpop.xlane.xlu0 %294
      %v296 = vsub.f32 %v291, %v295
      %v297 = vmul.f32 %v296, 1.442695
      %v298 = vpow.pop %v297
      %v299 = vsel %vm292, %v298, 0.0
      %300 = vadd.xlane.f32.xlu0 %v299
      %v301 = vpop.xlane.xlu0 %300
      %v302 = vrcp.pop %v301
      %v303 = vmul.f32 %v298, %v302
      %v304 = vpack.c.bf16 %v303, %v303
      %v306 = vsel %vm292, %v304, 0
      %vm308 = vcmask 1043456
      %v310 = vsel %vm308, %v243, 0
      %312 = vmatprep.subr.bf16.mxu0 0
      %313 = vmatpush1.bf16.msra.mxu0 0
      %314 = vmatprep.subr.bf16.mxu0 0
      %315 = vmatpush1.bf16.msra.mxu0 0
      %316 = vmatprep.subr.bf16.mxu0 0
      %317 = vmatpush1.bf16.msra.mxu0 0
      %318 = vmatprep.subr.bf16.mxu0 0
      %319 = vmatpush1.bf16.msra.mxu0 0
      %320 = vmatprep.subr.bf16.mxu0 0
      %321 = vmatpush1.bf16.msra.mxu0 0
      %322 = vmatprep.subr.bf16.mxu0 0
      %323 = vmatpush1.bf16.msra.mxu0 0
      %324 = vmatprep.subr.bf16.mxu0 0
      %325 = vmatpush1.bf16.msra.mxu0 0
      %326 = vmatprep.subr.bf16.mxu0 0
      %327 = vmatpush1.bf16.msra.mxu0 %v310
      %328 = vmatprep.subr.bf16.mxu0 0
      %329 = vmatpush2.bf16.msra.mxu0 0
      %330 = vmatprep.subr.bf16.mxu0 0
      %331 = vmatpush2.bf16.msra.mxu0 0
      %332 = vmatprep.subr.bf16.mxu0 0
      %333 = vmatpush2.bf16.msra.mxu0 0
      %334 = vmatprep.subr.bf16.mxu0 0
      %335 = vmatpush2.bf16.msra.mxu0 0
      %336 = vmatprep.subr.bf16.mxu0 0
      %337 = vmatpush2.bf16.msra.mxu0 0
      %338 = vmatprep.subr.bf16.mxu0 0
      %339 = vmatpush2.bf16.msra.mxu0 0
      %340 = vmatprep.subr.bf16.mxu0 0
      %341 = vmatpush2.bf16.msra.mxu0 0
      %342 = vmatprep.subr.bf16.mxu0 0
      %343 = vmatpush2.bf16.msra.mxu0 0
      %344 = vmatprep.mubr.bf16.mxu0 0
      %345 = vmatmul.mubr.bf16.gmra.mxu0 %v306
      %v346 = vpop.f32.mrf.mxu0
      %v347 = vadd.f32 0.0, %v346
      %v348 = vpop.f32.mrf.mxu0
      %v349 = vpop.f32.mrf.mxu0
      %v350 = vpop.f32.mrf.mxu0
      %351 = vdwg.mxu0
      %v352 = vpack.c.bf16 %v347, %v347
      %vm353 = vcmask 257024
      %354 = vst.msk [vmem:[%s239] sm:$0xf] %vm353, %v352
      %v356 = vunpack.c.l.b16 %v241
      %v357 = vpack.c.b16 %v356, %v356
      %358 = vrot.lane.b32.xlu0 %v357, 96
      %v359 = vpop.permute.xlu0 %358
      %v361 = vunpack.c.l.b16 %v242
      %v362 = vpack.c.b16 %v361, %v361
      %363 = vrot.lane.b32.xlu0 %v362, 96
      %v364 = vpop.permute.xlu0 %363
      %v366 = vsel %vm244, %v359, 0
      %v369 = vsel %vm244, %v364, 0
      %371 = vmatprep.subr.bf16.mxu0 0
      %372 = vmatpush1.bf16.xpose.msra.mxu0 0
      %373 = vmatprep.subr.bf16.mxu0 0
      %374 = vmatpush1.bf16.xpose.msra.mxu0 0
      %375 = vmatprep.subr.bf16.mxu0 0
      %376 = vmatpush1.bf16.xpose.msra.mxu0 0
      %377 = vmatprep.subr.bf16.mxu0 0
      %378 = vmatpush1.bf16.xpose.msra.mxu0 0
      %379 = vmatprep.subr.bf16.mxu0 0
      %380 = vmatpush1.bf16.xpose.msra.mxu0 0
      %381 = vmatprep.subr.bf16.mxu0 0
      %382 = vmatpush1.bf16.xpose.msra.mxu0 0
      %383 = vmatprep.subr.bf16.mxu0 0
      %384 = vmatpush1.bf16.xpose.msra.mxu0 0
      %385 = vmatprep.subr.bf16.mxu0 0
      %386 = vmatpush1.bf16.xpose.msra.mxu0 %v369
      %387 = vmatprep.subr.bf16.mxu0 0
      %388 = vmatpush2.bf16.xpose.msra.mxu0 0
      %389 = vmatprep.subr.bf16.mxu0 0
      %390 = vmatpush2.bf16.xpose.msra.mxu0 0
      %391 = vmatprep.subr.bf16.mxu0 0
      %392 = vmatpush2.bf16.xpose.msra.mxu0 0
      %393 = vmatprep.subr.bf16.mxu0 0
      %394 = vmatpush2.bf16.xpose.msra.mxu0 0
      %395 = vmatprep.subr.bf16.mxu0 0
      %396 = vmatpush2.bf16.xpose.msra.mxu0 0
      %397 = vmatprep.subr.bf16.mxu0 0
      %398 = vmatpush2.bf16.xpose.msra.mxu0 0
      %399 = vmatprep.subr.bf16.mxu0 0
      %400 = vmatpush2.bf16.xpose.msra.mxu0 0
      %401 = vmatprep.subr.bf16.mxu0 0
      %402 = vmatpush2.bf16.xpose.msra.mxu0 0
      %403 = vmatprep.mubr.bf16.mxu0 0
      %404 = vmatmul.mubr.bf16.gmra.mxu0 %v366
      %v405 = vpop.f32.mrf.mxu0
      %v406 = vadd.f32 0.0, %v405
      %v407 = vpop.f32.mrf.mxu0
      %v408 = vpop.f32.mrf.mxu0
      %v409 = vpop.f32.mrf.mxu0
      %410 = vdwg.mxu0
      %v411 = vmul.f32 %v406, 0.17677669
      %v412 = vsel %vm292, %v411, -inf
      %413 = vmax.xlane.f32.xlu0 %v412
      %v414 = vpop.xlane.xlu0 %413
      %v415 = vsub.f32 %v411, %v414
      %v416 = vmul.f32 %v415, 1.442695
      %v417 = vpow.pop %v416
      %v418 = vsel %vm292, %v417, 0.0
      %419 = vadd.xlane.f32.xlu0 %v418
      %v420 = vpop.xlane.xlu0 %419
      %v421 = vrcp.pop %v420
      %v422 = vmul.f32 %v417, %v421
      %v423 = vpack.c.bf16 %v422, %v422
      %v425 = vunpack.c.l.b16 %v243
      %v426 = vpack.c.b16 %v425, %v425
      %427 = vrot.lane.b32.xlu0 %v426, 96
      %v428 = vpop.permute.xlu0 %427
      %v430 = vsel %vm292, %v423, 0
      %v433 = vsel %vm308, %v428, 0
      %435 = vmatprep.subr.bf16.mxu0 0
      %436 = vmatpush1.bf16.msra.mxu0 0
      %437 = vmatprep.subr.bf16.mxu0 0
      %438 = vmatpush1.bf16.msra.mxu0 0
      %439 = vmatprep.subr.bf16.mxu0 0
      %440 = vmatpush1.bf16.msra.mxu0 0
      %441 = vmatprep.subr.bf16.mxu0 0
      %442 = vmatpush1.bf16.msra.mxu0 0
      %443 = vmatprep.subr.bf16.mxu0 0
      %444 = vmatpush1.bf16.msra.mxu0 0
      %445 = vmatprep.subr.bf16.mxu0 0
      %446 = vmatpush1.bf16.msra.mxu0 0
      %447 = vmatprep.subr.bf16.mxu0 0
      %448 = vmatpush1.bf16.msra.mxu0 0
      %449 = vmatprep.subr.bf16.mxu0 0
      %450 = vmatpush1.bf16.msra.mxu0 %v433
      %451 = vmatprep.subr.bf16.mxu0 0
      %452 = vmatpush2.bf16.msra.mxu0 0
      %453 = vmatprep.subr.bf16.mxu0 0
      %454 = vmatpush2.bf16.msra.mxu0 0
      %455 = vmatprep.subr.bf16.mxu0 0
      %456 = vmatpush2.bf16.msra.mxu0 0
      %457 = vmatprep.subr.bf16.mxu0 0
      %458 = vmatpush2.bf16.msra.mxu0 0
      %459 = vmatprep.subr.bf16.mxu0 0
      %460 = vmatpush2.bf16.msra.mxu0 0
      %461 = vmatprep.subr.bf16.mxu0 0
      %462 = vmatpush2.bf16.msra.mxu0 0
      %463 = vmatprep.subr.bf16.mxu0 0
      %464 = vmatpush2.bf16.msra.mxu0 0
      %465 = vmatprep.subr.bf16.mxu0 0
      %466 = vmatpush2.bf16.msra.mxu0 0
      %467 = vmatprep.mubr.bf16.mxu0 0
      %468 = vmatmul.mubr.bf16.gmra.mxu0 %v430
      %v469 = vpop.f32.mrf.mxu0
      %v470 = vadd.f32 0.0, %v469
      %v471 = vpop.f32.mrf.mxu0
      %v472 = vpop.f32.mrf.mxu0
      %v473 = vpop.f32.mrf.mxu0
      %474 = vdwg.mxu0
      %v475 = vpack.c.bf16 %v470, %v470
      %v477 = vunpack.c.l.b16 %v475
      %v478 = vpack.c.b16 %v477, %v477
      %479 = vrot.lane.b32.xlu0 %v478, 32
      %v480 = vpop.permute.xlu0 %479
      %vm482 = vcmask 519424
      %483 = vst.msk [vmem:[%s239] sm:$0xf] %vm482, %v480
      %484 = vrot.lane.b32.xlu0 %v357, 64
      %v485 = vpop.permute.xlu0 %484
      %486 = vrot.lane.b32.xlu0 %v362, 64
      %v487 = vpop.permute.xlu0 %486
      %v489 = vsel %vm244, %v485, 0
      %v492 = vsel %vm244, %v487, 0
      %494 = vmatprep.subr.bf16.mxu0 0
      %495 = vmatpush1.bf16.xpose.msra.mxu0 0
      %496 = vmatprep.subr.bf16.mxu0 0
      %497 = vmatpush1.bf16.xpose.msra.mxu0 0
      %498 = vmatprep.subr.bf16.mxu0 0
      %499 = vmatpush1.bf16.xpose.msra.mxu0 0
      %500 = vmatprep.subr.bf16.mxu0 0
      %501 = vmatpush1.bf16.xpose.msra.mxu0 0
      %502 = vmatprep.subr.bf16.mxu0 0
      %503 = vmatpush1.bf16.xpose.msra.mxu0 0
      %504 = vmatprep.subr.bf16.mxu0 0
      %505 = vmatpush1.bf16.xpose.msra.mxu0 0
      %506 = vmatprep.subr.bf16.mxu0 0
      %507 = vmatpush1.bf16.xpose.msra.mxu0 0
      %508 = vmatprep.subr.bf16.mxu0 0
      %509 = vmatpush1.bf16.xpose.msra.mxu0 %v492
      %510 = vmatprep.subr.bf16.mxu0 0
      %511 = vmatpush2.bf16.xpose.msra.mxu0 0
      %512 = vmatprep.subr.bf16.mxu0 0
      %513 = vmatpush2.bf16.xpose.msra.mxu0 0
      %514 = vmatprep.subr.bf16.mxu0 0
      %515 = vmatpush2.bf16.xpose.msra.mxu0 0
      %516 = vmatprep.subr.bf16.mxu0 0
      %517 = vmatpush2.bf16.xpose.msra.mxu0 0
      %518 = vmatprep.subr.bf16.mxu0 0
      %519 = vmatpush2.bf16.xpose.msra.mxu0 0
      %520 = vmatprep.subr.bf16.mxu0 0
      %521 = vmatpush2.bf16.xpose.msra.mxu0 0
      %522 = vmatprep.subr.bf16.mxu0 0
      %523 = vmatpush2.bf16.xpose.msra.mxu0 0
      %524 = vmatprep.subr.bf16.mxu0 0
      %525 = vmatpush2.bf16.xpose.msra.mxu0 0
      %526 = vmatprep.mubr.bf16.mxu0 0
      %527 = vmatmul.mubr.bf16.gmra.mxu0 %v489
      %v528 = vpop.f32.mrf.mxu0
      %v529 = vadd.f32 0.0, %v528
      %v530 = vpop.f32.mrf.mxu0
      %v531 = vpop.f32.mrf.mxu0
      %v532 = vpop.f32.mrf.mxu0
      %533 = vdwg.mxu0
      %v534 = vmul.f32 %v529, 0.17677669
      %v535 = vsel %vm292, %v534, -inf
      %536 = vmax.xlane.f32.xlu0 %v535
      %v537 = vpop.xlane.xlu0 %536
      %v538 = vsub.f32 %v534, %v537
      %v539 = vmul.f32 %v538, 1.442695
      %v540 = vpow.pop %v539
      %v541 = vsel %vm292, %v540, 0.0
      %542 = vadd.xlane.f32.xlu0 %v541
      %v543 = vpop.xlane.xlu0 %542
      %v544 = vrcp.pop %v543
      %v545 = vmul.f32 %v540, %v544
      %v546 = vpack.c.bf16 %v545, %v545
      %547 = vrot.lane.b32.xlu0 %v426, 64
      %v548 = vpop.permute.xlu0 %547
      %v550 = vsel %vm292, %v546, 0
      %v553 = vsel %vm308, %v548, 0
      %555 = vmatprep.subr.bf16.mxu0 0
      %556 = vmatpush1.bf16.msra.mxu0 0
      %557 = vmatprep.subr.bf16.mxu0 0
      %558 = vmatpush1.bf16.msra.mxu0 0
      %559 = vmatprep.subr.bf16.mxu0 0
      %560 = vmatpush1.bf16.msra.mxu0 0
      %561 = vmatprep.subr.bf16.mxu0 0
      %562 = vmatpush1.bf16.msra.mxu0 0
      %563 = vmatprep.subr.bf16.mxu0 0
      %564 = vmatpush1.bf16.msra.mxu0 0
      %565 = vmatprep.subr.bf16.mxu0 0
      %566 = vmatpush1.bf16.msra.mxu0 0
      %567 = vmatprep.subr.bf16.mxu0 0
      %568 = vmatpush1.bf16.msra.mxu0 0
      %569 = vmatprep.subr.bf16.mxu0 0
      %570 = vmatpush1.bf16.msra.mxu0 %v553
      %571 = vmatprep.subr.bf16.mxu0 0
      %572 = vmatpush2.bf16.msra.mxu0 0
      %573 = vmatprep.subr.bf16.mxu0 0
      %574 = vmatpush2.bf16.msra.mxu0 0
      %575 = vmatprep.subr.bf16.mxu0 0
      %576 = vmatpush2.bf16.msra.mxu0 0
      %577 = vmatprep.subr.bf16.mxu0 0
      %578 = vmatpush2.bf16.msra.mxu0 0
      %579 = vmatprep.subr.bf16.mxu0 0
      %580 = vmatpush2.bf16.msra.mxu0 0
      %581 = vmatprep.subr.bf16.mxu0 0
      %582 = vmatpush2.bf16.msra.mxu0 0
      %583 = vmatprep.subr.bf16.mxu0 0
      %584 = vmatpush2.bf16.msra.mxu0 0
      %585 = vmatprep.subr.bf16.mxu0 0
      %586 = vmatpush2.bf16.msra.mxu0 0
      %587 = vmatprep.mubr.bf16.mxu0 0
      %588 = vmatmul.mubr.bf16.gmra.mxu0 %v550
      %v589 = vpop.f32.mrf.mxu0
      %v590 = vadd.f32 0.0, %v589
      %v591 = vpop.f32.mrf.mxu0
      %v592 = vpop.f32.mrf.mxu0
      %v593 = vpop.f32.mrf.mxu0
      %594 = vdwg.mxu0
      %v595 = vpack.c.bf16 %v590, %v590
      %v597 = vunpack.c.l.b16 %v595
      %v598 = vpack.c.b16 %v597, %v597
      %599 = vrot.lane.b32.xlu0 %v598, 64
      %v600 = vpop.permute.xlu0 %599
      %vm602 = vcmask 781824
      %603 = vst.msk [vmem:[%s239] sm:$0xf] %vm602, %v600
      %604 = vrot.lane.b32.xlu0 %v357, 32
      %v605 = vpop.permute.xlu0 %604
      %606 = vrot.lane.b32.xlu0 %v362, 32
      %v607 = vpop.permute.xlu0 %606
      %v609 = vsel %vm244, %v605, 0
      %v612 = vsel %vm244, %v607, 0
      %614 = vmatprep.subr.bf16.mxu0 0
      %615 = vmatpush1.bf16.xpose.msra.mxu0 0
      %616 = vmatprep.subr.bf16.mxu0 0
      %617 = vmatpush1.bf16.xpose.msra.mxu0 0
      %618 = vmatprep.subr.bf16.mxu0 0
      %619 = vmatpush1.bf16.xpose.msra.mxu0 0
      %620 = vmatprep.subr.bf16.mxu0 0
      %621 = vmatpush1.bf16.xpose.msra.mxu0 0
      %622 = vmatprep.subr.bf16.mxu0 0
      %623 = vmatpush1.bf16.xpose.msra.mxu0 0
      %624 = vmatprep.subr.bf16.mxu0 0
      %625 = vmatpush1.bf16.xpose.msra.mxu0 0
      %626 = vmatprep.subr.bf16.mxu0 0
      %627 = vmatpush1.bf16.xpose.msra.mxu0 0
      %628 = vmatprep.subr.bf16.mxu0 0
      %629 = vmatpush1.bf16.xpose.msra.mxu0 %v612
      %630 = vmatprep.subr.bf16.mxu0 0
      %631 = vmatpush2.bf16.xpose.msra.mxu0 0
      %632 = vmatprep.subr.bf16.mxu0 0
      %633 = vmatpush2.bf16.xpose.msra.mxu0 0
      %634 = vmatprep.subr.bf16.mxu0 0
      %635 = vmatpush2.bf16.xpose.msra.mxu0 0
      %636 = vmatprep.subr.bf16.mxu0 0
      %637 = vmatpush2.bf16.xpose.msra.mxu0 0
      %638 = vmatprep.subr.bf16.mxu0 0
      %639 = vmatpush2.bf16.xpose.msra.mxu0 0
      %640 = vmatprep.subr.bf16.mxu0 0
      %641 = vmatpush2.bf16.xpose.msra.mxu0 0
      %642 = vmatprep.subr.bf16.mxu0 0
      %643 = vmatpush2.bf16.xpose.msra.mxu0 0
      %644 = vmatprep.subr.bf16.mxu0 0
      %645 = vmatpush2.bf16.xpose.msra.mxu0 0
      %646 = vmatprep.mubr.bf16.mxu0 0
      %647 = vmatmul.mubr.bf16.gmra.mxu0 %v609
      %v648 = vpop.f32.mrf.mxu0
      %v649 = vadd.f32 0.0, %v648
      %v650 = vpop.f32.mrf.mxu0
      %v651 = vpop.f32.mrf.mxu0
      %v652 = vpop.f32.mrf.mxu0
      %653 = vdwg.mxu0
      %v654 = vmul.f32 %v649, 0.17677669
      %v655 = vsel %vm292, %v654, -inf
      %656 = vmax.xlane.f32.xlu0 %v655
      %v657 = vpop.xlane.xlu0 %656
      %v658 = vsub.f32 %v654, %v657
      %v659 = vmul.f32 %v658, 1.442695
      %v660 = vpow.pop %v659
      %v661 = vsel %vm292, %v660, 0.0
      %662 = vadd.xlane.f32.xlu0 %v661
      %v663 = vpop.xlane.xlu0 %662
      %v664 = vrcp.pop %v663
      %v665 = vmul.f32 %v660, %v664
      %v666 = vpack.c.bf16 %v665, %v665
      %667 = vrot.lane.b32.xlu0 %v426, 32
      %v668 = vpop.permute.xlu0 %667
      %v670 = vsel %vm292, %v666, 0
      %v673 = vsel %vm308, %v668, 0
      %675 = vmatprep.subr.bf16.mxu0 0
      %676 = vmatpush1.bf16.msra.mxu0 0
      %677 = vmatprep.subr.bf16.mxu0 0
      %678 = vmatpush1.bf16.msra.mxu0 0
      %679 = vmatprep.subr.bf16.mxu0 0
      %680 = vmatpush1.bf16.msra.mxu0 0
      %681 = vmatprep.subr.bf16.mxu0 0
      %682 = vmatpush1.bf16.msra.mxu0 0
      %683 = vmatprep.subr.bf16.mxu0 0
      %684 = vmatpush1.bf16.msra.mxu0 0
      %685 = vmatprep.subr.bf16.mxu0 0
      %686 = vmatpush1.bf16.msra.mxu0 0
      %687 = vmatprep.subr.bf16.mxu0 0
      %688 = vmatpush1.bf16.msra.mxu0 0
      %689 = vmatprep.subr.bf16.mxu0 0
      %690 = vmatpush1.bf16.msra.mxu0 %v673
      %691 = vmatprep.subr.bf16.mxu0 0
      %692 = vmatpush2.bf16.msra.mxu0 0
      %693 = vmatprep.subr.bf16.mxu0 0
      %694 = vmatpush2.bf16.msra.mxu0 0
      %695 = vmatprep.subr.bf16.mxu0 0
      %696 = vmatpush2.bf16.msra.mxu0 0
      %697 = vmatprep.subr.bf16.mxu0 0
      %698 = vmatpush2.bf16.msra.mxu0 0
      %699 = vmatprep.subr.bf16.mxu0 0
      %700 = vmatpush2.bf16.msra.mxu0 0
      %701 = vmatprep.subr.bf16.mxu0 0
      %702 = vmatpush2.bf16.msra.mxu0 0
      %703 = vmatprep.subr.bf16.mxu0 0
      %704 = vmatpush2.bf16.msra.mxu0 0
      %705 = vmatprep.subr.bf16.mxu0 0
      %706 = vmatpush2.bf16.msra.mxu0 0
      %707 = vmatprep.mubr.bf16.mxu0 0
      %708 = vmatmul.mubr.bf16.gmra.mxu0 %v670
      %v709 = vpop.f32.mrf.mxu0
      %v710 = vadd.f32 0.0, %v709
      %v711 = vpop.f32.mrf.mxu0
      %v712 = vpop.f32.mrf.mxu0
      %v713 = vpop.f32.mrf.mxu0
      %714 = vdwg.mxu0
      %v715 = vpack.c.bf16 %v710, %v710
      %v717 = vunpack.c.l.b16 %v715
      %v718 = vpack.c.b16 %v717, %v717
      %719 = vrot.lane.b32.xlu0 %v718, 96
      %v720 = vpop.permute.xlu0 %719
      %vm722 = vcmask 1044224
      %723 = vst.msk [vmem:[%s239] sm:$0xf] %vm722, %v720
      %p724 = scmp.lt.s32.totalorder %s18, 1
      %s725 = scalar_select %p724, %s18, 1
      %p726 = scmp.lt.s32.totalorder %s19, 0
      %s727 = scalar_select %p726, %s19, 0
      %s728 = sadd.s32 %s727, %s725
      %s729 = smul.addr %s728, 4
      %s730 = scalar_lea.vmem %s3, %s729
      // Predicated region
      $region33: #{decoder_layer.13} parent=31 // pred_check
        %p731 = pneg %p126
      $region34: #{decoder_layer.13} parent=31 // pred_check_branch
        %733 = sbr.rel (%p731) target = $region36
      $region35: #{decoder_layer.13} parent=31 // pred_region
        _
      $region36: #{decoder_layer.13} parent=31 // pred_fallthru
        _
    $region32: #{decoder_layer.13} parent=5 // pred_fallthru
      _
    %p734 = scmp.le.s32.totalorder 2, %s9
    // Predicated region
    $region37: #{decoder_layer.13} parent=5 // pred_check
      %p735 = pneg %p734
    $region38: #{decoder_layer.13} parent=5 // pred_check_branch
      %737 = sbr.rel (%p735) target = $region40
    $region39: #{decoder_layer.13} parent=5 // pred_region
      %s738 = ssub.s32 %s9, 2
      // Predicated region
      $region41: #{decoder_layer.13} parent=39 // pred_check
        %p739 = pneg %p132
      $region42: #{decoder_layer.13} parent=39 // pred_check_branch
        %741 = sbr.rel (%p739) target = $region44
      $region43: #{decoder_layer.13} parent=39 // pred_region
        %p742 = scmp.lt.s32.totalorder %s20, 1
        %s743 = scalar_select %p742, %s20, 1
        %p744 = scmp.lt.s32.totalorder %s21, 0
        %s745 = scalar_select %p744, %s21, 0
        %s746 = sadd.s32 %s745, %s743
        %s747 = smul.addr %s746, 4
        %s748 = scalar_lea.vmem %s3, %s747
      $region44: #{decoder_layer.13} parent=39 // pred_fallthru
        _
    $region40: #{decoder_layer.13} parent=5 // pred_fallthru
      _
  $region6: #{decoder_layer.13} parent=0 // loop_footer
    %s13 = sadd.s32 1, %s9
  $region7: #{decoder_layer.13} parent=0 // loop_footer_branch
    %8 = sbr.rel target = $region3
  $region8: #{decoder_layer.13} parent=0 // loop_exit
    _

</llo_original>
